<compile_context>
chip_gen: v6e
topology: v6e:2x2x1
jax: 0.10.0
libtpu: 0.0.40
codegen_flags: <defaults>
</compile_context>

<pallas_src>
from functools import partial

import numpy as np
import jax
import jax.numpy as jnp
from jax import lax
from jax.experimental import pallas as pl
from jax.experimental.pallas import tpu as pltpu

LEAKY_SLOPE = 0.1   # matches the previous implementation of this module
CP = 8              # every channel dim is padded to 8 (sublane-aligned)
KTAPS = 9           # 3x3 conv


# ----------------------------------------------------------------------------
# Fused 3-layer discriminator kernel (n_img images per grid step, folded onto
# the lane axis).
# ----------------------------------------------------------------------------
def _disc_kernel(x_ref, mask_ref, w1_ref, b1_ref, w2_ref, b2_ref, w3_ref, b3_ref,
                 f1_ref, f2_ref, f3_ref, inbuf, colbuf, *, H, W, n_img):
    """Layer input lives in `inbuf`: channel-major, row-major flattened spatial
    of width N = n_img*H*W plus a zero margin of MG = W+1 lanes on each end.
    A 3x3 tap (kh, kw) is the static lane shift off = (kh-1)*W + (kw-1); the
    per-tap masks zero contributions where the tap falls outside its own image
    (zero-padding semantics + no cross-image bleed).  The nine masked shifted
    copies are staged into `colbuf` and each layer is ONE MXU matmul."""
    HW = H * W
    N = n_img * HW
    MG = W + 1

    # Zero only the two MG-wide global margin strips (never the whole buffer).
    inbuf[:, 0:MG] = jnp.zeros((CP, MG), jnp.float32)
    inbuf[:, MG + N:MG + N + MG] = jnp.zeros((CP, MG), jnp.float32)

    # Stage this step's images into the margin buffer (256-lane-wide rows).
    for b in range(n_img):
        inbuf[:, MG + b * HW:MG + (b + 1) * HW] = x_ref[b]

    def conv3x3(w_ref, b_ref, act):
        for t in range(KTAPS):                                   # static, unrolled
            kh, kw = t // 3, t % 3
            s = MG + (kh - 1) * W + (kw - 1)
            colbuf[t * CP:(t + 1) * CP, :] = (
                inbuf[:, s:s + N] * mask_ref[t * CP:(t + 1) * CP, :])
        y = jnp.dot(w_ref[...], colbuf[...],
                    preferred_element_type=jnp.float32)          # (CP, N)
        y = y + b_ref[...]                                       # (CP, 1) lane bcast
        if act:
            y = jnp.where(y >= 0, y, LEAKY_SLOPE * y)
        return y

    def store(f_ref, y):
        for b in range(n_img):
            f_ref[b] = y[:, b * HW:(b + 1) * HW]                 # (CP, 256) unmasked

    y1 = conv3x3(w1_ref, b1_ref, True)
    store(f1_ref, y1)
    inbuf[:, MG:MG + N] = y1        # re-stage for layer 2 (margins stay zero)

    y2 = conv3x3(w2_ref, b2_ref, True)
    store(f2_ref, y2)
    inbuf[:, MG:MG + N] = y2

    y3 = conv3x3(w3_ref, b3_ref, False)   # logits layer, no activation
    store(f3_ref, y3)


def _grid_steps(total_imgs):
    """1 step on single-core chips (v5e/v6e), 2 on v7x's two TensorCores."""
    try:
        kind = jax.devices()[0].device_kind.lower()
    except Exception:
        kind = ""
    two_cores = ("v7" in kind) or ("tpu7" in kind)
    if two_cores and total_imgs >= 2 and total_imgs % 2 == 0:
        return 2
    return 1


def _build_masks(H, W, n_img):
    """(9*CP, n_img*H*W) f32 per-tap validity masks (compile-time constant)."""
    hh = np.repeat(np.arange(H), W)
    ww = np.tile(np.arange(W), H)
    rows = []
    for kh in range(3):
        for kw in range(3):
            v = ((hh + kh - 1 >= 0) & (hh + kh - 1 < H) &
                 (ww + kw - 1 >= 0) & (ww + kw - 1 < W)).astype(np.float32)
            v = np.tile(v, n_img)
            rows.append(np.broadcast_to(v, (CP, v.shape[0])))
    return np.ascontiguousarray(np.concatenate(rows, axis=0))


def _discriminator_pallas(flat_params, couts, x):
    """x: (B, C_in, H, W) f32 (fake and real already fused along B).
    Returns list of 3 feature maps, each (B, c_l, H, W) f32."""
    B, C_in, H, W = x.shape
    HW = H * W
    assert HW % 128 == 0, "spatial size must fold to a lane-dense multiple of 128"
    assert C_in <= CP

    steps = _grid_steps(B)
    n_img = B // steps
    N = n_img * HW
    MG = W + 1

    # Only layout glue left: flatten spatial, pad channels to CP (no spatial
    # padding, no transposes; fake/real concat is done by the caller).
    xf = x.astype(jnp.float32).reshape(B, C_in, HW)
    xf = jnp.pad(xf, ((0, 0), (0, CP - C_in), (0, 0)))

    masks = jnp.asarray(_build_masks(H, W, n_img))

    w1, w2, w3 = flat_params["w"]
    b1, b2, b3 = flat_params["b"]

    kernel = partial(_disc_kernel, H=H, W=W, n_img=n_img)
    wspec = pl.BlockSpec((CP, KTAPS * CP), lambda s: (0, 0))
    bspec = pl.BlockSpec((CP, 1), lambda s: (0, 0))
    fspec = pl.BlockSpec((n_img, CP, HW), lambda s: (s, 0, 0))

    f1, f2, f3 = pl.pallas_call(
        kernel,
        out_shape=tuple(jax.ShapeDtypeStruct((B, CP, HW), jnp.float32)
                        for _ in range(3)),
        grid=(steps,),
        in_specs=[
            fspec,                                             # images
            pl.BlockSpec((KTAPS * CP, N), lambda s: (0, 0)),   # per-tap masks
            wspec, bspec, wspec, bspec, wspec, bspec,
        ],
        out_specs=(fspec, fspec, fspec),
        scratch_shapes=[pltpu.VMEM((CP, N + 2 * MG), jnp.float32),   # margin buffer
                        pltpu.VMEM((KTAPS * CP, N), jnp.float32)],   # im2col operand
        compiler_params=pltpu.CompilerParams(
            dimension_semantics=("parallel",) if steps > 1 else ("arbitrary",)),
    )(xf, masks, w1, b1, w2, b2, w3, b3)

    feats = []
    for f, c in zip((f1, f2, f3), couts):
        if c != CP:
            f = f[:, :c]
        feats.append(f.reshape(B, c, H, W))
    return feats


# ----------------------------------------------------------------------------
# Synthetic discriminator params + GANLoss forward / losses
# ----------------------------------------------------------------------------
def make_discriminator_params(key, in_ch=4, hidden=8):
    """Deterministic 3-layer conv discriminator: in_ch -> hidden -> hidden -> 1."""
    dims = [(hidden, in_ch), (hidden, hidden), (1, hidden)]
    params = []
    for co, ci in dims:
        key, kw_, kb_ = jax.random.split(key, 3)
        scale = 1.0 / jnp.sqrt(ci * 9.0)
        w = jax.random.normal(kw_, (co, ci, 3, 3), jnp.float32) * scale
        b = jax.random.normal(kb_, (co,), jnp.float32) * 0.01
        params.append((w, b))
    return params


def prepare_discriminator_params(params):
    """One-time (outside jit) flatten of conv weights to (CP, 9*CP) tap-major
    matrices and (CP, 1) biases; returns (flat_params, real_out_channels)."""
    assert len(params) == 3, "kernel is specialized to the 3-layer discriminator"
    flat_w, flat_b, couts = [], [], []
    for w, b in params:
        co, ci, kh, kw = w.shape
        assert kh == 3 and kw == 3, "kernel is specialized to 3x3 convs"
        assert co <= CP and ci <= CP, "kernel is specialized to <=8 channels/layer"
        wp = jnp.zeros((CP, CP, 3, 3), jnp.float32).at[:co, :ci].set(
            w.astype(jnp.float32))
        # row group t = kh*3+kw, channel-minor (matches colbuf staging order)
        wf = jnp.transpose(wp, (0, 2, 3, 1)).reshape(CP, KTAPS * CP)
        bp = jnp.zeros((CP, 1), jnp.float32).at[:co, 0].set(b.astype(jnp.float32))
        flat_w.append(wf)
        flat_b.append(bp)
        couts.append(co)
    return {"w": tuple(flat_w), "b": tuple(flat_b)}, tuple(couts)


def _gan_loss_forward_impl(flat_params, couts, fake, real):
    """GANLoss.forward: (d_fake, d_real), each a list (per sub-discriminator)
    of lists of feature maps.  Single sub-discriminator; fake/real fused so
    the discriminator kernel runs once."""
    n = fake.shape[0]
    x = jnp.concatenate([fake, real], axis=0)
    feats = _discriminator_pallas(flat_params, couts, x)
    d_fake = [[f[:n] for f in feats]]
    d_real = [[f[n:] for f in feats]]
    return d_fake, d_real


@partial(jax.jit, static_argnums=(1,))
def gan_loss_forward(flat_params, couts, fake, real):
    return _gan_loss_forward_impl(flat_params, couts, fake, real)


@partial(jax.jit, static_argnums=(1,))
def discriminator_loss(flat_params, couts, fake, real):
    d_fake, d_real = _gan_loss_forward_impl(flat_params, couts,
                                            lax.stop_gradient(fake), real)
    loss_d = 0.0
    for x_fake, x_real in zip(d_fake, d_real):
        loss_d += jnp.mean(x_fake[-1] ** 2)
        loss_d += jnp.mean((1.0 - x_real[-1]) ** 2)
    return loss_d


@partial(jax.jit, static_argnums=(1,))
def generator_loss(flat_params, couts, fake, real):
    d_fake, d_real = _gan_loss_forward_impl(flat_params, couts, fake, real)
    loss_g = 0.0
    for x_fake in d_fake:
        loss_g += jnp.mean((1.0 - x_fake[-1]) ** 2)
    loss_feature = 0.0
    for i in range(len(d_fake)):
        for j in range(len(d_fake[i]) - 1):
            loss_feature += jnp.mean(
                jnp.abs(d_fake[i][j] - lax.stop_gradient(d_real[i][j])))
    return loss_g, loss_feature


# Pure-XLA reference discriminator (numerical sanity only).
def _reference_discriminator(params, x):
    feats, h, n_layers = [], x, len(params)
    for li, (w, b) in enumerate(params):
        h = lax.conv_general_dilated(
            h, w, window_strides=(1, 1), padding=((1, 1), (1, 1)),
            dimension_numbers=("NCHW", "OIHW", "NCHW"),
            precision=lax.Precision.HIGHEST)
        h = h + b.reshape(1, -1, 1, 1)
        if li < n_layers - 1:
            h = jnp.where(h >= 0, h, LEAKY_SLOPE * h)
        feats.append(h)
    return feats


if __name__ == "__main__":
    key = jax.random.PRNGKey(0)
    k_fake, k_real = jax.random.split(key)
    fake = jax.random.normal(k_fake, (2, 4, 16, 16), jnp.float32)  # NCHW
    real = jax.random.normal(k_real, (2, 4, 16, 16), jnp.float32)  # NCHW

    params = make_discriminator_params(jax.random.PRNGKey(42), in_ch=4, hidden=8)
    flat_params, couts = prepare_discriminator_params(params)

    d_fake, d_real = gan_loss_forward(flat_params, couts, fake, real)
    jax.block_until_ready(d_fake)
    jax.block_until_ready(d_real)

    # shape sanity (discriminator: 4 -> 8 -> 8 -> 1 channels, same spatial)
    assert d_fake[0][0].shape == (2, 8, 16, 16)
    assert d_fake[0][1].shape == (2, 8, 16, 16)
    assert d_fake[0][-1].shape == (2, 1, 16, 16)
    assert d_real[0][-1].shape == (2, 1, 16, 16)

    # numerical sanity vs pure-XLA conv reference (loose tol for MXU precision)
    ref_feats = _reference_discriminator(params, jnp.concatenate([fake, real], 0))
    for li, rf in enumerate(ref_feats):
        got = jnp.concatenate([d_fake[0][li], d_real[0][li]], axis=0)
        err = float(jnp.max(jnp.abs(got - rf)))
        assert err < 1e-2, f"layer {li}: max abs err {err}"

    loss_d = discriminator_loss(flat_params, couts, fake, real)
    loss_g, loss_feat = generator_loss(flat_params, couts, fake, real)
    jax.block_until_ready((loss_d, loss_g, loss_feat))

    print("KERNEL_OK")
</pallas_src>

<mosaic_0001>
module attributes {stable_mosaic.version = 11 : i64} {
  func.func @_disc_kernel(%arg0: i32, %arg1: memref<4x8x256xf32, #tpu.memory_space<vmem>>, %arg2: memref<72x1024xf32, #tpu.memory_space<vmem>>, %arg3: memref<8x72xf32, #tpu.memory_space<vmem>>, %arg4: memref<8x1xf32, #tpu.memory_space<vmem>>, %arg5: memref<8x72xf32, #tpu.memory_space<vmem>>, %arg6: memref<8x1xf32, #tpu.memory_space<vmem>>, %arg7: memref<8x72xf32, #tpu.memory_space<vmem>>, %arg8: memref<8x1xf32, #tpu.memory_space<vmem>>, %arg9: memref<4x8x256xf32, #tpu.memory_space<vmem>>, %arg10: memref<4x8x256xf32, #tpu.memory_space<vmem>>, %arg11: memref<4x8x256xf32, #tpu.memory_space<vmem>>, %arg12: memref<8x1058xf32, #tpu.memory_space<vmem>>, %arg13: memref<72x1024xf32, #tpu.memory_space<vmem>>) attributes {dimension_semantics = [#tpu.dimension_semantics<arbitrary>], iteration_bounds = array<i64: 1>, scalar_prefetch = 0 : i64, scratch_operands = 2 : i64, tpu.core_type = #tpu.core_type<tc>, window_params = [{transform_indices = @transform_0, window_bounds = array<i64: 4, 8, 256>}, {pipeline_mode = #tpu.pipeline_mode<synchronous>, transform_indices = @transform_1, window_bounds = array<i64: 72, 1024>}, {pipeline_mode = #tpu.pipeline_mode<synchronous>, transform_indices = @transform_2, window_bounds = array<i64: 8, 72>}, {pipeline_mode = #tpu.pipeline_mode<synchronous>, transform_indices = @transform_3, window_bounds = array<i64: 8, 1>}, {pipeline_mode = #tpu.pipeline_mode<synchronous>, transform_indices = @transform_4, window_bounds = array<i64: 8, 72>}, {pipeline_mode = #tpu.pipeline_mode<synchronous>, transform_indices = @transform_5, window_bounds = array<i64: 8, 1>}, {pipeline_mode = #tpu.pipeline_mode<synchronous>, transform_indices = @transform_6, window_bounds = array<i64: 8, 72>}, {pipeline_mode = #tpu.pipeline_mode<synchronous>, transform_indices = @transform_7, window_bounds = array<i64: 8, 1>}, {transform_indices = @transform_8, window_bounds = array<i64: 4, 8, 256>}, {transform_indices = @transform_9, window_bounds = array<i64: 4, 8, 256>}, {transform_indices = @transform_10, window_bounds = array<i64: 4, 8, 256>}]} {
    %cst = arith.constant 0.000000e+00 : f32
    %0 = vector.broadcast %cst : f32 to vector<8x17xf32>
    %c0 = arith.constant 0 : index
    %c0_0 = arith.constant 0 : index
    %1 = vector.load %arg12[%c0, %c0_0] : memref<8x1058xf32, #tpu.memory_space<vmem>>, vector<8x17xf32>
    tpu.vector_store %arg12[%c0, %c0_0], %0 {strides = array<i32>} : memref<8x1058xf32, #tpu.memory_space<vmem>>, vector<8x17xf32>,
    %cst_1 = arith.constant 0.000000e+00 : f32
    %2 = vector.broadcast %cst_1 : f32 to vector<8x17xf32>
    %c0_2 = arith.constant 0 : index
    %c1041 = arith.constant 1041 : index
    %3 = vector.load %arg12[%c0_2, %c1041] : memref<8x1058xf32, #tpu.memory_space<vmem>>, vector<8x17xf32>
    tpu.vector_store %arg12[%c0_2, %c1041], %2 {strides = array<i32>} : memref<8x1058xf32, #tpu.memory_space<vmem>>, vector<8x17xf32>,
    %c0_3 = arith.constant 0 : index
    %c0_4 = arith.constant 0 : index
    %c0_5 = arith.constant 0 : index
    %4 = vector.load %arg1[%c0_3, %c0_4, %c0_5] : memref<4x8x256xf32, #tpu.memory_space<vmem>>, vector<1x8x256xf32>
    %5 = vector.shape_cast %4 : vector<1x8x256xf32> to vector<8x256xf32>
    %c0_6 = arith.constant 0 : index
    %c17 = arith.constant 17 : index
    %6 = vector.load %arg12[%c0_6, %c17] : memref<8x1058xf32, #tpu.memory_space<vmem>>, vector<8x256xf32>
    tpu.vector_store %arg12[%c0_6, %c17], %5 {strides = array<i32>} : memref<8x1058xf32, #tpu.memory_space<vmem>>, vector<8x256xf32>,
    %c1 = arith.constant 1 : index
    %c0_7 = arith.constant 0 : index
    %c0_8 = arith.constant 0 : index
    %7 = vector.load %arg1[%c1, %c0_7, %c0_8] : memref<4x8x256xf32, #tpu.memory_space<vmem>>, vector<1x8x256xf32>
    %8 = vector.shape_cast %7 : vector<1x8x256xf32> to vector<8x256xf32>
    %c0_9 = arith.constant 0 : index
    %c273 = arith.constant 273 : index
    %9 = vector.load %arg12[%c0_9, %c273] : memref<8x1058xf32, #tpu.memory_space<vmem>>, vector<8x256xf32>
    tpu.vector_store %arg12[%c0_9, %c273], %8 {strides = array<i32>} : memref<8x1058xf32, #tpu.memory_space<vmem>>, vector<8x256xf32>,
    %c2 = arith.constant 2 : index
    %c0_10 = arith.constant 0 : index
    %c0_11 = arith.constant 0 : index
    %10 = vector.load %arg1[%c2, %c0_10, %c0_11] : memref<4x8x256xf32, #tpu.memory_space<vmem>>, vector<1x8x256xf32>
    %11 = vector.shape_cast %10 : vector<1x8x256xf32> to vector<8x256xf32>
    %c0_12 = arith.constant 0 : index
    %c529 = arith.constant 529 : index
    %12 = vector.load %arg12[%c0_12, %c529] : memref<8x1058xf32, #tpu.memory_space<vmem>>, vector<8x256xf32>
    tpu.vector_store %arg12[%c0_12, %c529], %11 {strides = array<i32>} : memref<8x1058xf32, #tpu.memory_space<vmem>>, vector<8x256xf32>,
    %c3 = arith.constant 3 : index
    %c0_13 = arith.constant 0 : index
    %c0_14 = arith.constant 0 : index
    %13 = vector.load %arg1[%c3, %c0_13, %c0_14] : memref<4x8x256xf32, #tpu.memory_space<vmem>>, vector<1x8x256xf32>
    %14 = vector.shape_cast %13 : vector<1x8x256xf32> to vector<8x256xf32>
    %c0_15 = arith.constant 0 : index
    %c785 = arith.constant 785 : index
    %15 = vector.load %arg12[%c0_15, %c785] : memref<8x1058xf32, #tpu.memory_space<vmem>>, vector<8x256xf32>
    tpu.vector_store %arg12[%c0_15, %c785], %14 {strides = array<i32>} : memref<8x1058xf32, #tpu.memory_space<vmem>>, vector<8x256xf32>,
    %c0_16 = arith.constant 0 : index
    %c0_17 = arith.constant 0 : index
    %16 = vector.load %arg12[%c0_16, %c0_17] : memref<8x1058xf32, #tpu.memory_space<vmem>>, vector<8x1024xf32>
    %c0_18 = arith.constant 0 : index
    %c0_19 = arith.constant 0 : index
    %17 = vector.load %arg2[%c0_18, %c0_19] : memref<72x1024xf32, #tpu.memory_space<vmem>>, vector<8x1024xf32>
    %18 = arith.mulf %16, %17 : vector<8x1024xf32>
    %c0_20 = arith.constant 0 : index
    %c0_21 = arith.constant 0 : index
    %19 = vector.load %arg13[%c0_20, %c0_21] : memref<72x1024xf32, #tpu.memory_space<vmem>>, vector<8x1024xf32>
    tpu.vector_store %arg13[%c0_20, %c0_21], %18 {strides = array<i32>} : memref<72x1024xf32, #tpu.memory_space<vmem>>, vector<8x1024xf32>,
    %c0_22 = arith.constant 0 : index
    %c1_23 = arith.constant 1 : index
    %20 = vector.load %arg12[%c0_22, %c1_23] : memref<8x1058xf32, #tpu.memory_space<vmem>>, vector<8x1024xf32>
    %c8 = arith.constant 8 : index
    %c0_24 = arith.constant 0 : index
    %21 = vector.load %arg2[%c8, %c0_24] : memref<72x1024xf32, #tpu.memory_space<vmem>>, vector<8x1024xf32>
    %22 = arith.mulf %20, %21 : vector<8x1024xf32>
    %c8_25 = arith.constant 8 : index
    %c0_26 = arith.constant 0 : index
    %23 = vector.load %arg13[%c8_25, %c0_26] : memref<72x1024xf32, #tpu.memory_space<vmem>>, vector<8x1024xf32>
    tpu.vector_store %arg13[%c8_25, %c0_26], %22 {strides = array<i32>} : memref<72x1024xf32, #tpu.memory_space<vmem>>, vector<8x1024xf32>,
    %c0_27 = arith.constant 0 : index
    %c2_28 = arith.constant 2 : index
    %24 = vector.load %arg12[%c0_27, %c2_28] : memref<8x1058xf32, #tpu.memory_space<vmem>>, vector<8x1024xf32>
    %c16 = arith.constant 16 : index
    %c0_29 = arith.constant 0 : index
    %25 = vector.load %arg2[%c16, %c0_29] : memref<72x1024xf32, #tpu.memory_space<vmem>>, vector<8x1024xf32>
    %26 = arith.mulf %24, %25 : vector<8x1024xf32>
    %c16_30 = arith.constant 16 : index
    %c0_31 = arith.constant 0 : index
    %27 = vector.load %arg13[%c16_30, %c0_31] : memref<72x1024xf32, #tpu.memory_space<vmem>>, vector<8x1024xf32>
    tpu.vector_store %arg13[%c16_30, %c0_31], %26 {strides = array<i32>} : memref<72x1024xf32, #tpu.memory_space<vmem>>, vector<8x1024xf32>,
    %c0_32 = arith.constant 0 : index
    %c16_33 = arith.constant 16 : index
    %28 = vector.load %arg12[%c0_32, %c16_33] : memref<8x1058xf32, #tpu.memory_space<vmem>>, vector<8x1024xf32>
    %c24 = arith.constant 24 : index
    %c0_34 = arith.constant 0 : index
    %29 = vector.load %arg2[%c24, %c0_34] : memref<72x1024xf32, #tpu.memory_space<vmem>>, vector<8x1024xf32>
    %30 = arith.mulf %28, %29 : vector<8x1024xf32>
    %c24_35 = arith.constant 24 : index
    %c0_36 = arith.constant 0 : index
    %31 = vector.load %arg13[%c24_35, %c0_36] : memref<72x1024xf32, #tpu.memory_space<vmem>>, vector<8x1024xf32>
    tpu.vector_store %arg13[%c24_35, %c0_36], %30 {strides = array<i32>} : memref<72x1024xf32, #tpu.memory_space<vmem>>, vector<8x1024xf32>,
    %c0_37 = arith.constant 0 : index
    %c17_38 = arith.constant 17 : index
    %32 = vector.load %arg12[%c0_37, %c17_38] : memref<8x1058xf32, #tpu.memory_space<vmem>>, vector<8x1024xf32>
    %c32 = arith.constant 32 : index
    %c0_39 = arith.constant 0 : index
    %33 = vector.load %arg2[%c32, %c0_39] : memref<72x1024xf32, #tpu.memory_space<vmem>>, vector<8x1024xf32>
    %34 = arith.mulf %32, %33 : vector<8x1024xf32>
    %c32_40 = arith.constant 32 : index
    %c0_41 = arith.constant 0 : index
    %35 = vector.load %arg13[%c32_40, %c0_41] : memref<72x1024xf32, #tpu.memory_space<vmem>>, vector<8x1024xf32>
    tpu.vector_store %arg13[%c32_40, %c0_41], %34 {strides = array<i32>} : memref<72x1024xf32, #tpu.memory_space<vmem>>, vector<8x1024xf32>,
    %c0_42 = arith.constant 0 : index
    %c18 = arith.constant 18 : index
    %36 = vector.load %arg12[%c0_42, %c18] : memref<8x1058xf32, #tpu.memory_space<vmem>>, vector<8x1024xf32>
    %c40 = arith.constant 40 : index
    %c0_43 = arith.constant 0 : index
    %37 = vector.load %arg2[%c40, %c0_43] : memref<72x1024xf32, #tpu.memory_space<vmem>>, vector<8x1024xf32>
    %38 = arith.mulf %36, %37 : vector<8x1024xf32>
    %c40_44 = arith.constant 40 : index
    %c0_45 = arith.constant 0 : index
    %39 = vector.load %arg13[%c40_44, %c0_45] : memref<72x1024xf32, #tpu.memory_space<vmem>>, vector<8x1024xf32>
    tpu.vector_store %arg13[%c40_44, %c0_45], %38 {strides = array<i32>} : memref<72x1024xf32, #tpu.memory_space<vmem>>, vector<8x1024xf32>,
    %c0_46 = arith.constant 0 : index
    %c32_47 = arith.constant 32 : index
    %40 = vector.load %arg12[%c0_46, %c32_47] : memref<8x1058xf32, #tpu.memory_space<vmem>>, vector<8x1024xf32>
    %c48 = arith.constant 48 : index
    %c0_48 = arith.constant 0 : index
    %41 = vector.load %arg2[%c48, %c0_48] : memref<72x1024xf32, #tpu.memory_space<vmem>>, vector<8x1024xf32>
    %42 = arith.mulf %40, %41 : vector<8x1024xf32>
    %c48_49 = arith.constant 48 : index
    %c0_50 = arith.constant 0 : index
    %43 = vector.load %arg13[%c48_49, %c0_50] : memref<72x1024xf32, #tpu.memory_space<vmem>>, vector<8x1024xf32>
    tpu.vector_store %arg13[%c48_49, %c0_50], %42 {strides = array<i32>} : memref<72x1024xf32, #tpu.memory_space<vmem>>, vector<8x1024xf32>,
    %c0_51 = arith.constant 0 : index
    %c33 = arith.constant 33 : index
    %44 = vector.load %arg12[%c0_51, %c33] : memref<8x1058xf32, #tpu.memory_space<vmem>>, vector<8x1024xf32>
    %c56 = arith.constant 56 : index
    %c0_52 = arith.constant 0 : index
    %45 = vector.load %arg2[%c56, %c0_52] : memref<72x1024xf32, #tpu.memory_space<vmem>>, vector<8x1024xf32>
    %46 = arith.mulf %44, %45 : vector<8x1024xf32>
    %c56_53 = arith.constant 56 : index
    %c0_54 = arith.constant 0 : index
    %47 = vector.load %arg13[%c56_53, %c0_54] : memref<72x1024xf32, #tpu.memory_space<vmem>>, vector<8x1024xf32>
    tpu.vector_store %arg13[%c56_53, %c0_54], %46 {strides = array<i32>} : memref<72x1024xf32, #tpu.memory_space<vmem>>, vector<8x1024xf32>,
    %c0_55 = arith.constant 0 : index
    %c34 = arith.constant 34 : index
    %48 = vector.load %arg12[%c0_55, %c34] : memref<8x1058xf32, #tpu.memory_space<vmem>>, vector<8x1024xf32>
    %c64 = arith.constant 64 : index
    %c0_56 = arith.constant 0 : index
    %49 = vector.load %arg2[%c64, %c0_56] : memref<72x1024xf32, #tpu.memory_space<vmem>>, vector<8x1024xf32>
    %50 = arith.mulf %48, %49 : vector<8x1024xf32>
    %c64_57 = arith.constant 64 : index
    %c0_58 = arith.constant 0 : index
    %51 = vector.load %arg13[%c64_57, %c0_58] : memref<72x1024xf32, #tpu.memory_space<vmem>>, vector<8x1024xf32>
    tpu.vector_store %arg13[%c64_57, %c0_58], %50 {strides = array<i32>} : memref<72x1024xf32, #tpu.memory_space<vmem>>, vector<8x1024xf32>,
    %c0_59 = arith.constant 0 : index
    %c0_60 = arith.constant 0 : index
    %52 = vector.load %arg3[%c0_59, %c0_60] : memref<8x72xf32, #tpu.memory_space<vmem>>, vector<8x72xf32>
    %c0_61 = arith.constant 0 : index
    %c0_62 = arith.constant 0 : index
    %53 = vector.load %arg13[%c0_61, %c0_62] : memref<72x1024xf32, #tpu.memory_space<vmem>>, vector<72x1024xf32>
    %cst_63 = arith.constant dense<0.000000e+00> : vector<8x1024xf32>
    %54 = tpu.matmul %52, %53, %cst_63 {dimension_numbers = #tpu.dot_dimension_numbers<[1], [0], [0], [1], [0, 0, 1, 1], [], []>} : vector<8x72xf32>, vector<72x1024xf32>, vector<8x1024xf32> -> vector<8x1024xf32>
    %c0_64 = arith.constant 0 : index
    %c0_65 = arith.constant 0 : index
    %55 = vector.load %arg4[%c0_64, %c0_65] : memref<8x1xf32, #tpu.memory_space<vmem>>, vector<8x1xf32>
    %56 = vector.broadcast %55 : vector<8x1xf32> to vector<8x1024xf32>
    %57 = arith.addf %54, %56 : vector<8x1024xf32>
    %cst_66 = arith.constant 0.000000e+00 : f32
    %58 = vector.broadcast %cst_66 : f32 to vector<8x1024xf32>
    %59 = arith.cmpf oge, %57, %58 : vector<8x1024xf32>
    %cst_67 = arith.constant 1.000000e-01 : f32
    %60 = vector.broadcast %cst_67 : f32 to vector<8x1024xf32>
    %61 = arith.mulf %60, %57 : vector<8x1024xf32>
    %62 = arith.select %59, %57, %61 : vector<8x1024xi1>, vector<8x1024xf32>
    %63 = vector.extract_strided_slice %62 {offsets = [0, 0], sizes = [8, 256], strides = [1, 1]} : vector<8x1024xf32> to vector<8x256xf32>
    %c0_68 = arith.constant 0 : index
    %c0_69 = arith.constant 0 : index
    %c0_70 = arith.constant 0 : index
    %64 = vector.load %arg9[%c0_68, %c0_69, %c0_70] : memref<4x8x256xf32, #tpu.memory_space<vmem>>, vector<1x8x256xf32>
    %65 = vector.shape_cast %64 : vector<1x8x256xf32> to vector<8x256xf32>
    %66 = vector.shape_cast %63 : vector<8x256xf32> to vector<1x8x256xf32>
    tpu.vector_store %arg9[%c0_68, %c0_69, %c0_70], %66 {strides = array<i32>} : memref<4x8x256xf32, #tpu.memory_space<vmem>>, vector<1x8x256xf32>,
    %67 = vector.extract_strided_slice %62 {offsets = [0, 256], sizes = [8, 256], strides = [1, 1]} : vector<8x1024xf32> to vector<8x256xf32>
    %c1_71 = arith.constant 1 : index
    %c0_72 = arith.constant 0 : index
    %c0_73 = arith.constant 0 : index
    %68 = vector.load %arg9[%c1_71, %c0_72, %c0_73] : memref<4x8x256xf32, #tpu.memory_space<vmem>>, vector<1x8x256xf32>
    %69 = vector.shape_cast %68 : vector<1x8x256xf32> to vector<8x256xf32>
    %70 = vector.shape_cast %67 : vector<8x256xf32> to vector<1x8x256xf32>
    tpu.vector_store %arg9[%c1_71, %c0_72, %c0_73], %70 {strides = array<i32>} : memref<4x8x256xf32, #tpu.memory_space<vmem>>, vector<1x8x256xf32>,
    %71 = vector.extract_strided_slice %62 {offsets = [0, 512], sizes = [8, 256], strides = [1, 1]} : vector<8x1024xf32> to vector<8x256xf32>
    %c2_74 = arith.constant 2 : index
    %c0_75 = arith.constant 0 : index
    %c0_76 = arith.constant 0 : index
    %72 = vector.load %arg9[%c2_74, %c0_75, %c0_76] : memref<4x8x256xf32, #tpu.memory_space<vmem>>, vector<1x8x256xf32>
    %73 = vector.shape_cast %72 : vector<1x8x256xf32> to vector<8x256xf32>
    %74 = vector.shape_cast %71 : vector<8x256xf32> to vector<1x8x256xf32>
    tpu.vector_store %arg9[%c2_74, %c0_75, %c0_76], %74 {strides = array<i32>} : memref<4x8x256xf32, #tpu.memory_space<vmem>>, vector<1x8x256xf32>,
    %75 = vector.extract_strided_slice %62 {offsets = [0, 768], sizes = [8, 256], strides = [1, 1]} : vector<8x1024xf32> to vector<8x256xf32>
    %c3_77 = arith.constant 3 : index
    %c0_78 = arith.constant 0 : index
    %c0_79 = arith.constant 0 : index
    %76 = vector.load %arg9[%c3_77, %c0_78, %c0_79] : memref<4x8x256xf32, #tpu.memory_space<vmem>>, vector<1x8x256xf32>
    %77 = vector.shape_cast %76 : vector<1x8x256xf32> to vector<8x256xf32>
    %78 = vector.shape_cast %75 : vector<8x256xf32> to vector<1x8x256xf32>
    tpu.vector_store %arg9[%c3_77, %c0_78, %c0_79], %78 {strides = array<i32>} : memref<4x8x256xf32, #tpu.memory_space<vmem>>, vector<1x8x256xf32>,
    %c0_80 = arith.constant 0 : index
    %c17_81 = arith.constant 17 : index
    %79 = vector.load %arg12[%c0_80, %c17_81] : memref<8x1058xf32, #tpu.memory_space<vmem>>, vector<8x1024xf32>
    tpu.vector_store %arg12[%c0_80, %c17_81], %62 {strides = array<i32>} : memref<8x1058xf32, #tpu.memory_space<vmem>>, vector<8x1024xf32>,
    %c0_82 = arith.constant 0 : index
    %c0_83 = arith.constant 0 : index
    %80 = vector.load %arg12[%c0_82, %c0_83] : memref<8x1058xf32, #tpu.memory_space<vmem>>, vector<8x1024xf32>
    %c0_84 = arith.constant 0 : index
    %c0_85 = arith.constant 0 : index
    %81 = vector.load %arg2[%c0_84, %c0_85] : memref<72x1024xf32, #tpu.memory_space<vmem>>, vector<8x1024xf32>
    %82 = arith.mulf %80, %81 : vector<8x1024xf32>
    %c0_86 = arith.constant 0 : index
    %c0_87 = arith.constant 0 : index
    %83 = vector.load %arg13[%c0_86, %c0_87] : memref<72x1024xf32, #tpu.memory_space<vmem>>, vector<8x1024xf32>
    tpu.vector_store %arg13[%c0_86, %c0_87], %82 {strides = array<i32>} : memref<72x1024xf32, #tpu.memory_space<vmem>>, vector<8x1024xf32>,
    %c0_88 = arith.constant 0 : index
    %c1_89 = arith.constant 1 : index
    %84 = vector.load %arg12[%c0_88, %c1_89] : memref<8x1058xf32, #tpu.memory_space<vmem>>, vector<8x1024xf32>
    %c8_90 = arith.constant 8 : index
    %c0_91 = arith.constant 0 : index
    %85 = vector.load %arg2[%c8_90, %c0_91] : memref<72x1024xf32, #tpu.memory_space<vmem>>, vector<8x1024xf32>
    %86 = arith.mulf %84, %85 : vector<8x1024xf32>
    %c8_92 = arith.constant 8 : index
    %c0_93 = arith.constant 0 : index
    %87 = vector.load %arg13[%c8_92, %c0_93] : memref<72x1024xf32, #tpu.memory_space<vmem>>, vector<8x1024xf32>
    tpu.vector_store %arg13[%c8_92, %c0_93], %86 {strides = array<i32>} : memref<72x1024xf32, #tpu.memory_space<vmem>>, vector<8x1024xf32>,
    %c0_94 = arith.constant 0 : index
    %c2_95 = arith.constant 2 : index
    %88 = vector.load %arg12[%c0_94, %c2_95] : memref<8x1058xf32, #tpu.memory_space<vmem>>, vector<8x1024xf32>
    %c16_96 = arith.constant 16 : index
    %c0_97 = arith.constant 0 : index
    %89 = vector.load %arg2[%c16_96, %c0_97] : memref<72x1024xf32, #tpu.memory_space<vmem>>, vector<8x1024xf32>
    %90 = arith.mulf %88, %89 : vector<8x1024xf32>
    %c16_98 = arith.constant 16 : index
    %c0_99 = arith.constant 0 : index
    %91 = vector.load %arg13[%c16_98, %c0_99] : memref<72x1024xf32, #tpu.memory_space<vmem>>, vector<8x1024xf32>
    tpu.vector_store %arg13[%c16_98, %c0_99], %90 {strides = array<i32>} : memref<72x1024xf32, #tpu.memory_space<vmem>>, vector<8x1024xf32>,
    %c0_100 = arith.constant 0 : index
    %c16_101 = arith.constant 16 : index
    %92 = vector.load %arg12[%c0_100, %c16_101] : memref<8x1058xf32, #tpu.memory_space<vmem>>, vector<8x1024xf32>
    %c24_102 = arith.constant 24 : index
    %c0_103 = arith.constant 0 : index
    %93 = vector.load %arg2[%c24_102, %c0_103] : memref<72x1024xf32, #tpu.memory_space<vmem>>, vector<8x1024xf32>
    %94 = arith.mulf %92, %93 : vector<8x1024xf32>
    %c24_104 = arith.constant 24 : index
    %c0_105 = arith.constant 0 : index
    %95 = vector.load %arg13[%c24_104, %c0_105] : memref<72x1024xf32, #tpu.memory_space<vmem>>, vector<8x1024xf32>
    tpu.vector_store %arg13[%c24_104, %c0_105], %94 {strides = array<i32>} : memref<72x1024xf32, #tpu.memory_space<vmem>>, vector<8x1024xf32>,
    %c0_106 = arith.constant 0 : index
    %c17_107 = arith.constant 17 : index
    %96 = vector.load %arg12[%c0_106, %c17_107] : memref<8x1058xf32, #tpu.memory_space<vmem>>, vector<8x1024xf32>
    %c32_108 = arith.constant 32 : index
    %c0_109 = arith.constant 0 : index
    %97 = vector.load %arg2[%c32_108, %c0_109] : memref<72x1024xf32, #tpu.memory_space<vmem>>, vector<8x1024xf32>
    %98 = arith.mulf %96, %97 : vector<8x1024xf32>
    %c32_110 = arith.constant 32 : index
    %c0_111 = arith.constant 0 : index
    %99 = vector.load %arg13[%c32_110, %c0_111] : memref<72x1024xf32, #tpu.memory_space<vmem>>, vector<8x1024xf32>
    tpu.vector_store %arg13[%c32_110, %c0_111], %98 {strides = array<i32>} : memref<72x1024xf32, #tpu.memory_space<vmem>>, vector<8x1024xf32>,
    %c0_112 = arith.constant 0 : index
    %c18_113 = arith.constant 18 : index
    %100 = vector.load %arg12[%c0_112, %c18_113] : memref<8x1058xf32, #tpu.memory_space<vmem>>, vector<8x1024xf32>
    %c40_114 = arith.constant 40 : index
    %c0_115 = arith.constant 0 : index
    %101 = vector.load %arg2[%c40_114, %c0_115] : memref<72x1024xf32, #tpu.memory_space<vmem>>, vector<8x1024xf32>
    %102 = arith.mulf %100, %101 : vector<8x1024xf32>
    %c40_116 = arith.constant 40 : index
    %c0_117 = arith.constant 0 : index
    %103 = vector.load %arg13[%c40_116, %c0_117] : memref<72x1024xf32, #tpu.memory_space<vmem>>, vector<8x1024xf32>
    tpu.vector_store %arg13[%c40_116, %c0_117], %102 {strides = array<i32>} : memref<72x1024xf32, #tpu.memory_space<vmem>>, vector<8x1024xf32>,
    %c0_118 = arith.constant 0 : index
    %c32_119 = arith.constant 32 : index
    %104 = vector.load %arg12[%c0_118, %c32_119] : memref<8x1058xf32, #tpu.memory_space<vmem>>, vector<8x1024xf32>
    %c48_120 = arith.constant 48 : index
    %c0_121 = arith.constant 0 : index
    %105 = vector.load %arg2[%c48_120, %c0_121] : memref<72x1024xf32, #tpu.memory_space<vmem>>, vector<8x1024xf32>
    %106 = arith.mulf %104, %105 : vector<8x1024xf32>
    %c48_122 = arith.constant 48 : index
    %c0_123 = arith.constant 0 : index
    %107 = vector.load %arg13[%c48_122, %c0_123] : memref<72x1024xf32, #tpu.memory_space<vmem>>, vector<8x1024xf32>
    tpu.vector_store %arg13[%c48_122, %c0_123], %106 {strides = array<i32>} : memref<72x1024xf32, #tpu.memory_space<vmem>>, vector<8x1024xf32>,
    %c0_124 = arith.constant 0 : index
    %c33_125 = arith.constant 33 : index
    %108 = vector.load %arg12[%c0_124, %c33_125] : memref<8x1058xf32, #tpu.memory_space<vmem>>, vector<8x1024xf32>
    %c56_126 = arith.constant 56 : index
    %c0_127 = arith.constant 0 : index
    %109 = vector.load %arg2[%c56_126, %c0_127] : memref<72x1024xf32, #tpu.memory_space<vmem>>, vector<8x1024xf32>
    %110 = arith.mulf %108, %109 : vector<8x1024xf32>
    %c56_128 = arith.constant 56 : index
    %c0_129 = arith.constant 0 : index
    %111 = vector.load %arg13[%c56_128, %c0_129] : memref<72x1024xf32, #tpu.memory_space<vmem>>, vector<8x1024xf32>
    tpu.vector_store %arg13[%c56_128, %c0_129], %110 {strides = array<i32>} : memref<72x1024xf32, #tpu.memory_space<vmem>>, vector<8x1024xf32>,
    %c0_130 = arith.constant 0 : index
    %c34_131 = arith.constant 34 : index
    %112 = vector.load %arg12[%c0_130, %c34_131] : memref<8x1058xf32, #tpu.memory_space<vmem>>, vector<8x1024xf32>
    %c64_132 = arith.constant 64 : index
    %c0_133 = arith.constant 0 : index
    %113 = vector.load %arg2[%c64_132, %c0_133] : memref<72x1024xf32, #tpu.memory_space<vmem>>, vector<8x1024xf32>
    %114 = arith.mulf %112, %113 : vector<8x1024xf32>
    %c64_134 = arith.constant 64 : index
    %c0_135 = arith.constant 0 : index
    %115 = vector.load %arg13[%c64_134, %c0_135] : memref<72x1024xf32, #tpu.memory_space<vmem>>, vector<8x1024xf32>
    tpu.vector_store %arg13[%c64_134, %c0_135], %114 {strides = array<i32>} : memref<72x1024xf32, #tpu.memory_space<vmem>>, vector<8x1024xf32>,
    %c0_136 = arith.constant 0 : index
    %c0_137 = arith.constant 0 : index
    %116 = vector.load %arg5[%c0_136, %c0_137] : memref<8x72xf32, #tpu.memory_space<vmem>>, vector<8x72xf32>
    %c0_138 = arith.constant 0 : index
    %c0_139 = arith.constant 0 : index
    %117 = vector.load %arg13[%c0_138, %c0_139] : memref<72x1024xf32, #tpu.memory_space<vmem>>, vector<72x1024xf32>
    %cst_140 = arith.constant dense<0.000000e+00> : vector<8x1024xf32>
    %118 = tpu.matmul %116, %117, %cst_140 {dimension_numbers = #tpu.dot_dimension_numbers<[1], [0], [0], [1], [0, 0, 1, 1], [], []>} : vector<8x72xf32>, vector<72x1024xf32>, vector<8x1024xf32> -> vector<8x1024xf32>
    %c0_141 = arith.constant 0 : index
    %c0_142 = arith.constant 0 : index
    %119 = vector.load %arg6[%c0_141, %c0_142] : memref<8x1xf32, #tpu.memory_space<vmem>>, vector<8x1xf32>
    %120 = vector.broadcast %119 : vector<8x1xf32> to vector<8x1024xf32>
    %121 = arith.addf %118, %120 : vector<8x1024xf32>
    %cst_143 = arith.constant 0.000000e+00 : f32
    %122 = vector.broadcast %cst_143 : f32 to vector<8x1024xf32>
    %123 = arith.cmpf oge, %121, %122 : vector<8x1024xf32>
    %cst_144 = arith.constant 1.000000e-01 : f32
    %124 = vector.broadcast %cst_144 : f32 to vector<8x1024xf32>
    %125 = arith.mulf %124, %121 : vector<8x1024xf32>
    %126 = arith.select %123, %121, %125 : vector<8x1024xi1>, vector<8x1024xf32>
    %127 = vector.extract_strided_slice %126 {offsets = [0, 0], sizes = [8, 256], strides = [1, 1]} : vector<8x1024xf32> to vector<8x256xf32>
    %c0_145 = arith.constant 0 : index
    %c0_146 = arith.constant 0 : index
    %c0_147 = arith.constant 0 : index
    %128 = vector.load %arg10[%c0_145, %c0_146, %c0_147] : memref<4x8x256xf32, #tpu.memory_space<vmem>>, vector<1x8x256xf32>
    %129 = vector.shape_cast %128 : vector<1x8x256xf32> to vector<8x256xf32>
    %130 = vector.shape_cast %127 : vector<8x256xf32> to vector<1x8x256xf32>
    tpu.vector_store %arg10[%c0_145, %c0_146, %c0_147], %130 {strides = array<i32>} : memref<4x8x256xf32, #tpu.memory_space<vmem>>, vector<1x8x256xf32>,
    %131 = vector.extract_strided_slice %126 {offsets = [0, 256], sizes = [8, 256], strides = [1, 1]} : vector<8x1024xf32> to vector<8x256xf32>
    %c1_148 = arith.constant 1 : index
    %c0_149 = arith.constant 0 : index
    %c0_150 = arith.constant 0 : index
    %132 = vector.load %arg10[%c1_148, %c0_149, %c0_150] : memref<4x8x256xf32, #tpu.memory_space<vmem>>, vector<1x8x256xf32>
    %133 = vector.shape_cast %132 : vector<1x8x256xf32> to vector<8x256xf32>
    %134 = vector.shape_cast %131 : vector<8x256xf32> to vector<1x8x256xf32>
    tpu.vector_store %arg10[%c1_148, %c0_149, %c0_150], %134 {strides = array<i32>} : memref<4x8x256xf32, #tpu.memory_space<vmem>>, vector<1x8x256xf32>,
    %135 = vector.extract_strided_slice %126 {offsets = [0, 512], sizes = [8, 256], strides = [1, 1]} : vector<8x1024xf32> to vector<8x256xf32>
    %c2_151 = arith.constant 2 : index
    %c0_152 = arith.constant 0 : index
    %c0_153 = arith.constant 0 : index
    %136 = vector.load %arg10[%c2_151, %c0_152, %c0_153] : memref<4x8x256xf32, #tpu.memory_space<vmem>>, vector<1x8x256xf32>
    %137 = vector.shape_cast %136 : vector<1x8x256xf32> to vector<8x256xf32>
    %138 = vector.shape_cast %135 : vector<8x256xf32> to vector<1x8x256xf32>
    tpu.vector_store %arg10[%c2_151, %c0_152, %c0_153], %138 {strides = array<i32>} : memref<4x8x256xf32, #tpu.memory_space<vmem>>, vector<1x8x256xf32>,
    %139 = vector.extract_strided_slice %126 {offsets = [0, 768], sizes = [8, 256], strides = [1, 1]} : vector<8x1024xf32> to vector<8x256xf32>
    %c3_154 = arith.constant 3 : index
    %c0_155 = arith.constant 0 : index
    %c0_156 = arith.constant 0 : index
    %140 = vector.load %arg10[%c3_154, %c0_155, %c0_156] : memref<4x8x256xf32, #tpu.memory_space<vmem>>, vector<1x8x256xf32>
    %141 = vector.shape_cast %140 : vector<1x8x256xf32> to vector<8x256xf32>
    %142 = vector.shape_cast %139 : vector<8x256xf32> to vector<1x8x256xf32>
    tpu.vector_store %arg10[%c3_154, %c0_155, %c0_156], %142 {strides = array<i32>} : memref<4x8x256xf32, #tpu.memory_space<vmem>>, vector<1x8x256xf32>,
    %c0_157 = arith.constant 0 : index
    %c17_158 = arith.constant 17 : index
    %143 = vector.load %arg12[%c0_157, %c17_158] : memref<8x1058xf32, #tpu.memory_space<vmem>>, vector<8x1024xf32>
    tpu.vector_store %arg12[%c0_157, %c17_158], %126 {strides = array<i32>} : memref<8x1058xf32, #tpu.memory_space<vmem>>, vector<8x1024xf32>,
    %c0_159 = arith.constant 0 : index
    %c0_160 = arith.constant 0 : index
    %144 = vector.load %arg12[%c0_159, %c0_160] : memref<8x1058xf32, #tpu.memory_space<vmem>>, vector<8x1024xf32>
    %c0_161 = arith.constant 0 : index
    %c0_162 = arith.constant 0 : index
    %145 = vector.load %arg2[%c0_161, %c0_162] : memref<72x1024xf32, #tpu.memory_space<vmem>>, vector<8x1024xf32>
    %146 = arith.mulf %144, %145 : vector<8x1024xf32>
    %c0_163 = arith.constant 0 : index
    %c0_164 = arith.constant 0 : index
    %147 = vector.load %arg13[%c0_163, %c0_164] : memref<72x1024xf32, #tpu.memory_space<vmem>>, vector<8x1024xf32>
    tpu.vector_store %arg13[%c0_163, %c0_164], %146 {strides = array<i32>} : memref<72x1024xf32, #tpu.memory_space<vmem>>, vector<8x1024xf32>,
    %c0_165 = arith.constant 0 : index
    %c1_166 = arith.constant 1 : index
    %148 = vector.load %arg12[%c0_165, %c1_166] : memref<8x1058xf32, #tpu.memory_space<vmem>>, vector<8x1024xf32>
    %c8_167 = arith.constant 8 : index
    %c0_168 = arith.constant 0 : index
    %149 = vector.load %arg2[%c8_167, %c0_168] : memref<72x1024xf32, #tpu.memory_space<vmem>>, vector<8x1024xf32>
    %150 = arith.mulf %148, %149 : vector<8x1024xf32>
    %c8_169 = arith.constant 8 : index
    %c0_170 = arith.constant 0 : index
    %151 = vector.load %arg13[%c8_169, %c0_170] : memref<72x1024xf32, #tpu.memory_space<vmem>>, vector<8x1024xf32>
    tpu.vector_store %arg13[%c8_169, %c0_170], %150 {strides = array<i32>} : memref<72x1024xf32, #tpu.memory_space<vmem>>, vector<8x1024xf32>,
    %c0_171 = arith.constant 0 : index
    %c2_172 = arith.constant 2 : index
    %152 = vector.load %arg12[%c0_171, %c2_172] : memref<8x1058xf32, #tpu.memory_space<vmem>>, vector<8x1024xf32>
    %c16_173 = arith.constant 16 : index
    %c0_174 = arith.constant 0 : index
    %153 = vector.load %arg2[%c16_173, %c0_174] : memref<72x1024xf32, #tpu.memory_space<vmem>>, vector<8x1024xf32>
    %154 = arith.mulf %152, %153 : vector<8x1024xf32>
    %c16_175 = arith.constant 16 : index
    %c0_176 = arith.constant 0 : index
    %155 = vector.load %arg13[%c16_175, %c0_176] : memref<72x1024xf32, #tpu.memory_space<vmem>>, vector<8x1024xf32>
    tpu.vector_store %arg13[%c16_175, %c0_176], %154 {strides = array<i32>} : memref<72x1024xf32, #tpu.memory_space<vmem>>, vector<8x1024xf32>,
    %c0_177 = arith.constant 0 : index
    %c16_178 = arith.constant 16 : index
    %156 = vector.load %arg12[%c0_177, %c16_178] : memref<8x1058xf32, #tpu.memory_space<vmem>>, vector<8x1024xf32>
    %c24_179 = arith.constant 24 : index
    %c0_180 = arith.constant 0 : index
    %157 = vector.load %arg2[%c24_179, %c0_180] : memref<72x1024xf32, #tpu.memory_space<vmem>>, vector<8x1024xf32>
    %158 = arith.mulf %156, %157 : vector<8x1024xf32>
    %c24_181 = arith.constant 24 : index
    %c0_182 = arith.constant 0 : index
    %159 = vector.load %arg13[%c24_181, %c0_182] : memref<72x1024xf32, #tpu.memory_space<vmem>>, vector<8x1024xf32>
    tpu.vector_store %arg13[%c24_181, %c0_182], %158 {strides = array<i32>} : memref<72x1024xf32, #tpu.memory_space<vmem>>, vector<8x1024xf32>,
    %c0_183 = arith.constant 0 : index
    %c17_184 = arith.constant 17 : index
    %160 = vector.load %arg12[%c0_183, %c17_184] : memref<8x1058xf32, #tpu.memory_space<vmem>>, vector<8x1024xf32>
    %c32_185 = arith.constant 32 : index
    %c0_186 = arith.constant 0 : index
    %161 = vector.load %arg2[%c32_185, %c0_186] : memref<72x1024xf32, #tpu.memory_space<vmem>>, vector<8x1024xf32>
    %162 = arith.mulf %160, %161 : vector<8x1024xf32>
    %c32_187 = arith.constant 32 : index
    %c0_188 = arith.constant 0 : index
    %163 = vector.load %arg13[%c32_187, %c0_188] : memref<72x1024xf32, #tpu.memory_space<vmem>>, vector<8x1024xf32>
    tpu.vector_store %arg13[%c32_187, %c0_188], %162 {strides = array<i32>} : memref<72x1024xf32, #tpu.memory_space<vmem>>, vector<8x1024xf32>,
    %c0_189 = arith.constant 0 : index
    %c18_190 = arith.constant 18 : index
    %164 = vector.load %arg12[%c0_189, %c18_190] : memref<8x1058xf32, #tpu.memory_space<vmem>>, vector<8x1024xf32>
    %c40_191 = arith.constant 40 : index
    %c0_192 = arith.constant 0 : index
    %165 = vector.load %arg2[%c40_191, %c0_192] : memref<72x1024xf32, #tpu.memory_space<vmem>>, vector<8x1024xf32>
    %166 = arith.mulf %164, %165 : vector<8x1024xf32>
    %c40_193 = arith.constant 40 : index
    %c0_194 = arith.constant 0 : index
    %167 = vector.load %arg13[%c40_193, %c0_194] : memref<72x1024xf32, #tpu.memory_space<vmem>>, vector<8x1024xf32>
    tpu.vector_store %arg13[%c40_193, %c0_194], %166 {strides = array<i32>} : memref<72x1024xf32, #tpu.memory_space<vmem>>, vector<8x1024xf32>,
    %c0_195 = arith.constant 0 : index
    %c32_196 = arith.constant 32 : index
    %168 = vector.load %arg12[%c0_195, %c32_196] : memref<8x1058xf32, #tpu.memory_space<vmem>>, vector<8x1024xf32>
    %c48_197 = arith.constant 48 : index
    %c0_198 = arith.constant 0 : index
    %169 = vector.load %arg2[%c48_197, %c0_198] : memref<72x1024xf32, #tpu.memory_space<vmem>>, vector<8x1024xf32>
    %170 = arith.mulf %168, %169 : vector<8x1024xf32>
    %c48_199 = arith.constant 48 : index
    %c0_200 = arith.constant 0 : index
    %171 = vector.load %arg13[%c48_199, %c0_200] : memref<72x1024xf32, #tpu.memory_space<vmem>>, vector<8x1024xf32>
    tpu.vector_store %arg13[%c48_199, %c0_200], %170 {strides = array<i32>} : memref<72x1024xf32, #tpu.memory_space<vmem>>, vector<8x1024xf32>,
    %c0_201 = arith.constant 0 : index
    %c33_202 = arith.constant 33 : index
    %172 = vector.load %arg12[%c0_201, %c33_202] : memref<8x1058xf32, #tpu.memory_space<vmem>>, vector<8x1024xf32>
    %c56_203 = arith.constant 56 : index
    %c0_204 = arith.constant 0 : index
    %173 = vector.load %arg2[%c56_203, %c0_204] : memref<72x1024xf32, #tpu.memory_space<vmem>>, vector<8x1024xf32>
    %174 = arith.mulf %172, %173 : vector<8x1024xf32>
    %c56_205 = arith.constant 56 : index
    %c0_206 = arith.constant 0 : index
    %175 = vector.load %arg13[%c56_205, %c0_206] : memref<72x1024xf32, #tpu.memory_space<vmem>>, vector<8x1024xf32>
    tpu.vector_store %arg13[%c56_205, %c0_206], %174 {strides = array<i32>} : memref<72x1024xf32, #tpu.memory_space<vmem>>, vector<8x1024xf32>,
    %c0_207 = arith.constant 0 : index
    %c34_208 = arith.constant 34 : index
    %176 = vector.load %arg12[%c0_207, %c34_208] : memref<8x1058xf32, #tpu.memory_space<vmem>>, vector<8x1024xf32>
    %c64_209 = arith.constant 64 : index
    %c0_210 = arith.constant 0 : index
    %177 = vector.load %arg2[%c64_209, %c0_210] : memref<72x1024xf32, #tpu.memory_space<vmem>>, vector<8x1024xf32>
    %178 = arith.mulf %176, %177 : vector<8x1024xf32>
    %c64_211 = arith.constant 64 : index
    %c0_212 = arith.constant 0 : index
    %179 = vector.load %arg13[%c64_211, %c0_212] : memref<72x1024xf32, #tpu.memory_space<vmem>>, vector<8x1024xf32>
    tpu.vector_store %arg13[%c64_211, %c0_212], %178 {strides = array<i32>} : memref<72x1024xf32, #tpu.memory_space<vmem>>, vector<8x1024xf32>,
    %c0_213 = arith.constant 0 : index
    %c0_214 = arith.constant 0 : index
    %180 = vector.load %arg7[%c0_213, %c0_214] : memref<8x72xf32, #tpu.memory_space<vmem>>, vector<8x72xf32>
    %c0_215 = arith.constant 0 : index
    %c0_216 = arith.constant 0 : index
    %181 = vector.load %arg13[%c0_215, %c0_216] : memref<72x1024xf32, #tpu.memory_space<vmem>>, vector<72x1024xf32>
    %cst_217 = arith.constant dense<0.000000e+00> : vector<8x1024xf32>
    %182 = tpu.matmul %180, %181, %cst_217 {dimension_numbers = #tpu.dot_dimension_numbers<[1], [0], [0], [1], [0, 0, 1, 1], [], []>} : vector<8x72xf32>, vector<72x1024xf32>, vector<8x1024xf32> -> vector<8x1024xf32>
    %c0_218 = arith.constant 0 : index
    %c0_219 = arith.constant 0 : index
    %183 = vector.load %arg8[%c0_218, %c0_219] : memref<8x1xf32, #tpu.memory_space<vmem>>, vector<8x1xf32>
    %184 = vector.broadcast %183 : vector<8x1xf32> to vector<8x1024xf32>
    %185 = arith.addf %182, %184 : vector<8x1024xf32>
    %186 = vector.extract_strided_slice %185 {offsets = [0, 0], sizes = [8, 256], strides = [1, 1]} : vector<8x1024xf32> to vector<8x256xf32>
    %c0_220 = arith.constant 0 : index
    %c0_221 = arith.constant 0 : index
    %c0_222 = arith.constant 0 : index
    %187 = vector.load %arg11[%c0_220, %c0_221, %c0_222] : memref<4x8x256xf32, #tpu.memory_space<vmem>>, vector<1x8x256xf32>
    %188 = vector.shape_cast %187 : vector<1x8x256xf32> to vector<8x256xf32>
    %189 = vector.shape_cast %186 : vector<8x256xf32> to vector<1x8x256xf32>
    tpu.vector_store %arg11[%c0_220, %c0_221, %c0_222], %189 {strides = array<i32>} : memref<4x8x256xf32, #tpu.memory_space<vmem>>, vector<1x8x256xf32>,
    %190 = vector.extract_strided_slice %185 {offsets = [0, 256], sizes = [8, 256], strides = [1, 1]} : vector<8x1024xf32> to vector<8x256xf32>
    %c1_223 = arith.constant 1 : index
    %c0_224 = arith.constant 0 : index
    %c0_225 = arith.constant 0 : index
    %191 = vector.load %arg11[%c1_223, %c0_224, %c0_225] : memref<4x8x256xf32, #tpu.memory_space<vmem>>, vector<1x8x256xf32>
    %192 = vector.shape_cast %191 : vector<1x8x256xf32> to vector<8x256xf32>
    %193 = vector.shape_cast %190 : vector<8x256xf32> to vector<1x8x256xf32>
    tpu.vector_store %arg11[%c1_223, %c0_224, %c0_225], %193 {strides = array<i32>} : memref<4x8x256xf32, #tpu.memory_space<vmem>>, vector<1x8x256xf32>,
    %194 = vector.extract_strided_slice %185 {offsets = [0, 512], sizes = [8, 256], strides = [1, 1]} : vector<8x1024xf32> to vector<8x256xf32>
    %c2_226 = arith.constant 2 : index
    %c0_227 = arith.constant 0 : index
    %c0_228 = arith.constant 0 : index
    %195 = vector.load %arg11[%c2_226, %c0_227, %c0_228] : memref<4x8x256xf32, #tpu.memory_space<vmem>>, vector<1x8x256xf32>
    %196 = vector.shape_cast %195 : vector<1x8x256xf32> to vector<8x256xf32>
    %197 = vector.shape_cast %194 : vector<8x256xf32> to vector<1x8x256xf32>
    tpu.vector_store %arg11[%c2_226, %c0_227, %c0_228], %197 {strides = array<i32>} : memref<4x8x256xf32, #tpu.memory_space<vmem>>, vector<1x8x256xf32>,
    %198 = vector.extract_strided_slice %185 {offsets = [0, 768], sizes = [8, 256], strides = [1, 1]} : vector<8x1024xf32> to vector<8x256xf32>
    %c3_229 = arith.constant 3 : index
    %c0_230 = arith.constant 0 : index
    %c0_231 = arith.constant 0 : index
    %199 = vector.load %arg11[%c3_229, %c0_230, %c0_231] : memref<4x8x256xf32, #tpu.memory_space<vmem>>, vector<1x8x256xf32>
    %200 = vector.shape_cast %199 : vector<1x8x256xf32> to vector<8x256xf32>
    %201 = vector.shape_cast %198 : vector<8x256xf32> to vector<1x8x256xf32>
    tpu.vector_store %arg11[%c3_229, %c0_230, %c0_231], %201 {strides = array<i32>} : memref<4x8x256xf32, #tpu.memory_space<vmem>>, vector<1x8x256xf32>,
    return
  }
  func.func @transform_0(%arg0: i32) -> (i32, i32, i32) {
    %c0_i32 = arith.constant 0 : i32
    %c0_i32_0 = arith.constant 0 : i32
    %c0_i32_1 = arith.constant 0 : i32
    return %arg0, %c0_i32, %c0_i32_0 : i32, i32, i32
  }
  func.func @transform_1(%arg0: i32) -> (i32, i32) {
    %c0_i32 = arith.constant 0 : i32
    %c0_i32_0 = arith.constant 0 : i32
    %c0_i32_1 = arith.constant 0 : i32
    return %c0_i32, %c0_i32_0 : i32, i32
  }
  func.func @transform_2(%arg0: i32) -> (i32, i32) {
    %c0_i32 = arith.constant 0 : i32
    %c0_i32_0 = arith.constant 0 : i32
    %c0_i32_1 = arith.constant 0 : i32
    return %c0_i32, %c0_i32_0 : i32, i32
  }
  func.func @transform_3(%arg0: i32) -> (i32, i32) {
    %c0_i32 = arith.constant 0 : i32
    %c0_i32_0 = arith.constant 0 : i32
    %c0_i32_1 = arith.constant 0 : i32
    return %c0_i32, %c0_i32_0 : i32, i32
  }
  func.func @transform_4(%arg0: i32) -> (i32, i32) {
    %c0_i32 = arith.constant 0 : i32
    %c0_i32_0 = arith.constant 0 : i32
    %c0_i32_1 = arith.constant 0 : i32
    return %c0_i32, %c0_i32_0 : i32, i32
  }
  func.func @transform_5(%arg0: i32) -> (i32, i32) {
    %c0_i32 = arith.constant 0 : i32
    %c0_i32_0 = arith.constant 0 : i32
    %c0_i32_1 = arith.constant 0 : i32
    return %c0_i32, %c0_i32_0 : i32, i32
  }
  func.func @transform_6(%arg0: i32) -> (i32, i32) {
    %c0_i32 = arith.constant 0 : i32
    %c0_i32_0 = arith.constant 0 : i32
    %c0_i32_1 = arith.constant 0 : i32
    return %c0_i32, %c0_i32_0 : i32, i32
  }
  func.func @transform_7(%arg0: i32) -> (i32, i32) {
    %c0_i32 = arith.constant 0 : i32
    %c0_i32_0 = arith.constant 0 : i32
    %c0_i32_1 = arith.constant 0 : i32
    return %c0_i32, %c0_i32_0 : i32, i32
  }
  func.func @transform_8(%arg0: i32) -> (i32, i32, i32) {
    %c0_i32 = arith.constant 0 : i32
    %c0_i32_0 = arith.constant 0 : i32
    %c0_i32_1 = arith.constant 0 : i32
    return %arg0, %c0_i32, %c0_i32_0 : i32, i32, i32
  }
  func.func @transform_9(%arg0: i32) -> (i32, i32, i32) {
    %c0_i32 = arith.constant 0 : i32
    %c0_i32_0 = arith.constant 0 : i32
    %c0_i32_1 = arith.constant 0 : i32
    return %arg0, %c0_i32, %c0_i32_0 : i32, i32, i32
  }
  func.func @transform_10(%arg0: i32) -> (i32, i32, i32) {
    %c0_i32 = arith.constant 0 : i32
    %c0_i32_0 = arith.constant 0 : i32
    %c0_i32_1 = arith.constant 0 : i32
    return %arg0, %c0_i32, %c0_i32_0 : i32, i32, i32
  }
}

</mosaic_0001>

<llo_original>
// kernel: gan_loss_forward.1
$region0: #{gan_loss_forward.1}
  #allocation0 [shape = 'u32[]', space=smem, size = 0x4, offset = 0x4, fixed_abs, tag = 'smem constant byte address 0x4 - core index']
  #allocation1 [shape = 'u32[144,128]{1,0:T(1,128)}', space=vmem, size = 0x12000, scoped, tag = 'internal scratch']
  #allocation2 [shape = 'f32[8,1058]{1,0:T(8,128)}', space=vmem, size = 0x9000, scoped, tag = 'scratch operand']
  #allocation3 [shape = 'f32[72,1024]{1,0:T(8,128)}', space=vmem, size = 0x48000, scoped, tag = 'scratch operand']
  %s0 = inlined_call_operand.vmem [shape: f32[4,8,256], index: 0, kind: input, shape index: {}]
  %s1 = inlined_call_operand.vmem [shape: f32[72,1024], index: 1, kind: input, shape index: {}]
  %s2 = inlined_call_operand.vmem [shape: f32[8,72], index: 2, kind: input, shape index: {}]
  %s3 = inlined_call_operand.vmem [shape: f32[8,1], index: 3, kind: input, shape index: {}]
  %s4 = inlined_call_operand.vmem [shape: f32[8,72], index: 4, kind: input, shape index: {}]
  %s5 = inlined_call_operand.vmem [shape: f32[8,1], index: 5, kind: input, shape index: {}]
  %s6 = inlined_call_operand.vmem [shape: f32[8,72], index: 6, kind: input, shape index: {}]
  %s7 = inlined_call_operand.vmem [shape: f32[8,1], index: 7, kind: input, shape index: {}]
  %s8 = inlined_call_operand.vmem [shape: f32[4,8,256], index: 8, kind: output, shape index: {0}]
  %s9 = inlined_call_operand.vmem [shape: f32[4,8,256], index: 9, kind: output, shape index: {1}]
  %s10 = inlined_call_operand.vmem [shape: f32[4,8,256], index: 10, kind: output, shape index: {2}]
  %11 = xla_tuple %s8, %s9, %s10
  %s12 = sld [smem:[#allocation0]]
  $region58: #{gan_loss_forward.1} parent=0
    _
  %s14 = ssub.s32 1, %s12
  %s15 = scalar_select 0, %s14, %s12
  // Predicated region
  $region2: #{gan_loss_forward.1} parent=0 // pred_check
    _
  $region3: #{gan_loss_forward.1} parent=0 // pred_check_branch
    %17 = sbr.rel (0) target = $region5
  $region4: #{gan_loss_forward.1} parent=0 // pred_region
    _
  $region5: #{gan_loss_forward.1} parent=0 // pred_fallthru
    _
  // Predicated region
  $region6: #{gan_loss_forward.1} parent=0 // pred_check
    _
  $region7: #{gan_loss_forward.1} parent=0 // pred_check_branch
    %19 = sbr.rel (0) target = $region9
  $region8: #{gan_loss_forward.1} parent=0 // pred_region
    _
  $region9: #{gan_loss_forward.1} parent=0 // pred_fallthru
    _
  // Predicated region
  $region10: #{gan_loss_forward.1} parent=0 // pred_check
    _
  $region11: #{gan_loss_forward.1} parent=0 // pred_check_branch
    %21 = sbr.rel (0) target = $region13
  $region12: #{gan_loss_forward.1} parent=0 // pred_region
    _
  $region13: #{gan_loss_forward.1} parent=0 // pred_fallthru
    _
  // Predicated region
  $region14: #{gan_loss_forward.1} parent=0 // pred_check
    _
  $region15: #{gan_loss_forward.1} parent=0 // pred_check_branch
    %23 = sbr.rel (0) target = $region17
  $region16: #{gan_loss_forward.1} parent=0 // pred_region
    _
  $region17: #{gan_loss_forward.1} parent=0 // pred_fallthru
    _
  // Predicated region
  $region18: #{gan_loss_forward.1} parent=0 // pred_check
    _
  $region19: #{gan_loss_forward.1} parent=0 // pred_check_branch
    %25 = sbr.rel (0) target = $region21
  $region20: #{gan_loss_forward.1} parent=0 // pred_region
    _
  $region21: #{gan_loss_forward.1} parent=0 // pred_fallthru
    _
  // Predicated region
  $region22: #{gan_loss_forward.1} parent=0 // pred_check
    _
  $region23: #{gan_loss_forward.1} parent=0 // pred_check_branch
    %27 = sbr.rel (0) target = $region25
  $region24: #{gan_loss_forward.1} parent=0 // pred_region
    _
  $region25: #{gan_loss_forward.1} parent=0 // pred_fallthru
    _
  // Predicated region
  $region26: #{gan_loss_forward.1} parent=0 // pred_check
    _
  $region27: #{gan_loss_forward.1} parent=0 // pred_check_branch
    %29 = sbr.rel (0) target = $region29
  $region28: #{gan_loss_forward.1} parent=0 // pred_region
    _
  $region29: #{gan_loss_forward.1} parent=0 // pred_fallthru
    _
  // Predicated region
  $region30: #{gan_loss_forward.1} parent=0 // pred_check
    _
  $region31: #{gan_loss_forward.1} parent=0 // pred_check_branch
    %31 = sbr.rel (0) target = $region33
  $region32: #{gan_loss_forward.1} parent=0 // pred_region
    _
  $region33: #{gan_loss_forward.1} parent=0 // pred_fallthru
    _
  %vm32 = vcmask 138240
  %33 = vst.msk [vmem:[#allocation2] sm:$0xff] %vm32, 0.0
  %vm34 = vcmask 277640
  %35 = vst.msk [vmem:[#allocation2 + $0x40] sm:$0xff] %vm34, 0.0
  %v36 = vld [vmem:[%s0] sm:$0xff]
  %v37 = vld [vmem:[%s0 + $0x8] sm:$0xff]
  %40 = vrot.lane.b32.xlu0 %v36, 17
  %v41 = vpop.permute.xlu0 %40
  %42 = vrot.lane.b32.xlu0 %v37, 17
  %v43 = vpop.permute.xlu0 %42
  %v44 = vsel %vm32, %v41, %v43
  %vm48 = vcmask 1047688
  %49 = vst.msk [vmem:[#allocation2] sm:$0xff] %vm48, %v41
  %50 = vst [vmem:[#allocation2 + $0x8] sm:$0xff] %v44
  %51 = vst.msk [vmem:[#allocation2 + $0x10] sm:$0xff] %vm32, %v43
  %s52 = scalar_lea.vmem %s0, 16
  %v53 = vld [vmem:[%s52] sm:$0xff]
  %v54 = vld [vmem:[%s52 + $0x8] sm:$0xff]
  %57 = vrot.lane.b32.xlu0 %v53, 17
  %v58 = vpop.permute.xlu0 %57
  %59 = vrot.lane.b32.xlu0 %v54, 17
  %v60 = vpop.permute.xlu0 %59
  %v61 = vsel %vm32, %v58, %v60
  %65 = vst.msk [vmem:[#allocation2 + $0x10] sm:$0xff] %vm48, %v58
  %66 = vst [vmem:[#allocation2 + $0x18] sm:$0xff] %v61
  %67 = vst.msk [vmem:[#allocation2 + $0x20] sm:$0xff] %vm32, %v60
  %s68 = scalar_lea.vmem %s0, 32
  %v69 = vld [vmem:[%s68] sm:$0xff]
  %v70 = vld [vmem:[%s68 + $0x8] sm:$0xff]
  %73 = vrot.lane.b32.xlu0 %v69, 17
  %v74 = vpop.permute.xlu0 %73
  %75 = vrot.lane.b32.xlu0 %v70, 17
  %v76 = vpop.permute.xlu0 %75
  %v77 = vsel %vm32, %v74, %v76
  %81 = vst.msk [vmem:[#allocation2 + $0x20] sm:$0xff] %vm48, %v74
  %82 = vst [vmem:[#allocation2 + $0x28] sm:$0xff] %v77
  %83 = vst.msk [vmem:[#allocation2 + $0x30] sm:$0xff] %vm32, %v76
  %s84 = scalar_lea.vmem %s0, 48
  %v85 = vld [vmem:[%s84] sm:$0xff]
  %v86 = vld [vmem:[%s84 + $0x8] sm:$0xff]
  %89 = vrot.lane.b32.xlu0 %v85, 17
  %v90 = vpop.permute.xlu0 %89
  %91 = vrot.lane.b32.xlu0 %v86, 17
  %v92 = vpop.permute.xlu0 %91
  %v93 = vsel %vm32, %v90, %v92
  %97 = vst.msk [vmem:[#allocation2 + $0x30] sm:$0xff] %vm48, %v90
  %98 = vst [vmem:[#allocation2 + $0x38] sm:$0xff] %v93
  %99 = vst.msk [vmem:[#allocation2 + $0x40] sm:$0xff] %vm32, %v92
  %v100 = vld [vmem:[#allocation2] sm:$0xff]
  %v101 = vld [vmem:[#allocation2 + $0x8] sm:$0xff]
  %v102 = vld [vmem:[#allocation2 + $0x10] sm:$0xff]
  %v103 = vld [vmem:[#allocation2 + $0x18] sm:$0xff]
  %v104 = vld [vmem:[#allocation2 + $0x20] sm:$0xff]
  %v105 = vld [vmem:[#allocation2 + $0x28] sm:$0xff]
  %v106 = vld [vmem:[#allocation2 + $0x30] sm:$0xff]
  %v107 = vld [vmem:[#allocation2 + $0x38] sm:$0xff]
  %v108 = vld [vmem:[%s1] sm:$0xff]
  %v109 = vld [vmem:[%s1 + $0x8] sm:$0xff]
  %v110 = vld [vmem:[%s1 + $0x10] sm:$0xff]
  %v111 = vld [vmem:[%s1 + $0x18] sm:$0xff]
  %v112 = vld [vmem:[%s1 + $0x20] sm:$0xff]
  %v113 = vld [vmem:[%s1 + $0x28] sm:$0xff]
  %v114 = vld [vmem:[%s1 + $0x30] sm:$0xff]
  %v115 = vld [vmem:[%s1 + $0x38] sm:$0xff]
  %v116 = vmul.f32 %v100, %v108
  %v117 = vmul.f32 %v101, %v109
  %v118 = vmul.f32 %v102, %v110
  %v119 = vmul.f32 %v103, %v111
  %v120 = vmul.f32 %v104, %v112
  %v121 = vmul.f32 %v105, %v113
  %v122 = vmul.f32 %v106, %v114
  %v123 = vmul.f32 %v107, %v115
  %124 = vst [vmem:[#allocation3] sm:$0xff] %v116
  %125 = vst [vmem:[#allocation3 + $0x8] sm:$0xff] %v117
  %126 = vst [vmem:[#allocation3 + $0x10] sm:$0xff] %v118
  %127 = vst [vmem:[#allocation3 + $0x18] sm:$0xff] %v119
  %128 = vst [vmem:[#allocation3 + $0x20] sm:$0xff] %v120
  %129 = vst [vmem:[#allocation3 + $0x28] sm:$0xff] %v121
  %130 = vst [vmem:[#allocation3 + $0x30] sm:$0xff] %v122
  %131 = vst [vmem:[#allocation3 + $0x38] sm:$0xff] %v123
  %v132 = vld [vmem:[#allocation2] sm:$0xff]
  %v133 = vld [vmem:[#allocation2 + $0x8] sm:$0xff]
  %v134 = vld [vmem:[#allocation2 + $0x10] sm:$0xff]
  %v135 = vld [vmem:[#allocation2 + $0x18] sm:$0xff]
  %v136 = vld [vmem:[#allocation2 + $0x20] sm:$0xff]
  %v137 = vld [vmem:[#allocation2 + $0x28] sm:$0xff]
  %v138 = vld [vmem:[#allocation2 + $0x30] sm:$0xff]
  %v139 = vld [vmem:[#allocation2 + $0x38] sm:$0xff]
  %v140 = vld [vmem:[#allocation2 + $0x40] sm:$0xff]
  %v141 = vld [vmem:[%s1 + $0x40] sm:$0xff]
  %v142 = vld [vmem:[%s1 + $0x48] sm:$0xff]
  %v143 = vld [vmem:[%s1 + $0x50] sm:$0xff]
  %v144 = vld [vmem:[%s1 + $0x58] sm:$0xff]
  %v145 = vld [vmem:[%s1 + $0x60] sm:$0xff]
  %v146 = vld [vmem:[%s1 + $0x68] sm:$0xff]
  %v147 = vld [vmem:[%s1 + $0x70] sm:$0xff]
  %v148 = vld [vmem:[%s1 + $0x78] sm:$0xff]
  %157 = vrot.lane.b32.xlu0 %v141, 1
  %v158 = vpop.permute.xlu0 %157
  %159 = vrot.lane.b32.xlu0 %v142, 1
  %v160 = vpop.permute.xlu0 %159
  %161 = vrot.lane.b32.xlu0 %v143, 1
  %v162 = vpop.permute.xlu0 %161
  %163 = vrot.lane.b32.xlu0 %v144, 1
  %v164 = vpop.permute.xlu0 %163
  %165 = vrot.lane.b32.xlu0 %v145, 1
  %v166 = vpop.permute.xlu0 %165
  %167 = vrot.lane.b32.xlu0 %v146, 1
  %v168 = vpop.permute.xlu0 %167
  %169 = vrot.lane.b32.xlu0 %v147, 1
  %v170 = vpop.permute.xlu0 %169
  %171 = vrot.lane.b32.xlu0 %v148, 1
  %v172 = vpop.permute.xlu0 %171
  %vm173 = vcmask 7168
  %v174 = vsel %vm173, %v158, %v160
  %v175 = vsel %vm173, %v160, %v162
  %v176 = vsel %vm173, %v162, %v164
  %v177 = vsel %vm173, %v164, %v166
  %v178 = vsel %vm173, %v166, %v168
  %v179 = vsel %vm173, %v168, %v170
  %v180 = vsel %vm173, %v170, %v172
  %v190 = vmul.f32 %v132, %v158
  %v191 = vmul.f32 %v133, %v174
  %v192 = vmul.f32 %v134, %v175
  %v193 = vmul.f32 %v135, %v176
  %v194 = vmul.f32 %v136, %v177
  %v195 = vmul.f32 %v137, %v178
  %v196 = vmul.f32 %v138, %v179
  %v197 = vmul.f32 %v139, %v180
  %v198 = vmul.f32 %v140, %v172
  %208 = vrot.lane.b32.xlu0 %v190, 127
  %v209 = vpop.permute.xlu0 %208
  %210 = vrot.lane.b32.xlu0 %v191, 127
  %v211 = vpop.permute.xlu0 %210
  %212 = vrot.lane.b32.xlu0 %v192, 127
  %v213 = vpop.permute.xlu0 %212
  %214 = vrot.lane.b32.xlu0 %v193, 127
  %v215 = vpop.permute.xlu0 %214
  %216 = vrot.lane.b32.xlu0 %v194, 127
  %v217 = vpop.permute.xlu0 %216
  %218 = vrot.lane.b32.xlu0 %v195, 127
  %v219 = vpop.permute.xlu0 %218
  %220 = vrot.lane.b32.xlu0 %v196, 127
  %v221 = vpop.permute.xlu0 %220
  %222 = vrot.lane.b32.xlu0 %v197, 127
  %v223 = vpop.permute.xlu0 %222
  %224 = vrot.lane.b32.xlu0 %v198, 127
  %v225 = vpop.permute.xlu0 %224
  %vm226 = vcmask 1039360
  %v227 = vsel %vm226, %v209, %v211
  %v228 = vsel %vm226, %v211, %v213
  %v229 = vsel %vm226, %v213, %v215
  %v230 = vsel %vm226, %v215, %v217
  %v231 = vsel %vm226, %v217, %v219
  %v232 = vsel %vm226, %v219, %v221
  %v233 = vsel %vm226, %v221, %v223
  %v234 = vsel %vm226, %v223, %v225
  %243 = vst [vmem:[#allocation3 + $0x40] sm:$0xff] %v227
  %244 = vst [vmem:[#allocation3 + $0x48] sm:$0xff] %v228
  %245 = vst [vmem:[#allocation3 + $0x50] sm:$0xff] %v229
  %246 = vst [vmem:[#allocation3 + $0x58] sm:$0xff] %v230
  %247 = vst [vmem:[#allocation3 + $0x60] sm:$0xff] %v231
  %248 = vst [vmem:[#allocation3 + $0x68] sm:$0xff] %v232
  %249 = vst [vmem:[#allocation3 + $0x70] sm:$0xff] %v233
  %250 = vst [vmem:[#allocation3 + $0x78] sm:$0xff] %v234
  %v251 = vld [vmem:[#allocation2] sm:$0xff]
  %v252 = vld [vmem:[#allocation2 + $0x8] sm:$0xff]
  %v253 = vld [vmem:[#allocation2 + $0x10] sm:$0xff]
  %v254 = vld [vmem:[#allocation2 + $0x18] sm:$0xff]
  %v255 = vld [vmem:[#allocation2 + $0x20] sm:$0xff]
  %v256 = vld [vmem:[#allocation2 + $0x28] sm:$0xff]
  %v257 = vld [vmem:[#allocation2 + $0x30] sm:$0xff]
  %v258 = vld [vmem:[#allocation2 + $0x38] sm:$0xff]
  %v259 = vld [vmem:[#allocation2 + $0x40] sm:$0xff]
  %v260 = vld [vmem:[%s1 + $0x80] sm:$0xff]
  %v261 = vld [vmem:[%s1 + $0x88] sm:$0xff]
  %v262 = vld [vmem:[%s1 + $0x90] sm:$0xff]
  %v263 = vld [vmem:[%s1 + $0x98] sm:$0xff]
  %v264 = vld [vmem:[%s1 + $0xa0] sm:$0xff]
  %v265 = vld [vmem:[%s1 + $0xa8] sm:$0xff]
  %v266 = vld [vmem:[%s1 + $0xb0] sm:$0xff]
  %v267 = vld [vmem:[%s1 + $0xb8] sm:$0xff]
  %276 = vrot.lane.b32.xlu0 %v260, 2
  %v277 = vpop.permute.xlu0 %276
  %278 = vrot.lane.b32.xlu0 %v261, 2
  %v279 = vpop.permute.xlu0 %278
  %280 = vrot.lane.b32.xlu0 %v262, 2
  %v281 = vpop.permute.xlu0 %280
  %282 = vrot.lane.b32.xlu0 %v263, 2
  %v283 = vpop.permute.xlu0 %282
  %284 = vrot.lane.b32.xlu0 %v264, 2
  %v285 = vpop.permute.xlu0 %284
  %286 = vrot.lane.b32.xlu0 %v265, 2
  %v287 = vpop.permute.xlu0 %286
  %288 = vrot.lane.b32.xlu0 %v266, 2
  %v289 = vpop.permute.xlu0 %288
  %290 = vrot.lane.b32.xlu0 %v267, 2
  %v291 = vpop.permute.xlu0 %290
  %vm292 = vcmask 15360
  %v293 = vsel %vm292, %v277, %v279
  %v294 = vsel %vm292, %v279, %v281
  %v295 = vsel %vm292, %v281, %v283
  %v296 = vsel %vm292, %v283, %v285
  %v297 = vsel %vm292, %v285, %v287
  %v298 = vsel %vm292, %v287, %v289
  %v299 = vsel %vm292, %v289, %v291
  %v309 = vmul.f32 %v251, %v277
  %v310 = vmul.f32 %v252, %v293
  %v311 = vmul.f32 %v253, %v294
  %v312 = vmul.f32 %v254, %v295
  %v313 = vmul.f32 %v255, %v296
  %v314 = vmul.f32 %v256, %v297
  %v315 = vmul.f32 %v257, %v298
  %v316 = vmul.f32 %v258, %v299
  %v317 = vmul.f32 %v259, %v291
  %327 = vrot.lane.b32.xlu0 %v309, 126
  %v328 = vpop.permute.xlu0 %327
  %329 = vrot.lane.b32.xlu0 %v310, 126
  %v330 = vpop.permute.xlu0 %329
  %331 = vrot.lane.b32.xlu0 %v311, 126
  %v332 = vpop.permute.xlu0 %331
  %333 = vrot.lane.b32.xlu0 %v312, 126
  %v334 = vpop.permute.xlu0 %333
  %335 = vrot.lane.b32.xlu0 %v313, 126
  %v336 = vpop.permute.xlu0 %335
  %337 = vrot.lane.b32.xlu0 %v314, 126
  %v338 = vpop.permute.xlu0 %337
  %339 = vrot.lane.b32.xlu0 %v315, 126
  %v340 = vpop.permute.xlu0 %339
  %341 = vrot.lane.b32.xlu0 %v316, 126
  %v342 = vpop.permute.xlu0 %341
  %343 = vrot.lane.b32.xlu0 %v317, 126
  %v344 = vpop.permute.xlu0 %343
  %vm345 = vcmask 1031168
  %v346 = vsel %vm345, %v328, %v330
  %v347 = vsel %vm345, %v330, %v332
  %v348 = vsel %vm345, %v332, %v334
  %v349 = vsel %vm345, %v334, %v336
  %v350 = vsel %vm345, %v336, %v338
  %v351 = vsel %vm345, %v338, %v340
  %v352 = vsel %vm345, %v340, %v342
  %v353 = vsel %vm345, %v342, %v344
  %362 = vst [vmem:[#allocation3 + $0x80] sm:$0xff] %v346
  %363 = vst [vmem:[#allocation3 + $0x88] sm:$0xff] %v347
  %364 = vst [vmem:[#allocation3 + $0x90] sm:$0xff] %v348
  %365 = vst [vmem:[#allocation3 + $0x98] sm:$0xff] %v349
  %366 = vst [vmem:[#allocation3 + $0xa0] sm:$0xff] %v350
  %367 = vst [vmem:[#allocation3 + $0xa8] sm:$0xff] %v351
  %368 = vst [vmem:[#allocation3 + $0xb0] sm:$0xff] %v352
  %369 = vst [vmem:[#allocation3 + $0xb8] sm:$0xff] %v353
  %v370 = vld [vmem:[#allocation2] sm:$0xff]
  %v371 = vld [vmem:[#allocation2 + $0x8] sm:$0xff]
  %v372 = vld [vmem:[#allocation2 + $0x10] sm:$0xff]
  %v373 = vld [vmem:[#allocation2 + $0x18] sm:$0xff]
  %v374 = vld [vmem:[#allocation2 + $0x20] sm:$0xff]
  %v375 = vld [vmem:[#allocation2 + $0x28] sm:$0xff]
  %v376 = vld [vmem:[#allocation2 + $0x30] sm:$0xff]
  %v377 = vld [vmem:[#allocation2 + $0x38] sm:$0xff]
  %v378 = vld [vmem:[#allocation2 + $0x40] sm:$0xff]
  %v379 = vld [vmem:[%s1 + $0xc0] sm:$0xff]
  %v380 = vld [vmem:[%s1 + $0xc8] sm:$0xff]
  %v381 = vld [vmem:[%s1 + $0xd0] sm:$0xff]
  %v382 = vld [vmem:[%s1 + $0xd8] sm:$0xff]
  %v383 = vld [vmem:[%s1 + $0xe0] sm:$0xff]
  %v384 = vld [vmem:[%s1 + $0xe8] sm:$0xff]
  %v385 = vld [vmem:[%s1 + $0xf0] sm:$0xff]
  %v386 = vld [vmem:[%s1 + $0xf8] sm:$0xff]
  %395 = vrot.lane.b32.xlu0 %v379, 16
  %v396 = vpop.permute.xlu0 %395
  %397 = vrot.lane.b32.xlu0 %v380, 16
  %v398 = vpop.permute.xlu0 %397
  %399 = vrot.lane.b32.xlu0 %v381, 16
  %v400 = vpop.permute.xlu0 %399
  %401 = vrot.lane.b32.xlu0 %v382, 16
  %v402 = vpop.permute.xlu0 %401
  %403 = vrot.lane.b32.xlu0 %v383, 16
  %v404 = vpop.permute.xlu0 %403
  %405 = vrot.lane.b32.xlu0 %v384, 16
  %v406 = vpop.permute.xlu0 %405
  %407 = vrot.lane.b32.xlu0 %v385, 16
  %v408 = vpop.permute.xlu0 %407
  %409 = vrot.lane.b32.xlu0 %v386, 16
  %v410 = vpop.permute.xlu0 %409
  %vm411 = vcmask 130048
  %v412 = vsel %vm411, %v396, %v398
  %v413 = vsel %vm411, %v398, %v400
  %v414 = vsel %vm411, %v400, %v402
  %v415 = vsel %vm411, %v402, %v404
  %v416 = vsel %vm411, %v404, %v406
  %v417 = vsel %vm411, %v406, %v408
  %v418 = vsel %vm411, %v408, %v410
  %v428 = vmul.f32 %v370, %v396
  %v429 = vmul.f32 %v371, %v412
  %v430 = vmul.f32 %v372, %v413
  %v431 = vmul.f32 %v373, %v414
  %v432 = vmul.f32 %v374, %v415
  %v433 = vmul.f32 %v375, %v416
  %v434 = vmul.f32 %v376, %v417
  %v435 = vmul.f32 %v377, %v418
  %v436 = vmul.f32 %v378, %v410
  %446 = vrot.lane.b32.xlu0 %v428, 112
  %v447 = vpop.permute.xlu0 %446
  %448 = vrot.lane.b32.xlu0 %v429, 112
  %v449 = vpop.permute.xlu0 %448
  %450 = vrot.lane.b32.xlu0 %v430, 112
  %v451 = vpop.permute.xlu0 %450
  %452 = vrot.lane.b32.xlu0 %v431, 112
  %v453 = vpop.permute.xlu0 %452
  %454 = vrot.lane.b32.xlu0 %v432, 112
  %v455 = vpop.permute.xlu0 %454
  %456 = vrot.lane.b32.xlu0 %v433, 112
  %v457 = vpop.permute.xlu0 %456
  %458 = vrot.lane.b32.xlu0 %v434, 112
  %v459 = vpop.permute.xlu0 %458
  %460 = vrot.lane.b32.xlu0 %v435, 112
  %v461 = vpop.permute.xlu0 %460
  %462 = vrot.lane.b32.xlu0 %v436, 112
  %v463 = vpop.permute.xlu0 %462
  %vm464 = vcmask 916480
  %v465 = vsel %vm464, %v447, %v449
  %v466 = vsel %vm464, %v449, %v451
  %v467 = vsel %vm464, %v451, %v453
  %v468 = vsel %vm464, %v453, %v455
  %v469 = vsel %vm464, %v455, %v457
  %v470 = vsel %vm464, %v457, %v459
  %v471 = vsel %vm464, %v459, %v461
  %v472 = vsel %vm464, %v461, %v463
  %481 = vst [vmem:[#allocation3 + $0xc0] sm:$0xff] %v465
  %482 = vst [vmem:[#allocation3 + $0xc8] sm:$0xff] %v466
  %483 = vst [vmem:[#allocation3 + $0xd0] sm:$0xff] %v467
  %484 = vst [vmem:[#allocation3 + $0xd8] sm:$0xff] %v468
  %485 = vst [vmem:[#allocation3 + $0xe0] sm:$0xff] %v469
  %486 = vst [vmem:[#allocation3 + $0xe8] sm:$0xff] %v470
  %487 = vst [vmem:[#allocation3 + $0xf0] sm:$0xff] %v471
  %488 = vst [vmem:[#allocation3 + $0xf8] sm:$0xff] %v472
  %v489 = vld [vmem:[#allocation2] sm:$0xff]
  %v490 = vld [vmem:[#allocation2 + $0x8] sm:$0xff]
  %v491 = vld [vmem:[#allocation2 + $0x10] sm:$0xff]
  %v492 = vld [vmem:[#allocation2 + $0x18] sm:$0xff]
  %v493 = vld [vmem:[#allocation2 + $0x20] sm:$0xff]
  %v494 = vld [vmem:[#allocation2 + $0x28] sm:$0xff]
  %v495 = vld [vmem:[#allocation2 + $0x30] sm:$0xff]
  %v496 = vld [vmem:[#allocation2 + $0x38] sm:$0xff]
  %v497 = vld [vmem:[#allocation2 + $0x40] sm:$0xff]
  %v498 = vld [vmem:[%s1 + $0x100] sm:$0xff]
  %v499 = vld [vmem:[%s1 + $0x108] sm:$0xff]
  %v500 = vld [vmem:[%s1 + $0x110] sm:$0xff]
  %v501 = vld [vmem:[%s1 + $0x118] sm:$0xff]
  %v502 = vld [vmem:[%s1 + $0x120] sm:$0xff]
  %v503 = vld [vmem:[%s1 + $0x128] sm:$0xff]
  %v504 = vld [vmem:[%s1 + $0x130] sm:$0xff]
  %v505 = vld [vmem:[%s1 + $0x138] sm:$0xff]
  %514 = vrot.lane.b32.xlu0 %v498, 17
  %v515 = vpop.permute.xlu0 %514
  %516 = vrot.lane.b32.xlu0 %v499, 17
  %v517 = vpop.permute.xlu0 %516
  %518 = vrot.lane.b32.xlu0 %v500, 17
  %v519 = vpop.permute.xlu0 %518
  %520 = vrot.lane.b32.xlu0 %v501, 17
  %v521 = vpop.permute.xlu0 %520
  %522 = vrot.lane.b32.xlu0 %v502, 17
  %v523 = vpop.permute.xlu0 %522
  %524 = vrot.lane.b32.xlu0 %v503, 17
  %v525 = vpop.permute.xlu0 %524
  %526 = vrot.lane.b32.xlu0 %v504, 17
  %v527 = vpop.permute.xlu0 %526
  %528 = vrot.lane.b32.xlu0 %v505, 17
  %v529 = vpop.permute.xlu0 %528
  %v530 = vsel %vm32, %v515, %v517
  %v531 = vsel %vm32, %v517, %v519
  %v532 = vsel %vm32, %v519, %v521
  %v533 = vsel %vm32, %v521, %v523
  %v534 = vsel %vm32, %v523, %v525
  %v535 = vsel %vm32, %v525, %v527
  %v536 = vsel %vm32, %v527, %v529
  %v546 = vmul.f32 %v489, %v515
  %v547 = vmul.f32 %v490, %v530
  %v548 = vmul.f32 %v491, %v531
  %v549 = vmul.f32 %v492, %v532
  %v550 = vmul.f32 %v493, %v533
  %v551 = vmul.f32 %v494, %v534
  %v552 = vmul.f32 %v495, %v535
  %v553 = vmul.f32 %v496, %v536
  %v554 = vmul.f32 %v497, %v529
  %564 = vrot.lane.b32.xlu0 %v546, 111
  %v565 = vpop.permute.xlu0 %564
  %566 = vrot.lane.b32.xlu0 %v547, 111
  %v567 = vpop.permute.xlu0 %566
  %568 = vrot.lane.b32.xlu0 %v548, 111
  %v569 = vpop.permute.xlu0 %568
  %570 = vrot.lane.b32.xlu0 %v549, 111
  %v571 = vpop.permute.xlu0 %570
  %572 = vrot.lane.b32.xlu0 %v550, 111
  %v573 = vpop.permute.xlu0 %572
  %574 = vrot.lane.b32.xlu0 %v551, 111
  %v575 = vpop.permute.xlu0 %574
  %576 = vrot.lane.b32.xlu0 %v552, 111
  %v577 = vpop.permute.xlu0 %576
  %578 = vrot.lane.b32.xlu0 %v553, 111
  %v579 = vpop.permute.xlu0 %578
  %580 = vrot.lane.b32.xlu0 %v554, 111
  %v581 = vpop.permute.xlu0 %580
  %vm582 = vcmask 908288
  %v583 = vsel %vm582, %v565, %v567
  %v584 = vsel %vm582, %v567, %v569
  %v585 = vsel %vm582, %v569, %v571
  %v586 = vsel %vm582, %v571, %v573
  %v587 = vsel %vm582, %v573, %v575
  %v588 = vsel %vm582, %v575, %v577
  %v589 = vsel %vm582, %v577, %v579
  %v590 = vsel %vm582, %v579, %v581
  %599 = vst [vmem:[#allocation3 + $0x100] sm:$0xff] %v583
  %600 = vst [vmem:[#allocation3 + $0x108] sm:$0xff] %v584
  %601 = vst [vmem:[#allocation3 + $0x110] sm:$0xff] %v585
  %602 = vst [vmem:[#allocation3 + $0x118] sm:$0xff] %v586
  %603 = vst [vmem:[#allocation3 + $0x120] sm:$0xff] %v587
  %604 = vst [vmem:[#allocation3 + $0x128] sm:$0xff] %v588
  %605 = vst [vmem:[#allocation3 + $0x130] sm:$0xff] %v589
  %606 = vst [vmem:[#allocation3 + $0x138] sm:$0xff] %v590
  %v607 = vld [vmem:[#allocation2] sm:$0xff]
  %v608 = vld [vmem:[#allocation2 + $0x8] sm:$0xff]
  %v609 = vld [vmem:[#allocation2 + $0x10] sm:$0xff]
  %v610 = vld [vmem:[#allocation2 + $0x18] sm:$0xff]
  %v611 = vld [vmem:[#allocation2 + $0x20] sm:$0xff]
  %v612 = vld [vmem:[#allocation2 + $0x28] sm:$0xff]
  %v613 = vld [vmem:[#allocation2 + $0x30] sm:$0xff]
  %v614 = vld [vmem:[#allocation2 + $0x38] sm:$0xff]
  %v615 = vld [vmem:[#allocation2 + $0x40] sm:$0xff]
  %v616 = vld [vmem:[%s1 + $0x140] sm:$0xff]
  %v617 = vld [vmem:[%s1 + $0x148] sm:$0xff]
  %v618 = vld [vmem:[%s1 + $0x150] sm:$0xff]
  %v619 = vld [vmem:[%s1 + $0x158] sm:$0xff]
  %v620 = vld [vmem:[%s1 + $0x160] sm:$0xff]
  %v621 = vld [vmem:[%s1 + $0x168] sm:$0xff]
  %v622 = vld [vmem:[%s1 + $0x170] sm:$0xff]
  %v623 = vld [vmem:[%s1 + $0x178] sm:$0xff]
  %632 = vrot.lane.b32.xlu0 %v616, 18
  %v633 = vpop.permute.xlu0 %632
  %634 = vrot.lane.b32.xlu0 %v617, 18
  %v635 = vpop.permute.xlu0 %634
  %636 = vrot.lane.b32.xlu0 %v618, 18
  %v637 = vpop.permute.xlu0 %636
  %638 = vrot.lane.b32.xlu0 %v619, 18
  %v639 = vpop.permute.xlu0 %638
  %640 = vrot.lane.b32.xlu0 %v620, 18
  %v641 = vpop.permute.xlu0 %640
  %642 = vrot.lane.b32.xlu0 %v621, 18
  %v643 = vpop.permute.xlu0 %642
  %644 = vrot.lane.b32.xlu0 %v622, 18
  %v645 = vpop.permute.xlu0 %644
  %646 = vrot.lane.b32.xlu0 %v623, 18
  %v647 = vpop.permute.xlu0 %646
  %vm648 = vcmask 146432
  %v649 = vsel %vm648, %v633, %v635
  %v650 = vsel %vm648, %v635, %v637
  %v651 = vsel %vm648, %v637, %v639
  %v652 = vsel %vm648, %v639, %v641
  %v653 = vsel %vm648, %v641, %v643
  %v654 = vsel %vm648, %v643, %v645
  %v655 = vsel %vm648, %v645, %v647
  %v665 = vmul.f32 %v607, %v633
  %v666 = vmul.f32 %v608, %v649
  %v667 = vmul.f32 %v609, %v650
  %v668 = vmul.f32 %v610, %v651
  %v669 = vmul.f32 %v611, %v652
  %v670 = vmul.f32 %v612, %v653
  %v671 = vmul.f32 %v613, %v654
  %v672 = vmul.f32 %v614, %v655
  %v673 = vmul.f32 %v615, %v647
  %683 = vrot.lane.b32.xlu0 %v665, 110
  %v684 = vpop.permute.xlu0 %683
  %685 = vrot.lane.b32.xlu0 %v666, 110
  %v686 = vpop.permute.xlu0 %685
  %687 = vrot.lane.b32.xlu0 %v667, 110
  %v688 = vpop.permute.xlu0 %687
  %689 = vrot.lane.b32.xlu0 %v668, 110
  %v690 = vpop.permute.xlu0 %689
  %691 = vrot.lane.b32.xlu0 %v669, 110
  %v692 = vpop.permute.xlu0 %691
  %693 = vrot.lane.b32.xlu0 %v670, 110
  %v694 = vpop.permute.xlu0 %693
  %695 = vrot.lane.b32.xlu0 %v671, 110
  %v696 = vpop.permute.xlu0 %695
  %697 = vrot.lane.b32.xlu0 %v672, 110
  %v698 = vpop.permute.xlu0 %697
  %699 = vrot.lane.b32.xlu0 %v673, 110
  %v700 = vpop.permute.xlu0 %699
  %vm701 = vcmask 900096
  %v702 = vsel %vm701, %v684, %v686
  %v703 = vsel %vm701, %v686, %v688
  %v704 = vsel %vm701, %v688, %v690
  %v705 = vsel %vm701, %v690, %v692
  %v706 = vsel %vm701, %v692, %v694
  %v707 = vsel %vm701, %v694, %v696
  %v708 = vsel %vm701, %v696, %v698
  %v709 = vsel %vm701, %v698, %v700
  %718 = vst [vmem:[#allocation3 + $0x140] sm:$0xff] %v702
  %719 = vst [vmem:[#allocation3 + $0x148] sm:$0xff] %v703
  %720 = vst [vmem:[#allocation3 + $0x150] sm:$0xff] %v704
  %721 = vst [vmem:[#allocation3 + $0x158] sm:$0xff] %v705
  %722 = vst [vmem:[#allocation3 + $0x160] sm:$0xff] %v706
  %723 = vst [vmem:[#allocation3 + $0x168] sm:$0xff] %v707
  %724 = vst [vmem:[#allocation3 + $0x170] sm:$0xff] %v708
  %725 = vst [vmem:[#allocation3 + $0x178] sm:$0xff] %v709
  %v726 = vld [vmem:[#allocation2] sm:$0xff]
  %v727 = vld [vmem:[#allocation2 + $0x8] sm:$0xff]
  %v728 = vld [vmem:[#allocation2 + $0x10] sm:$0xff]
  %v729 = vld [vmem:[#allocation2 + $0x18] sm:$0xff]
  %v730 = vld [vmem:[#allocation2 + $0x20] sm:$0xff]
  %v731 = vld [vmem:[#allocation2 + $0x28] sm:$0xff]
  %v732 = vld [vmem:[#allocation2 + $0x30] sm:$0xff]
  %v733 = vld [vmem:[#allocation2 + $0x38] sm:$0xff]
  %v734 = vld [vmem:[#allocation2 + $0x40] sm:$0xff]
  %v735 = vld [vmem:[%s1 + $0x180] sm:$0xff]
  %v736 = vld [vmem:[%s1 + $0x188] sm:$0xff]
  %v737 = vld [vmem:[%s1 + $0x190] sm:$0xff]
  %v738 = vld [vmem:[%s1 + $0x198] sm:$0xff]
  %v739 = vld [vmem:[%s1 + $0x1a0] sm:$0xff]
  %v740 = vld [vmem:[%s1 + $0x1a8] sm:$0xff]
  %v741 = vld [vmem:[%s1 + $0x1b0] sm:$0xff]
  %v742 = vld [vmem:[%s1 + $0x1b8] sm:$0xff]
  %751 = vrot.lane.b32.xlu0 %v735, 32
  %v752 = vpop.permute.xlu0 %751
  %753 = vrot.lane.b32.xlu0 %v736, 32
  %v754 = vpop.permute.xlu0 %753
  %755 = vrot.lane.b32.xlu0 %v737, 32
  %v756 = vpop.permute.xlu0 %755
  %757 = vrot.lane.b32.xlu0 %v738, 32
  %v758 = vpop.permute.xlu0 %757
  %759 = vrot.lane.b32.xlu0 %v739, 32
  %v760 = vpop.permute.xlu0 %759
  %761 = vrot.lane.b32.xlu0 %v740, 32
  %v762 = vpop.permute.xlu0 %761
  %763 = vrot.lane.b32.xlu0 %v741, 32
  %v764 = vpop.permute.xlu0 %763
  %765 = vrot.lane.b32.xlu0 %v742, 32
  %v766 = vpop.permute.xlu0 %765
  %vm767 = vcmask 261120
  %v768 = vsel %vm767, %v752, %v754
  %v769 = vsel %vm767, %v754, %v756
  %v770 = vsel %vm767, %v756, %v758
  %v771 = vsel %vm767, %v758, %v760
  %v772 = vsel %vm767, %v760, %v762
  %v773 = vsel %vm767, %v762, %v764
  %v774 = vsel %vm767, %v764, %v766
  %v784 = vmul.f32 %v726, %v752
  %v785 = vmul.f32 %v727, %v768
  %v786 = vmul.f32 %v728, %v769
  %v787 = vmul.f32 %v729, %v770
  %v788 = vmul.f32 %v730, %v771
  %v789 = vmul.f32 %v731, %v772
  %v790 = vmul.f32 %v732, %v773
  %v791 = vmul.f32 %v733, %v774
  %v792 = vmul.f32 %v734, %v766
  %802 = vrot.lane.b32.xlu0 %v784, 96
  %v803 = vpop.permute.xlu0 %802
  %804 = vrot.lane.b32.xlu0 %v785, 96
  %v805 = vpop.permute.xlu0 %804
  %806 = vrot.lane.b32.xlu0 %v786, 96
  %v807 = vpop.permute.xlu0 %806
  %808 = vrot.lane.b32.xlu0 %v787, 96
  %v809 = vpop.permute.xlu0 %808
  %810 = vrot.lane.b32.xlu0 %v788, 96
  %v811 = vpop.permute.xlu0 %810
  %812 = vrot.lane.b32.xlu0 %v789, 96
  %v813 = vpop.permute.xlu0 %812
  %814 = vrot.lane.b32.xlu0 %v790, 96
  %v815 = vpop.permute.xlu0 %814
  %816 = vrot.lane.b32.xlu0 %v791, 96
  %v817 = vpop.permute.xlu0 %816
  %818 = vrot.lane.b32.xlu0 %v792, 96
  %v819 = vpop.permute.xlu0 %818
  %vm820 = vcmask 785408
  %v821 = vsel %vm820, %v803, %v805
  %v822 = vsel %vm820, %v805, %v807
  %v823 = vsel %vm820, %v807, %v809
  %v824 = vsel %vm820, %v809, %v811
  %v825 = vsel %vm820, %v811, %v813
  %v826 = vsel %vm820, %v813, %v815
  %v827 = vsel %vm820, %v815, %v817
  %v828 = vsel %vm820, %v817, %v819
  %837 = vst [vmem:[#allocation3 + $0x180] sm:$0xff] %v821
  %838 = vst [vmem:[#allocation3 + $0x188] sm:$0xff] %v822
  %839 = vst [vmem:[#allocation3 + $0x190] sm:$0xff] %v823
  %840 = vst [vmem:[#allocation3 + $0x198] sm:$0xff] %v824
  %841 = vst [vmem:[#allocation3 + $0x1a0] sm:$0xff] %v825
  %842 = vst [vmem:[#allocation3 + $0x1a8] sm:$0xff] %v826
  %843 = vst [vmem:[#allocation3 + $0x1b0] sm:$0xff] %v827
  %844 = vst [vmem:[#allocation3 + $0x1b8] sm:$0xff] %v828
  %v845 = vld [vmem:[#allocation2] sm:$0xff]
  %v846 = vld [vmem:[#allocation2 + $0x8] sm:$0xff]
  %v847 = vld [vmem:[#allocation2 + $0x10] sm:$0xff]
  %v848 = vld [vmem:[#allocation2 + $0x18] sm:$0xff]
  %v849 = vld [vmem:[#allocation2 + $0x20] sm:$0xff]
  %v850 = vld [vmem:[#allocation2 + $0x28] sm:$0xff]
  %v851 = vld [vmem:[#allocation2 + $0x30] sm:$0xff]
  %v852 = vld [vmem:[#allocation2 + $0x38] sm:$0xff]
  %v853 = vld [vmem:[#allocation2 + $0x40] sm:$0xff]
  %v854 = vld [vmem:[%s1 + $0x1c0] sm:$0xff]
  %v855 = vld [vmem:[%s1 + $0x1c8] sm:$0xff]
  %v856 = vld [vmem:[%s1 + $0x1d0] sm:$0xff]
  %v857 = vld [vmem:[%s1 + $0x1d8] sm:$0xff]
  %v858 = vld [vmem:[%s1 + $0x1e0] sm:$0xff]
  %v859 = vld [vmem:[%s1 + $0x1e8] sm:$0xff]
  %v860 = vld [vmem:[%s1 + $0x1f0] sm:$0xff]
  %v861 = vld [vmem:[%s1 + $0x1f8] sm:$0xff]
  %870 = vrot.lane.b32.xlu0 %v854, 33
  %v871 = vpop.permute.xlu0 %870
  %872 = vrot.lane.b32.xlu0 %v855, 33
  %v873 = vpop.permute.xlu0 %872
  %874 = vrot.lane.b32.xlu0 %v856, 33
  %v875 = vpop.permute.xlu0 %874
  %876 = vrot.lane.b32.xlu0 %v857, 33
  %v877 = vpop.permute.xlu0 %876
  %878 = vrot.lane.b32.xlu0 %v858, 33
  %v879 = vpop.permute.xlu0 %878
  %880 = vrot.lane.b32.xlu0 %v859, 33
  %v881 = vpop.permute.xlu0 %880
  %882 = vrot.lane.b32.xlu0 %v860, 33
  %v883 = vpop.permute.xlu0 %882
  %884 = vrot.lane.b32.xlu0 %v861, 33
  %v885 = vpop.permute.xlu0 %884
  %vm886 = vcmask 269312
  %v887 = vsel %vm886, %v871, %v873
  %v888 = vsel %vm886, %v873, %v875
  %v889 = vsel %vm886, %v875, %v877
  %v890 = vsel %vm886, %v877, %v879
  %v891 = vsel %vm886, %v879, %v881
  %v892 = vsel %vm886, %v881, %v883
  %v893 = vsel %vm886, %v883, %v885
  %v903 = vmul.f32 %v845, %v871
  %v904 = vmul.f32 %v846, %v887
  %v905 = vmul.f32 %v847, %v888
  %v906 = vmul.f32 %v848, %v889
  %v907 = vmul.f32 %v849, %v890
  %v908 = vmul.f32 %v850, %v891
  %v909 = vmul.f32 %v851, %v892
  %v910 = vmul.f32 %v852, %v893
  %v911 = vmul.f32 %v853, %v885
  %921 = vrot.lane.b32.xlu0 %v903, 95
  %v922 = vpop.permute.xlu0 %921
  %923 = vrot.lane.b32.xlu0 %v904, 95
  %v924 = vpop.permute.xlu0 %923
  %925 = vrot.lane.b32.xlu0 %v905, 95
  %v926 = vpop.permute.xlu0 %925
  %927 = vrot.lane.b32.xlu0 %v906, 95
  %v928 = vpop.permute.xlu0 %927
  %929 = vrot.lane.b32.xlu0 %v907, 95
  %v930 = vpop.permute.xlu0 %929
  %931 = vrot.lane.b32.xlu0 %v908, 95
  %v932 = vpop.permute.xlu0 %931
  %933 = vrot.lane.b32.xlu0 %v909, 95
  %v934 = vpop.permute.xlu0 %933
  %935 = vrot.lane.b32.xlu0 %v910, 95
  %v936 = vpop.permute.xlu0 %935
  %937 = vrot.lane.b32.xlu0 %v911, 95
  %v938 = vpop.permute.xlu0 %937
  %vm939 = vcmask 777216
  %v940 = vsel %vm939, %v922, %v924
  %v941 = vsel %vm939, %v924, %v926
  %v942 = vsel %vm939, %v926, %v928
  %v943 = vsel %vm939, %v928, %v930
  %v944 = vsel %vm939, %v930, %v932
  %v945 = vsel %vm939, %v932, %v934
  %v946 = vsel %vm939, %v934, %v936
  %v947 = vsel %vm939, %v936, %v938
  %956 = vst [vmem:[#allocation3 + $0x1c0] sm:$0xff] %v940
  %957 = vst [vmem:[#allocation3 + $0x1c8] sm:$0xff] %v941
  %958 = vst [vmem:[#allocation3 + $0x1d0] sm:$0xff] %v942
  %959 = vst [vmem:[#allocation3 + $0x1d8] sm:$0xff] %v943
  %960 = vst [vmem:[#allocation3 + $0x1e0] sm:$0xff] %v944
  %961 = vst [vmem:[#allocation3 + $0x1e8] sm:$0xff] %v945
  %962 = vst [vmem:[#allocation3 + $0x1f0] sm:$0xff] %v946
  %963 = vst [vmem:[#allocation3 + $0x1f8] sm:$0xff] %v947
  %v964 = vld [vmem:[#allocation2] sm:$0xff]
  %v965 = vld [vmem:[#allocation2 + $0x8] sm:$0xff]
  %v966 = vld [vmem:[#allocation2 + $0x10] sm:$0xff]
  %v967 = vld [vmem:[#allocation2 + $0x18] sm:$0xff]
  %v968 = vld [vmem:[#allocation2 + $0x20] sm:$0xff]
  %v969 = vld [vmem:[#allocation2 + $0x28] sm:$0xff]
  %v970 = vld [vmem:[#allocation2 + $0x30] sm:$0xff]
  %v971 = vld [vmem:[#allocation2 + $0x38] sm:$0xff]
  %v972 = vld [vmem:[#allocation2 + $0x40] sm:$0xff]
  %v973 = vld [vmem:[%s1 + $0x200] sm:$0xff]
  %v974 = vld [vmem:[%s1 + $0x208] sm:$0xff]
  %v975 = vld [vmem:[%s1 + $0x210] sm:$0xff]
  %v976 = vld [vmem:[%s1 + $0x218] sm:$0xff]
  %v977 = vld [vmem:[%s1 + $0x220] sm:$0xff]
  %v978 = vld [vmem:[%s1 + $0x228] sm:$0xff]
  %v979 = vld [vmem:[%s1 + $0x230] sm:$0xff]
  %v980 = vld [vmem:[%s1 + $0x238] sm:$0xff]
  %989 = vrot.lane.b32.xlu0 %v973, 34
  %v990 = vpop.permute.xlu0 %989
  %991 = vrot.lane.b32.xlu0 %v974, 34
  %v992 = vpop.permute.xlu0 %991
  %993 = vrot.lane.b32.xlu0 %v975, 34
  %v994 = vpop.permute.xlu0 %993
  %995 = vrot.lane.b32.xlu0 %v976, 34
  %v996 = vpop.permute.xlu0 %995
  %997 = vrot.lane.b32.xlu0 %v977, 34
  %v998 = vpop.permute.xlu0 %997
  %999 = vrot.lane.b32.xlu0 %v978, 34
  %v1000 = vpop.permute.xlu0 %999
  %1001 = vrot.lane.b32.xlu0 %v979, 34
  %v1002 = vpop.permute.xlu0 %1001
  %1003 = vrot.lane.b32.xlu0 %v980, 34
  %v1004 = vpop.permute.xlu0 %1003
  %vm1005 = vcmask 277504
  %v1006 = vsel %vm1005, %v990, %v992
  %v1007 = vsel %vm1005, %v992, %v994
  %v1008 = vsel %vm1005, %v994, %v996
  %v1009 = vsel %vm1005, %v996, %v998
  %v1010 = vsel %vm1005, %v998, %v1000
  %v1011 = vsel %vm1005, %v1000, %v1002
  %v1012 = vsel %vm1005, %v1002, %v1004
  %v1022 = vmul.f32 %v964, %v990
  %v1023 = vmul.f32 %v965, %v1006
  %v1024 = vmul.f32 %v966, %v1007
  %v1025 = vmul.f32 %v967, %v1008
  %v1026 = vmul.f32 %v968, %v1009
  %v1027 = vmul.f32 %v969, %v1010
  %v1028 = vmul.f32 %v970, %v1011
  %v1029 = vmul.f32 %v971, %v1012
  %v1030 = vmul.f32 %v972, %v1004
  %1040 = vrot.lane.b32.xlu0 %v1022, 94
  %v1041 = vpop.permute.xlu0 %1040
  %1042 = vrot.lane.b32.xlu0 %v1023, 94
  %v1043 = vpop.permute.xlu0 %1042
  %1044 = vrot.lane.b32.xlu0 %v1024, 94
  %v1045 = vpop.permute.xlu0 %1044
  %1046 = vrot.lane.b32.xlu0 %v1025, 94
  %v1047 = vpop.permute.xlu0 %1046
  %1048 = vrot.lane.b32.xlu0 %v1026, 94
  %v1049 = vpop.permute.xlu0 %1048
  %1050 = vrot.lane.b32.xlu0 %v1027, 94
  %v1051 = vpop.permute.xlu0 %1050
  %1052 = vrot.lane.b32.xlu0 %v1028, 94
  %v1053 = vpop.permute.xlu0 %1052
  %1054 = vrot.lane.b32.xlu0 %v1029, 94
  %v1055 = vpop.permute.xlu0 %1054
  %1056 = vrot.lane.b32.xlu0 %v1030, 94
  %v1057 = vpop.permute.xlu0 %1056
  %vm1058 = vcmask 769024
  %v1059 = vsel %vm1058, %v1041, %v1043
  %v1060 = vsel %vm1058, %v1043, %v1045
  %v1061 = vsel %vm1058, %v1045, %v1047
  %v1062 = vsel %vm1058, %v1047, %v1049
  %v1063 = vsel %vm1058, %v1049, %v1051
  %v1064 = vsel %vm1058, %v1051, %v1053
  %v1065 = vsel %vm1058, %v1053, %v1055
  %v1066 = vsel %vm1058, %v1055, %v1057
  %1075 = vst [vmem:[#allocation3 + $0x200] sm:$0xff] %v1059
  %1076 = vst [vmem:[#allocation3 + $0x208] sm:$0xff] %v1060
  %1077 = vst [vmem:[#allocation3 + $0x210] sm:$0xff] %v1061
  %1078 = vst [vmem:[#allocation3 + $0x218] sm:$0xff] %v1062
  %1079 = vst [vmem:[#allocation3 + $0x220] sm:$0xff] %v1063
  %1080 = vst [vmem:[#allocation3 + $0x228] sm:$0xff] %v1064
  %1081 = vst [vmem:[#allocation3 + $0x230] sm:$0xff] %v1065
  %1082 = vst [vmem:[#allocation3 + $0x238] sm:$0xff] %v1066
  %v1083 = vld [vmem:[%s2] sm:$0xff]
  %v1084 = vld [vmem:[#allocation3] sm:$0xff]
  %v1085 = vld [vmem:[#allocation3 + $0x8] sm:$0xff]
  %v1086 = vld [vmem:[#allocation3 + $0x10] sm:$0xff]
  %v1087 = vld [vmem:[#allocation3 + $0x18] sm:$0xff]
  %v1088 = vld [vmem:[#allocation3 + $0x20] sm:$0xff]
  %v1089 = vld [vmem:[#allocation3 + $0x28] sm:$0xff]
  %v1090 = vld [vmem:[#allocation3 + $0x30] sm:$0xff]
  %v1091 = vld [vmem:[#allocation3 + $0x38] sm:$0xff]
  %v1092 = vld [vmem:[#allocation3 + $0x40] sm:$0xff]
  %v1093 = vld [vmem:[#allocation3 + $0x48] sm:$0xff]
  %v1094 = vld [vmem:[#allocation3 + $0x50] sm:$0xff]
  %v1095 = vld [vmem:[#allocation3 + $0x58] sm:$0xff]
  %v1096 = vld [vmem:[#allocation3 + $0x60] sm:$0xff]
  %v1097 = vld [vmem:[#allocation3 + $0x68] sm:$0xff]
  %v1098 = vld [vmem:[#allocation3 + $0x70] sm:$0xff]
  %v1099 = vld [vmem:[#allocation3 + $0x78] sm:$0xff]
  %v1100 = vld [vmem:[#allocation3 + $0x80] sm:$0xff]
  %v1101 = vld [vmem:[#allocation3 + $0x88] sm:$0xff]
  %v1102 = vld [vmem:[#allocation3 + $0x90] sm:$0xff]
  %v1103 = vld [vmem:[#allocation3 + $0x98] sm:$0xff]
  %v1104 = vld [vmem:[#allocation3 + $0xa0] sm:$0xff]
  %v1105 = vld [vmem:[#allocation3 + $0xa8] sm:$0xff]
  %v1106 = vld [vmem:[#allocation3 + $0xb0] sm:$0xff]
  %v1107 = vld [vmem:[#allocation3 + $0xb8] sm:$0xff]
  %v1108 = vld [vmem:[#allocation3 + $0xc0] sm:$0xff]
  %v1109 = vld [vmem:[#allocation3 + $0xc8] sm:$0xff]
  %v1110 = vld [vmem:[#allocation3 + $0xd0] sm:$0xff]
  %v1111 = vld [vmem:[#allocation3 + $0xd8] sm:$0xff]
  %v1112 = vld [vmem:[#allocation3 + $0xe0] sm:$0xff]
  %v1113 = vld [vmem:[#allocation3 + $0xe8] sm:$0xff]
  %v1114 = vld [vmem:[#allocation3 + $0xf0] sm:$0xff]
  %v1115 = vld [vmem:[#allocation3 + $0xf8] sm:$0xff]
  %v1116 = vld [vmem:[#allocation3 + $0x100] sm:$0xff]
  %v1117 = vld [vmem:[#allocation3 + $0x108] sm:$0xff]
  %v1118 = vld [vmem:[#allocation3 + $0x110] sm:$0xff]
  %v1119 = vld [vmem:[#allocation3 + $0x118] sm:$0xff]
  %v1120 = vld [vmem:[#allocation3 + $0x120] sm:$0xff]
  %v1121 = vld [vmem:[#allocation3 + $0x128] sm:$0xff]
  %v1122 = vld [vmem:[#allocation3 + $0x130] sm:$0xff]
  %v1123 = vld [vmem:[#allocation3 + $0x138] sm:$0xff]
  %v1124 = vld [vmem:[#allocation3 + $0x140] sm:$0xff]
  %v1125 = vld [vmem:[#allocation3 + $0x148] sm:$0xff]
  %v1126 = vld [vmem:[#allocation3 + $0x150] sm:$0xff]
  %v1127 = vld [vmem:[#allocation3 + $0x158] sm:$0xff]
  %v1128 = vld [vmem:[#allocation3 + $0x160] sm:$0xff]
  %v1129 = vld [vmem:[#allocation3 + $0x168] sm:$0xff]
  %v1130 = vld [vmem:[#allocation3 + $0x170] sm:$0xff]
  %v1131 = vld [vmem:[#allocation3 + $0x178] sm:$0xff]
  %v1132 = vld [vmem:[#allocation3 + $0x180] sm:$0xff]
  %v1133 = vld [vmem:[#allocation3 + $0x188] sm:$0xff]
  %v1134 = vld [vmem:[#allocation3 + $0x190] sm:$0xff]
  %v1135 = vld [vmem:[#allocation3 + $0x198] sm:$0xff]
  %v1136 = vld [vmem:[#allocation3 + $0x1a0] sm:$0xff]
  %v1137 = vld [vmem:[#allocation3 + $0x1a8] sm:$0xff]
  %v1138 = vld [vmem:[#allocation3 + $0x1b0] sm:$0xff]
  %v1139 = vld [vmem:[#allocation3 + $0x1b8] sm:$0xff]
  %v1140 = vld [vmem:[#allocation3 + $0x1c0] sm:$0xff]
  %v1141 = vld [vmem:[#allocation3 + $0x1c8] sm:$0xff]
  %v1142 = vld [vmem:[#allocation3 + $0x1d0] sm:$0xff]
  %v1143 = vld [vmem:[#allocation3 + $0x1d8] sm:$0xff]
  %v1144 = vld [vmem:[#allocation3 + $0x1e0] sm:$0xff]
  %v1145 = vld [vmem:[#allocation3 + $0x1e8] sm:$0xff]
  %v1146 = vld [vmem:[#allocation3 + $0x1f0] sm:$0xff]
  %v1147 = vld [vmem:[#allocation3 + $0x1f8] sm:$0xff]
  %v1148 = vld [vmem:[#allocation3 + $0x200] sm:$0xff]
  %v1149 = vld [vmem:[#allocation3 + $0x208] sm:$0xff]
  %v1150 = vld [vmem:[#allocation3 + $0x210] sm:$0xff]
  %v1151 = vld [vmem:[#allocation3 + $0x218] sm:$0xff]
  %v1152 = vld [vmem:[#allocation3 + $0x220] sm:$0xff]
  %v1153 = vld [vmem:[#allocation3 + $0x228] sm:$0xff]
  %v1154 = vld [vmem:[#allocation3 + $0x230] sm:$0xff]
  %v1155 = vld [vmem:[#allocation3 + $0x238] sm:$0xff]
  %v1156 = vld [vmem:[%s3] sm:$0xff]
  %1158 = vset.pattern.permute.xlu0 0
  %1159 = vperm.xlu0 %1158, %v1156
  %v1160 = vpop.permute.xlu0 %1159
  %vm1162 = vcmask 588800
  %v1164 = vsel %vm1162, %v1083, 0
  %1166 = vmatprep.subr.mxu0 0.0
  %1167 = vmatpush1.msra.mxu0 0.0
  %1168 = vmatprep.subr.mxu0 0.0
  %1169 = vmatpush1.msra.mxu0 0.0
  %1170 = vmatprep.subr.mxu0 0.0
  %1171 = vmatpush1.msra.mxu0 0.0
  %1172 = vmatprep.subr.mxu0 0.0
  %1173 = vmatpush1.msra.mxu0 0.0
  %1174 = vmatprep.subr.mxu0 0.0
  %1175 = vmatpush1.msra.mxu0 0.0
  %1176 = vmatprep.subr.mxu0 0.0
  %1177 = vmatpush1.msra.mxu0 0.0
  %1178 = vmatprep.subr.mxu0 0.0
  %1179 = vmatpush1.msra.mxu0 0.0
  %1180 = vmatprep.subr.mxu0 %v1149
  %1181 = vmatpush1.msra.mxu0 %v1148
  %1182 = vmatprep.subr.mxu0 %v1141
  %1183 = vmatpush1.msra.mxu0 %v1140
  %1184 = vmatprep.subr.mxu0 %v1133
  %1185 = vmatpush1.msra.mxu0 %v1132
  %1186 = vmatprep.subr.mxu0 %v1125
  %1187 = vmatpush1.msra.mxu0 %v1124
  %1188 = vmatprep.subr.mxu0 %v1117
  %1189 = vmatpush1.msra.mxu0 %v1116
  %1190 = vmatprep.subr.mxu0 %v1109
  %1191 = vmatpush1.msra.mxu0 %v1108
  %1192 = vmatprep.subr.mxu0 %v1101
  %1193 = vmatpush1.msra.mxu0 %v1100
  %1194 = vmatprep.subr.mxu0 %v1093
  %1195 = vmatpush1.msra.mxu0 %v1092
  %1196 = vmatprep.subr.mxu0 %v1085
  %1197 = vmatpush1.msra.mxu0 %v1084
  %1198 = vmatprep.subr.mxu0 0.0
  %1199 = vmatpush2.msra.mxu0 0.0
  %1200 = vmatprep.subr.mxu0 0.0
  %1201 = vmatpush2.msra.mxu0 0.0
  %1202 = vmatprep.subr.mxu0 0.0
  %1203 = vmatpush2.msra.mxu0 0.0
  %1204 = vmatprep.subr.mxu0 0.0
  %1205 = vmatpush2.msra.mxu0 0.0
  %1206 = vmatprep.subr.mxu0 0.0
  %1207 = vmatpush2.msra.mxu0 0.0
  %1208 = vmatprep.subr.mxu0 0.0
  %1209 = vmatpush2.msra.mxu0 0.0
  %1210 = vmatprep.subr.mxu0 0.0
  %1211 = vmatpush2.msra.mxu0 0.0
  %1212 = vmatprep.subr.mxu0 0.0
  %1213 = vmatpush2.msra.mxu0 0.0
  %1214 = vmatprep.subr.mxu0 0.0
  %1215 = vmatpush2.msra.mxu0 0.0
  %1216 = vmatprep.subr.mxu0 0.0
  %1217 = vmatpush2.msra.mxu0 0.0
  %1218 = vmatprep.subr.mxu0 0.0
  %1219 = vmatpush2.msra.mxu0 0.0
  %1220 = vmatprep.subr.mxu0 0.0
  %1221 = vmatpush2.msra.mxu0 0.0
  %1222 = vmatprep.subr.mxu0 0.0
  %1223 = vmatpush2.msra.mxu0 0.0
  %1224 = vmatprep.subr.mxu0 0.0
  %1225 = vmatpush2.msra.mxu0 0.0
  %1226 = vmatprep.subr.mxu0 0.0
  %1227 = vmatpush2.msra.mxu0 0.0
  %1228 = vmatprep.subr.mxu0 0.0
  %1229 = vmatpush2.msra.mxu0 0.0
  %1230 = vmatprep.mubr.f32.mxu0 0.0
  %1231 = vmatmul.mubr.f32.gmra.mxu0 %v1164
  %v1232 = vpop.f32.mrf.mxu0
  %v1233 = vadd.f32 %v1160, %v1232
  %v1234 = vpop.f32.mrf.mxu0
  %v1235 = vadd.f32 %v1160, %v1234
  %1236 = vdwg.mxu0
  %1237 = vmatprep.subr.mxu0 0.0
  %1238 = vmatpush1.msra.mxu0 0.0
  %1239 = vmatprep.subr.mxu0 0.0
  %1240 = vmatpush1.msra.mxu0 0.0
  %1241 = vmatprep.subr.mxu0 0.0
  %1242 = vmatpush1.msra.mxu0 0.0
  %1243 = vmatprep.subr.mxu0 0.0
  %1244 = vmatpush1.msra.mxu0 0.0
  %1245 = vmatprep.subr.mxu0 0.0
  %1246 = vmatpush1.msra.mxu0 0.0
  %1247 = vmatprep.subr.mxu0 0.0
  %1248 = vmatpush1.msra.mxu0 0.0
  %1249 = vmatprep.subr.mxu0 0.0
  %1250 = vmatpush1.msra.mxu0 0.0
  %1251 = vmatprep.subr.mxu0 %v1151
  %1252 = vmatpush1.msra.mxu0 %v1150
  %1253 = vmatprep.subr.mxu0 %v1143
  %1254 = vmatpush1.msra.mxu0 %v1142
  %1255 = vmatprep.subr.mxu0 %v1135
  %1256 = vmatpush1.msra.mxu0 %v1134
  %1257 = vmatprep.subr.mxu0 %v1127
  %1258 = vmatpush1.msra.mxu0 %v1126
  %1259 = vmatprep.subr.mxu0 %v1119
  %1260 = vmatpush1.msra.mxu0 %v1118
  %1261 = vmatprep.subr.mxu0 %v1111
  %1262 = vmatpush1.msra.mxu0 %v1110
  %1263 = vmatprep.subr.mxu0 %v1103
  %1264 = vmatpush1.msra.mxu0 %v1102
  %1265 = vmatprep.subr.mxu0 %v1095
  %1266 = vmatpush1.msra.mxu0 %v1094
  %1267 = vmatprep.subr.mxu0 %v1087
  %1268 = vmatpush1.msra.mxu0 %v1086
  %1269 = vmatprep.subr.mxu0 0.0
  %1270 = vmatpush2.msra.mxu0 0.0
  %1271 = vmatprep.subr.mxu0 0.0
  %1272 = vmatpush2.msra.mxu0 0.0
  %1273 = vmatprep.subr.mxu0 0.0
  %1274 = vmatpush2.msra.mxu0 0.0
  %1275 = vmatprep.subr.mxu0 0.0
  %1276 = vmatpush2.msra.mxu0 0.0
  %1277 = vmatprep.subr.mxu0 0.0
  %1278 = vmatpush2.msra.mxu0 0.0
  %1279 = vmatprep.subr.mxu0 0.0
  %1280 = vmatpush2.msra.mxu0 0.0
  %1281 = vmatprep.subr.mxu0 0.0
  %1282 = vmatpush2.msra.mxu0 0.0
  %1283 = vmatprep.subr.mxu0 0.0
  %1284 = vmatpush2.msra.mxu0 0.0
  %1285 = vmatprep.subr.mxu0 0.0
  %1286 = vmatpush2.msra.mxu0 0.0
  %1287 = vmatprep.subr.mxu0 0.0
  %1288 = vmatpush2.msra.mxu0 0.0
  %1289 = vmatprep.subr.mxu0 0.0
  %1290 = vmatpush2.msra.mxu0 0.0
  %1291 = vmatprep.subr.mxu0 0.0
  %1292 = vmatpush2.msra.mxu0 0.0
  %1293 = vmatprep.subr.mxu0 0.0
  %1294 = vmatpush2.msra.mxu0 0.0
  %1295 = vmatprep.subr.mxu0 0.0
  %1296 = vmatpush2.msra.mxu0 0.0
  %1297 = vmatprep.subr.mxu0 0.0
  %1298 = vmatpush2.msra.mxu0 0.0
  %1299 = vmatprep.subr.mxu0 0.0
  %1300 = vmatpush2.msra.mxu0 0.0
  %1301 = vmatprep.mubr.f32.mxu0 0.0
  %1302 = vmatmul.mubr.f32.gmra.mxu0 %v1164
  %v1303 = vpop.f32.mrf.mxu0
  %v1304 = vadd.f32 %v1160, %v1303
  %v1305 = vpop.f32.mrf.mxu0
  %v1306 = vadd.f32 %v1160, %v1305
  %1307 = vdwg.mxu0
  %1308 = vmatprep.subr.mxu0 0.0
  %1309 = vmatpush1.msra.mxu0 0.0
  %1310 = vmatprep.subr.mxu0 0.0
  %1311 = vmatpush1.msra.mxu0 0.0
  %1312 = vmatprep.subr.mxu0 0.0
  %1313 = vmatpush1.msra.mxu0 0.0
  %1314 = vmatprep.subr.mxu0 0.0
  %1315 = vmatpush1.msra.mxu0 0.0
  %1316 = vmatprep.subr.mxu0 0.0
  %1317 = vmatpush1.msra.mxu0 0.0
  %1318 = vmatprep.subr.mxu0 0.0
  %1319 = vmatpush1.msra.mxu0 0.0
  %1320 = vmatprep.subr.mxu0 0.0
  %1321 = vmatpush1.msra.mxu0 0.0
  %1322 = vmatprep.subr.mxu0 %v1153
  %1323 = vmatpush1.msra.mxu0 %v1152
  %1324 = vmatprep.subr.mxu0 %v1145
  %1325 = vmatpush1.msra.mxu0 %v1144
  %1326 = vmatprep.subr.mxu0 %v1137
  %1327 = vmatpush1.msra.mxu0 %v1136
  %1328 = vmatprep.subr.mxu0 %v1129
  %1329 = vmatpush1.msra.mxu0 %v1128
  %1330 = vmatprep.subr.mxu0 %v1121
  %1331 = vmatpush1.msra.mxu0 %v1120
  %1332 = vmatprep.subr.mxu0 %v1113
  %1333 = vmatpush1.msra.mxu0 %v1112
  %1334 = vmatprep.subr.mxu0 %v1105
  %1335 = vmatpush1.msra.mxu0 %v1104
  %1336 = vmatprep.subr.mxu0 %v1097
  %1337 = vmatpush1.msra.mxu0 %v1096
  %1338 = vmatprep.subr.mxu0 %v1089
  %1339 = vmatpush1.msra.mxu0 %v1088
  %1340 = vmatprep.subr.mxu0 0.0
  %1341 = vmatpush2.msra.mxu0 0.0
  %1342 = vmatprep.subr.mxu0 0.0
  %1343 = vmatpush2.msra.mxu0 0.0
  %1344 = vmatprep.subr.mxu0 0.0
  %1345 = vmatpush2.msra.mxu0 0.0
  %1346 = vmatprep.subr.mxu0 0.0
  %1347 = vmatpush2.msra.mxu0 0.0
  %1348 = vmatprep.subr.mxu0 0.0
  %1349 = vmatpush2.msra.mxu0 0.0
  %1350 = vmatprep.subr.mxu0 0.0
  %1351 = vmatpush2.msra.mxu0 0.0
  %1352 = vmatprep.subr.mxu0 0.0
  %1353 = vmatpush2.msra.mxu0 0.0
  %1354 = vmatprep.subr.mxu0 0.0
  %1355 = vmatpush2.msra.mxu0 0.0
  %1356 = vmatprep.subr.mxu0 0.0
  %1357 = vmatpush2.msra.mxu0 0.0
  %1358 = vmatprep.subr.mxu0 0.0
  %1359 = vmatpush2.msra.mxu0 0.0
  %1360 = vmatprep.subr.mxu0 0.0
  %1361 = vmatpush2.msra.mxu0 0.0
  %1362 = vmatprep.subr.mxu0 0.0
  %1363 = vmatpush2.msra.mxu0 0.0
  %1364 = vmatprep.subr.mxu0 0.0
  %1365 = vmatpush2.msra.mxu0 0.0
  %1366 = vmatprep.subr.mxu0 0.0
  %1367 = vmatpush2.msra.mxu0 0.0
  %1368 = vmatprep.subr.mxu0 0.0
  %1369 = vmatpush2.msra.mxu0 0.0
  %1370 = vmatprep.subr.mxu0 0.0
  %1371 = vmatpush2.msra.mxu0 0.0
  %1372 = vmatprep.mubr.f32.mxu0 0.0
  %1373 = vmatmul.mubr.f32.gmra.mxu0 %v1164
  %v1374 = vpop.f32.mrf.mxu0
  %v1375 = vadd.f32 %v1160, %v1374
  %v1376 = vpop.f32.mrf.mxu0
  %v1377 = vadd.f32 %v1160, %v1376
  %1378 = vdwg.mxu0
  %1379 = vmatprep.subr.mxu0 0.0
  %1380 = vmatpush1.msra.mxu0 0.0
  %1381 = vmatprep.subr.mxu0 0.0
  %1382 = vmatpush1.msra.mxu0 0.0
  %1383 = vmatprep.subr.mxu0 0.0
  %1384 = vmatpush1.msra.mxu0 0.0
  %1385 = vmatprep.subr.mxu0 0.0
  %1386 = vmatpush1.msra.mxu0 0.0
  %1387 = vmatprep.subr.mxu0 0.0
  %1388 = vmatpush1.msra.mxu0 0.0
  %1389 = vmatprep.subr.mxu0 0.0
  %1390 = vmatpush1.msra.mxu0 0.0
  %1391 = vmatprep.subr.mxu0 0.0
  %1392 = vmatpush1.msra.mxu0 0.0
  %1393 = vmatprep.subr.mxu0 %v1155
  %1394 = vmatpush1.msra.mxu0 %v1154
  %1395 = vmatprep.subr.mxu0 %v1147
  %1396 = vmatpush1.msra.mxu0 %v1146
  %1397 = vmatprep.subr.mxu0 %v1139
  %1398 = vmatpush1.msra.mxu0 %v1138
  %1399 = vmatprep.subr.mxu0 %v1131
  %1400 = vmatpush1.msra.mxu0 %v1130
  %1401 = vmatprep.subr.mxu0 %v1123
  %1402 = vmatpush1.msra.mxu0 %v1122
  %1403 = vmatprep.subr.mxu0 %v1115
  %1404 = vmatpush1.msra.mxu0 %v1114
  %1405 = vmatprep.subr.mxu0 %v1107
  %1406 = vmatpush1.msra.mxu0 %v1106
  %1407 = vmatprep.subr.mxu0 %v1099
  %1408 = vmatpush1.msra.mxu0 %v1098
  %1409 = vmatprep.subr.mxu0 %v1091
  %1410 = vmatpush1.msra.mxu0 %v1090
  %1411 = vmatprep.subr.mxu0 0.0
  %1412 = vmatpush2.msra.mxu0 0.0
  %1413 = vmatprep.subr.mxu0 0.0
  %1414 = vmatpush2.msra.mxu0 0.0
  %1415 = vmatprep.subr.mxu0 0.0
  %1416 = vmatpush2.msra.mxu0 0.0
  %1417 = vmatprep.subr.mxu0 0.0
  %1418 = vmatpush2.msra.mxu0 0.0
  %1419 = vmatprep.subr.mxu0 0.0
  %1420 = vmatpush2.msra.mxu0 0.0
  %1421 = vmatprep.subr.mxu0 0.0
  %1422 = vmatpush2.msra.mxu0 0.0
  %1423 = vmatprep.subr.mxu0 0.0
  %1424 = vmatpush2.msra.mxu0 0.0
  %1425 = vmatprep.subr.mxu0 0.0
  %1426 = vmatpush2.msra.mxu0 0.0
  %1427 = vmatprep.subr.mxu0 0.0
  %1428 = vmatpush2.msra.mxu0 0.0
  %1429 = vmatprep.subr.mxu0 0.0
  %1430 = vmatpush2.msra.mxu0 0.0
  %1431 = vmatprep.subr.mxu0 0.0
  %1432 = vmatpush2.msra.mxu0 0.0
  %1433 = vmatprep.subr.mxu0 0.0
  %1434 = vmatpush2.msra.mxu0 0.0
  %1435 = vmatprep.subr.mxu0 0.0
  %1436 = vmatpush2.msra.mxu0 0.0
  %1437 = vmatprep.subr.mxu0 0.0
  %1438 = vmatpush2.msra.mxu0 0.0
  %1439 = vmatprep.subr.mxu0 0.0
  %1440 = vmatpush2.msra.mxu0 0.0
  %1441 = vmatprep.subr.mxu0 0.0
  %1442 = vmatpush2.msra.mxu0 0.0
  %1443 = vmatprep.mubr.f32.mxu0 0.0
  %1444 = vmatmul.mubr.f32.gmra.mxu0 %v1164
  %v1445 = vpop.f32.mrf.mxu0
  %v1446 = vadd.f32 %v1160, %v1445
  %v1447 = vpop.f32.mrf.mxu0
  %v1448 = vadd.f32 %v1160, %v1447
  %1449 = vdwg.mxu0
  %vm1450 = vcmp.ge.f32.partialorder %v1233, 0.0
  %vm1451 = vcmp.ge.f32.partialorder %v1235, 0.0
  %vm1452 = vcmp.ge.f32.partialorder %v1304, 0.0
  %vm1453 = vcmp.ge.f32.partialorder %v1306, 0.0
  %vm1454 = vcmp.ge.f32.partialorder %v1375, 0.0
  %vm1455 = vcmp.ge.f32.partialorder %v1377, 0.0
  %vm1456 = vcmp.ge.f32.partialorder %v1446, 0.0
  %vm1457 = vcmp.ge.f32.partialorder %v1448, 0.0
  %v1458 = vmul.f32 %v1233, 0.1
  %v1459 = vmul.f32 %v1235, 0.1
  %v1460 = vmul.f32 %v1304, 0.1
  %v1461 = vmul.f32 %v1306, 0.1
  %v1462 = vmul.f32 %v1375, 0.1
  %v1463 = vmul.f32 %v1377, 0.1
  %v1464 = vmul.f32 %v1446, 0.1
  %v1465 = vmul.f32 %v1448, 0.1
  %v1466 = vsel %vm1450, %v1233, %v1458
  %v1467 = vsel %vm1451, %v1235, %v1459
  %v1468 = vsel %vm1452, %v1304, %v1460
  %v1469 = vsel %vm1453, %v1306, %v1461
  %v1470 = vsel %vm1454, %v1375, %v1462
  %v1471 = vsel %vm1455, %v1377, %v1463
  %v1472 = vsel %vm1456, %v1446, %v1464
  %v1473 = vsel %vm1457, %v1448, %v1465
  %1474 = vst [vmem:[%s8] sm:$0xff] %v1466
  %1475 = vst [vmem:[%s8 + $0x8] sm:$0xff] %v1467
  %s1476 = scalar_lea.vmem %s8, 16
  %1477 = vst [vmem:[%s1476] sm:$0xff] %v1468
  %1478 = vst [vmem:[%s1476 + $0x8] sm:$0xff] %v1469
  %s1479 = scalar_lea.vmem %s8, 32
  %1480 = vst [vmem:[%s1479] sm:$0xff] %v1470
  %1481 = vst [vmem:[%s1479 + $0x8] sm:$0xff] %v1471
  %s1482 = scalar_lea.vmem %s8, 48
  %1483 = vst [vmem:[%s1482] sm:$0xff] %v1472
  %1484 = vst [vmem:[%s1482 + $0x8] sm:$0xff] %v1473
  %1493 = vrot.lane.b32.xlu0 %v1466, 17
  %v1494 = vpop.permute.xlu0 %1493
  %1495 = vrot.lane.b32.xlu0 %v1467, 17
  %v1496 = vpop.permute.xlu0 %1495
  %1497 = vrot.lane.b32.xlu0 %v1468, 17
  %v1498 = vpop.permute.xlu0 %1497
  %1499 = vrot.lane.b32.xlu0 %v1469, 17
  %v1500 = vpop.permute.xlu0 %1499
  %1501 = vrot.lane.b32.xlu0 %v1470, 17
  %v1502 = vpop.permute.xlu0 %1501
  %1503 = vrot.lane.b32.xlu0 %v1471, 17
  %v1504 = vpop.permute.xlu0 %1503
  %1505 = vrot.lane.b32.xlu0 %v1472, 17
  %v1506 = vpop.permute.xlu0 %1505
  %1507 = vrot.lane.b32.xlu0 %v1473, 17
  %v1508 = vpop.permute.xlu0 %1507
  %v1509 = vsel %vm32, %v1494, %v1496
  %v1510 = vsel %vm32, %v1496, %v1498
  %v1511 = vsel %vm32, %v1498, %v1500
  %v1512 = vsel %vm32, %v1500, %v1502
  %v1513 = vsel %vm32, %v1502, %v1504
  %v1514 = vsel %vm32, %v1504, %v1506
  %v1515 = vsel %vm32, %v1506, %v1508
  %1525 = vst.msk [vmem:[#allocation2] sm:$0xff] %vm48, %v1494
  %1526 = vst [vmem:[#allocation2 + $0x8] sm:$0xff] %v1509
  %1527 = vst [vmem:[#allocation2 + $0x10] sm:$0xff] %v1510
  %1528 = vst [vmem:[#allocation2 + $0x18] sm:$0xff] %v1511
  %1529 = vst [vmem:[#allocation2 + $0x20] sm:$0xff] %v1512
  %1530 = vst [vmem:[#allocation2 + $0x28] sm:$0xff] %v1513
  %1531 = vst [vmem:[#allocation2 + $0x30] sm:$0xff] %v1514
  %1532 = vst [vmem:[#allocation2 + $0x38] sm:$0xff] %v1515
  %1533 = vst.msk [vmem:[#allocation2 + $0x40] sm:$0xff] %vm32, %v1508
  %v1534 = vld [vmem:[#allocation2] sm:$0xff]
  %v1535 = vld [vmem:[#allocation2 + $0x8] sm:$0xff]
  %v1536 = vld [vmem:[#allocation2 + $0x10] sm:$0xff]
  %v1537 = vld [vmem:[#allocation2 + $0x18] sm:$0xff]
  %v1538 = vld [vmem:[#allocation2 + $0x20] sm:$0xff]
  %v1539 = vld [vmem:[#allocation2 + $0x28] sm:$0xff]
  %v1540 = vld [vmem:[#allocation2 + $0x30] sm:$0xff]
  %v1541 = vld [vmem:[#allocation2 + $0x38] sm:$0xff]
  %v1542 = vld [vmem:[%s1] sm:$0xff]
  %v1543 = vld [vmem:[%s1 + $0x8] sm:$0xff]
  %v1544 = vld [vmem:[%s1 + $0x10] sm:$0xff]
  %v1545 = vld [vmem:[%s1 + $0x18] sm:$0xff]
  %v1546 = vld [vmem:[%s1 + $0x20] sm:$0xff]
  %v1547 = vld [vmem:[%s1 + $0x28] sm:$0xff]
  %v1548 = vld [vmem:[%s1 + $0x30] sm:$0xff]
  %v1549 = vld [vmem:[%s1 + $0x38] sm:$0xff]
  %v1550 = vmul.f32 %v1534, %v1542
  %v1551 = vmul.f32 %v1535, %v1543
  %v1552 = vmul.f32 %v1536, %v1544
  %v1553 = vmul.f32 %v1537, %v1545
  %v1554 = vmul.f32 %v1538, %v1546
  %v1555 = vmul.f32 %v1539, %v1547
  %v1556 = vmul.f32 %v1540, %v1548
  %v1557 = vmul.f32 %v1541, %v1549
  %1558 = vst [vmem:[#allocation3] sm:$0xff] %v1550
  %1559 = vst [vmem:[#allocation3 + $0x8] sm:$0xff] %v1551
  %1560 = vst [vmem:[#allocation3 + $0x10] sm:$0xff] %v1552
  %1561 = vst [vmem:[#allocation3 + $0x18] sm:$0xff] %v1553
  %1562 = vst [vmem:[#allocation3 + $0x20] sm:$0xff] %v1554
  %1563 = vst [vmem:[#allocation3 + $0x28] sm:$0xff] %v1555
  %1564 = vst [vmem:[#allocation3 + $0x30] sm:$0xff] %v1556
  %1565 = vst [vmem:[#allocation3 + $0x38] sm:$0xff] %v1557
  %v1566 = vld [vmem:[#allocation2] sm:$0xff]
  %v1567 = vld [vmem:[#allocation2 + $0x8] sm:$0xff]
  %v1568 = vld [vmem:[#allocation2 + $0x10] sm:$0xff]
  %v1569 = vld [vmem:[#allocation2 + $0x18] sm:$0xff]
  %v1570 = vld [vmem:[#allocation2 + $0x20] sm:$0xff]
  %v1571 = vld [vmem:[#allocation2 + $0x28] sm:$0xff]
  %v1572 = vld [vmem:[#allocation2 + $0x30] sm:$0xff]
  %v1573 = vld [vmem:[#allocation2 + $0x38] sm:$0xff]
  %v1574 = vld [vmem:[#allocation2 + $0x40] sm:$0xff]
  %v1575 = vld [vmem:[%s1 + $0x40] sm:$0xff]
  %v1576 = vld [vmem:[%s1 + $0x48] sm:$0xff]
  %v1577 = vld [vmem:[%s1 + $0x50] sm:$0xff]
  %v1578 = vld [vmem:[%s1 + $0x58] sm:$0xff]
  %v1579 = vld [vmem:[%s1 + $0x60] sm:$0xff]
  %v1580 = vld [vmem:[%s1 + $0x68] sm:$0xff]
  %v1581 = vld [vmem:[%s1 + $0x70] sm:$0xff]
  %v1582 = vld [vmem:[%s1 + $0x78] sm:$0xff]
  %1591 = vrot.lane.b32.xlu0 %v1575, 1
  %v1592 = vpop.permute.xlu0 %1591
  %1593 = vrot.lane.b32.xlu0 %v1576, 1
  %v1594 = vpop.permute.xlu0 %1593
  %1595 = vrot.lane.b32.xlu0 %v1577, 1
  %v1596 = vpop.permute.xlu0 %1595
  %1597 = vrot.lane.b32.xlu0 %v1578, 1
  %v1598 = vpop.permute.xlu0 %1597
  %1599 = vrot.lane.b32.xlu0 %v1579, 1
  %v1600 = vpop.permute.xlu0 %1599
  %1601 = vrot.lane.b32.xlu0 %v1580, 1
  %v1602 = vpop.permute.xlu0 %1601
  %1603 = vrot.lane.b32.xlu0 %v1581, 1
  %v1604 = vpop.permute.xlu0 %1603
  %1605 = vrot.lane.b32.xlu0 %v1582, 1
  %v1606 = vpop.permute.xlu0 %1605
  %v1607 = vsel %vm173, %v1592, %v1594
  %v1608 = vsel %vm173, %v1594, %v1596
  %v1609 = vsel %vm173, %v1596, %v1598
  %v1610 = vsel %vm173, %v1598, %v1600
  %v1611 = vsel %vm173, %v1600, %v1602
  %v1612 = vsel %vm173, %v1602, %v1604
  %v1613 = vsel %vm173, %v1604, %v1606
  %v1623 = vmul.f32 %v1566, %v1592
  %v1624 = vmul.f32 %v1567, %v1607
  %v1625 = vmul.f32 %v1568, %v1608
  %v1626 = vmul.f32 %v1569, %v1609
  %v1627 = vmul.f32 %v1570, %v1610
  %v1628 = vmul.f32 %v1571, %v1611
  %v1629 = vmul.f32 %v1572, %v1612
  %v1630 = vmul.f32 %v1573, %v1613
  %v1631 = vmul.f32 %v1574, %v1606
  %1641 = vrot.lane.b32.xlu0 %v1623, 127
  %v1642 = vpop.permute.xlu0 %1641
  %1643 = vrot.lane.b32.xlu0 %v1624, 127
  %v1644 = vpop.permute.xlu0 %1643
  %1645 = vrot.lane.b32.xlu0 %v1625, 127
  %v1646 = vpop.permute.xlu0 %1645
  %1647 = vrot.lane.b32.xlu0 %v1626, 127
  %v1648 = vpop.permute.xlu0 %1647
  %1649 = vrot.lane.b32.xlu0 %v1627, 127
  %v1650 = vpop.permute.xlu0 %1649
  %1651 = vrot.lane.b32.xlu0 %v1628, 127
  %v1652 = vpop.permute.xlu0 %1651
  %1653 = vrot.lane.b32.xlu0 %v1629, 127
  %v1654 = vpop.permute.xlu0 %1653
  %1655 = vrot.lane.b32.xlu0 %v1630, 127
  %v1656 = vpop.permute.xlu0 %1655
  %1657 = vrot.lane.b32.xlu0 %v1631, 127
  %v1658 = vpop.permute.xlu0 %1657
  %v1659 = vsel %vm226, %v1642, %v1644
  %v1660 = vsel %vm226, %v1644, %v1646
  %v1661 = vsel %vm226, %v1646, %v1648
  %v1662 = vsel %vm226, %v1648, %v1650
  %v1663 = vsel %vm226, %v1650, %v1652
  %v1664 = vsel %vm226, %v1652, %v1654
  %v1665 = vsel %vm226, %v1654, %v1656
  %v1666 = vsel %vm226, %v1656, %v1658
  %1675 = vst [vmem:[#allocation3 + $0x40] sm:$0xff] %v1659
  %1676 = vst [vmem:[#allocation3 + $0x48] sm:$0xff] %v1660
  %1677 = vst [vmem:[#allocation3 + $0x50] sm:$0xff] %v1661
  %1678 = vst [vmem:[#allocation3 + $0x58] sm:$0xff] %v1662
  %1679 = vst [vmem:[#allocation3 + $0x60] sm:$0xff] %v1663
  %1680 = vst [vmem:[#allocation3 + $0x68] sm:$0xff] %v1664
  %1681 = vst [vmem:[#allocation3 + $0x70] sm:$0xff] %v1665
  %1682 = vst [vmem:[#allocation3 + $0x78] sm:$0xff] %v1666
  %v1683 = vld [vmem:[#allocation2] sm:$0xff]
  %v1684 = vld [vmem:[#allocation2 + $0x8] sm:$0xff]
  %v1685 = vld [vmem:[#allocation2 + $0x10] sm:$0xff]
  %v1686 = vld [vmem:[#allocation2 + $0x18] sm:$0xff]
  %v1687 = vld [vmem:[#allocation2 + $0x20] sm:$0xff]
  %v1688 = vld [vmem:[#allocation2 + $0x28] sm:$0xff]
  %v1689 = vld [vmem:[#allocation2 + $0x30] sm:$0xff]
  %v1690 = vld [vmem:[#allocation2 + $0x38] sm:$0xff]
  %v1691 = vld [vmem:[#allocation2 + $0x40] sm:$0xff]
  %v1692 = vld [vmem:[%s1 + $0x80] sm:$0xff]
  %v1693 = vld [vmem:[%s1 + $0x88] sm:$0xff]
  %v1694 = vld [vmem:[%s1 + $0x90] sm:$0xff]
  %v1695 = vld [vmem:[%s1 + $0x98] sm:$0xff]
  %v1696 = vld [vmem:[%s1 + $0xa0] sm:$0xff]
  %v1697 = vld [vmem:[%s1 + $0xa8] sm:$0xff]
  %v1698 = vld [vmem:[%s1 + $0xb0] sm:$0xff]
  %v1699 = vld [vmem:[%s1 + $0xb8] sm:$0xff]
  %1708 = vrot.lane.b32.xlu0 %v1692, 2
  %v1709 = vpop.permute.xlu0 %1708
  %1710 = vrot.lane.b32.xlu0 %v1693, 2
  %v1711 = vpop.permute.xlu0 %1710
  %1712 = vrot.lane.b32.xlu0 %v1694, 2
  %v1713 = vpop.permute.xlu0 %1712
  %1714 = vrot.lane.b32.xlu0 %v1695, 2
  %v1715 = vpop.permute.xlu0 %1714
  %1716 = vrot.lane.b32.xlu0 %v1696, 2
  %v1717 = vpop.permute.xlu0 %1716
  %1718 = vrot.lane.b32.xlu0 %v1697, 2
  %v1719 = vpop.permute.xlu0 %1718
  %1720 = vrot.lane.b32.xlu0 %v1698, 2
  %v1721 = vpop.permute.xlu0 %1720
  %1722 = vrot.lane.b32.xlu0 %v1699, 2
  %v1723 = vpop.permute.xlu0 %1722
  %v1724 = vsel %vm292, %v1709, %v1711
  %v1725 = vsel %vm292, %v1711, %v1713
  %v1726 = vsel %vm292, %v1713, %v1715
  %v1727 = vsel %vm292, %v1715, %v1717
  %v1728 = vsel %vm292, %v1717, %v1719
  %v1729 = vsel %vm292, %v1719, %v1721
  %v1730 = vsel %vm292, %v1721, %v1723
  %v1740 = vmul.f32 %v1683, %v1709
  %v1741 = vmul.f32 %v1684, %v1724
  %v1742 = vmul.f32 %v1685, %v1725
  %v1743 = vmul.f32 %v1686, %v1726
  %v1744 = vmul.f32 %v1687, %v1727
  %v1745 = vmul.f32 %v1688, %v1728
  %v1746 = vmul.f32 %v1689, %v1729
  %v1747 = vmul.f32 %v1690, %v1730
  %v1748 = vmul.f32 %v1691, %v1723
  %1758 = vrot.lane.b32.xlu0 %v1740, 126
  %v1759 = vpop.permute.xlu0 %1758
  %1760 = vrot.lane.b32.xlu0 %v1741, 126
  %v1761 = vpop.permute.xlu0 %1760
  %1762 = vrot.lane.b32.xlu0 %v1742, 126
  %v1763 = vpop.permute.xlu0 %1762
  %1764 = vrot.lane.b32.xlu0 %v1743, 126
  %v1765 = vpop.permute.xlu0 %1764
  %1766 = vrot.lane.b32.xlu0 %v1744, 126
  %v1767 = vpop.permute.xlu0 %1766
  %1768 = vrot.lane.b32.xlu0 %v1745, 126
  %v1769 = vpop.permute.xlu0 %1768
  %1770 = vrot.lane.b32.xlu0 %v1746, 126
  %v1771 = vpop.permute.xlu0 %1770
  %1772 = vrot.lane.b32.xlu0 %v1747, 126
  %v1773 = vpop.permute.xlu0 %1772
  %1774 = vrot.lane.b32.xlu0 %v1748, 126
  %v1775 = vpop.permute.xlu0 %1774
  %v1776 = vsel %vm345, %v1759, %v1761
  %v1777 = vsel %vm345, %v1761, %v1763
  %v1778 = vsel %vm345, %v1763, %v1765
  %v1779 = vsel %vm345, %v1765, %v1767
  %v1780 = vsel %vm345, %v1767, %v1769
  %v1781 = vsel %vm345, %v1769, %v1771
  %v1782 = vsel %vm345, %v1771, %v1773
  %v1783 = vsel %vm345, %v1773, %v1775
  %1792 = vst [vmem:[#allocation3 + $0x80] sm:$0xff] %v1776
  %1793 = vst [vmem:[#allocation3 + $0x88] sm:$0xff] %v1777
  %1794 = vst [vmem:[#allocation3 + $0x90] sm:$0xff] %v1778
  %1795 = vst [vmem:[#allocation3 + $0x98] sm:$0xff] %v1779
  %1796 = vst [vmem:[#allocation3 + $0xa0] sm:$0xff] %v1780
  %1797 = vst [vmem:[#allocation3 + $0xa8] sm:$0xff] %v1781
  %1798 = vst [vmem:[#allocation3 + $0xb0] sm:$0xff] %v1782
  %1799 = vst [vmem:[#allocation3 + $0xb8] sm:$0xff] %v1783
  %v1800 = vld [vmem:[#allocation2] sm:$0xff]
  %v1801 = vld [vmem:[#allocation2 + $0x8] sm:$0xff]
  %v1802 = vld [vmem:[#allocation2 + $0x10] sm:$0xff]
  %v1803 = vld [vmem:[#allocation2 + $0x18] sm:$0xff]
  %v1804 = vld [vmem:[#allocation2 + $0x20] sm:$0xff]
  %v1805 = vld [vmem:[#allocation2 + $0x28] sm:$0xff]
  %v1806 = vld [vmem:[#allocation2 + $0x30] sm:$0xff]
  %v1807 = vld [vmem:[#allocation2 + $0x38] sm:$0xff]
  %v1808 = vld [vmem:[#allocation2 + $0x40] sm:$0xff]
  %v1809 = vld [vmem:[%s1 + $0xc0] sm:$0xff]
  %v1810 = vld [vmem:[%s1 + $0xc8] sm:$0xff]
  %v1811 = vld [vmem:[%s1 + $0xd0] sm:$0xff]
  %v1812 = vld [vmem:[%s1 + $0xd8] sm:$0xff]
  %v1813 = vld [vmem:[%s1 + $0xe0] sm:$0xff]
  %v1814 = vld [vmem:[%s1 + $0xe8] sm:$0xff]
  %v1815 = vld [vmem:[%s1 + $0xf0] sm:$0xff]
  %v1816 = vld [vmem:[%s1 + $0xf8] sm:$0xff]
  %1825 = vrot.lane.b32.xlu0 %v1809, 16
  %v1826 = vpop.permute.xlu0 %1825
  %1827 = vrot.lane.b32.xlu0 %v1810, 16
  %v1828 = vpop.permute.xlu0 %1827
  %1829 = vrot.lane.b32.xlu0 %v1811, 16
  %v1830 = vpop.permute.xlu0 %1829
  %1831 = vrot.lane.b32.xlu0 %v1812, 16
  %v1832 = vpop.permute.xlu0 %1831
  %1833 = vrot.lane.b32.xlu0 %v1813, 16
  %v1834 = vpop.permute.xlu0 %1833
  %1835 = vrot.lane.b32.xlu0 %v1814, 16
  %v1836 = vpop.permute.xlu0 %1835
  %1837 = vrot.lane.b32.xlu0 %v1815, 16
  %v1838 = vpop.permute.xlu0 %1837
  %1839 = vrot.lane.b32.xlu0 %v1816, 16
  %v1840 = vpop.permute.xlu0 %1839
  %v1841 = vsel %vm411, %v1826, %v1828
  %v1842 = vsel %vm411, %v1828, %v1830
  %v1843 = vsel %vm411, %v1830, %v1832
  %v1844 = vsel %vm411, %v1832, %v1834
  %v1845 = vsel %vm411, %v1834, %v1836
  %v1846 = vsel %vm411, %v1836, %v1838
  %v1847 = vsel %vm411, %v1838, %v1840
  %v1857 = vmul.f32 %v1800, %v1826
  %v1858 = vmul.f32 %v1801, %v1841
  %v1859 = vmul.f32 %v1802, %v1842
  %v1860 = vmul.f32 %v1803, %v1843
  %v1861 = vmul.f32 %v1804, %v1844
  %v1862 = vmul.f32 %v1805, %v1845
  %v1863 = vmul.f32 %v1806, %v1846
  %v1864 = vmul.f32 %v1807, %v1847
  %v1865 = vmul.f32 %v1808, %v1840
  %1875 = vrot.lane.b32.xlu0 %v1857, 112
  %v1876 = vpop.permute.xlu0 %1875
  %1877 = vrot.lane.b32.xlu0 %v1858, 112
  %v1878 = vpop.permute.xlu0 %1877
  %1879 = vrot.lane.b32.xlu0 %v1859, 112
  %v1880 = vpop.permute.xlu0 %1879
  %1881 = vrot.lane.b32.xlu0 %v1860, 112
  %v1882 = vpop.permute.xlu0 %1881
  %1883 = vrot.lane.b32.xlu0 %v1861, 112
  %v1884 = vpop.permute.xlu0 %1883
  %1885 = vrot.lane.b32.xlu0 %v1862, 112
  %v1886 = vpop.permute.xlu0 %1885
  %1887 = vrot.lane.b32.xlu0 %v1863, 112
  %v1888 = vpop.permute.xlu0 %1887
  %1889 = vrot.lane.b32.xlu0 %v1864, 112
  %v1890 = vpop.permute.xlu0 %1889
  %1891 = vrot.lane.b32.xlu0 %v1865, 112
  %v1892 = vpop.permute.xlu0 %1891
  %v1893 = vsel %vm464, %v1876, %v1878
  %v1894 = vsel %vm464, %v1878, %v1880
  %v1895 = vsel %vm464, %v1880, %v1882
  %v1896 = vsel %vm464, %v1882, %v1884
  %v1897 = vsel %vm464, %v1884, %v1886
  %v1898 = vsel %vm464, %v1886, %v1888
  %v1899 = vsel %vm464, %v1888, %v1890
  %v1900 = vsel %vm464, %v1890, %v1892
  %1909 = vst [vmem:[#allocation3 + $0xc0] sm:$0xff] %v1893
  %1910 = vst [vmem:[#allocation3 + $0xc8] sm:$0xff] %v1894
  %1911 = vst [vmem:[#allocation3 + $0xd0] sm:$0xff] %v1895
  %1912 = vst [vmem:[#allocation3 + $0xd8] sm:$0xff] %v1896
  %1913 = vst [vmem:[#allocation3 + $0xe0] sm:$0xff] %v1897
  %1914 = vst [vmem:[#allocation3 + $0xe8] sm:$0xff] %v1898
  %1915 = vst [vmem:[#allocation3 + $0xf0] sm:$0xff] %v1899
  %1916 = vst [vmem:[#allocation3 + $0xf8] sm:$0xff] %v1900
  %v1917 = vld [vmem:[#allocation2] sm:$0xff]
  %v1918 = vld [vmem:[#allocation2 + $0x8] sm:$0xff]
  %v1919 = vld [vmem:[#allocation2 + $0x10] sm:$0xff]
  %v1920 = vld [vmem:[#allocation2 + $0x18] sm:$0xff]
  %v1921 = vld [vmem:[#allocation2 + $0x20] sm:$0xff]
  %v1922 = vld [vmem:[#allocation2 + $0x28] sm:$0xff]
  %v1923 = vld [vmem:[#allocation2 + $0x30] sm:$0xff]
  %v1924 = vld [vmem:[#allocation2 + $0x38] sm:$0xff]
  %v1925 = vld [vmem:[#allocation2 + $0x40] sm:$0xff]
  %v1926 = vld [vmem:[%s1 + $0x100] sm:$0xff]
  %v1927 = vld [vmem:[%s1 + $0x108] sm:$0xff]
  %v1928 = vld [vmem:[%s1 + $0x110] sm:$0xff]
  %v1929 = vld [vmem:[%s1 + $0x118] sm:$0xff]
  %v1930 = vld [vmem:[%s1 + $0x120] sm:$0xff]
  %v1931 = vld [vmem:[%s1 + $0x128] sm:$0xff]
  %v1932 = vld [vmem:[%s1 + $0x130] sm:$0xff]
  %v1933 = vld [vmem:[%s1 + $0x138] sm:$0xff]
  %1942 = vrot.lane.b32.xlu0 %v1926, 17
  %v1943 = vpop.permute.xlu0 %1942
  %1944 = vrot.lane.b32.xlu0 %v1927, 17
  %v1945 = vpop.permute.xlu0 %1944
  %1946 = vrot.lane.b32.xlu0 %v1928, 17
  %v1947 = vpop.permute.xlu0 %1946
  %1948 = vrot.lane.b32.xlu0 %v1929, 17
  %v1949 = vpop.permute.xlu0 %1948
  %1950 = vrot.lane.b32.xlu0 %v1930, 17
  %v1951 = vpop.permute.xlu0 %1950
  %1952 = vrot.lane.b32.xlu0 %v1931, 17
  %v1953 = vpop.permute.xlu0 %1952
  %1954 = vrot.lane.b32.xlu0 %v1932, 17
  %v1955 = vpop.permute.xlu0 %1954
  %1956 = vrot.lane.b32.xlu0 %v1933, 17
  %v1957 = vpop.permute.xlu0 %1956
  %v1958 = vsel %vm32, %v1943, %v1945
  %v1959 = vsel %vm32, %v1945, %v1947
  %v1960 = vsel %vm32, %v1947, %v1949
  %v1961 = vsel %vm32, %v1949, %v1951
  %v1962 = vsel %vm32, %v1951, %v1953
  %v1963 = vsel %vm32, %v1953, %v1955
  %v1964 = vsel %vm32, %v1955, %v1957
  %v1974 = vmul.f32 %v1917, %v1943
  %v1975 = vmul.f32 %v1918, %v1958
  %v1976 = vmul.f32 %v1919, %v1959
  %v1977 = vmul.f32 %v1920, %v1960
  %v1978 = vmul.f32 %v1921, %v1961
  %v1979 = vmul.f32 %v1922, %v1962
  %v1980 = vmul.f32 %v1923, %v1963
  %v1981 = vmul.f32 %v1924, %v1964
  %v1982 = vmul.f32 %v1925, %v1957
  %1992 = vrot.lane.b32.xlu0 %v1974, 111
  %v1993 = vpop.permute.xlu0 %1992
  %1994 = vrot.lane.b32.xlu0 %v1975, 111
  %v1995 = vpop.permute.xlu0 %1994
  %1996 = vrot.lane.b32.xlu0 %v1976, 111
  %v1997 = vpop.permute.xlu0 %1996
  %1998 = vrot.lane.b32.xlu0 %v1977, 111
  %v1999 = vpop.permute.xlu0 %1998
  %2000 = vrot.lane.b32.xlu0 %v1978, 111
  %v2001 = vpop.permute.xlu0 %2000
  %2002 = vrot.lane.b32.xlu0 %v1979, 111
  %v2003 = vpop.permute.xlu0 %2002
  %2004 = vrot.lane.b32.xlu0 %v1980, 111
  %v2005 = vpop.permute.xlu0 %2004
  %2006 = vrot.lane.b32.xlu0 %v1981, 111
  %v2007 = vpop.permute.xlu0 %2006
  %2008 = vrot.lane.b32.xlu0 %v1982, 111
  %v2009 = vpop.permute.xlu0 %2008
  %v2010 = vsel %vm582, %v1993, %v1995
  %v2011 = vsel %vm582, %v1995, %v1997
  %v2012 = vsel %vm582, %v1997, %v1999
  %v2013 = vsel %vm582, %v1999, %v2001
  %v2014 = vsel %vm582, %v2001, %v2003
  %v2015 = vsel %vm582, %v2003, %v2005
  %v2016 = vsel %vm582, %v2005, %v2007
  %v2017 = vsel %vm582, %v2007, %v2009
  %2026 = vst [vmem:[#allocation3 + $0x100] sm:$0xff] %v2010
  %2027 = vst [vmem:[#allocation3 + $0x108] sm:$0xff] %v2011
  %2028 = vst [vmem:[#allocation3 + $0x110] sm:$0xff] %v2012
  %2029 = vst [vmem:[#allocation3 + $0x118] sm:$0xff] %v2013
  %2030 = vst [vmem:[#allocation3 + $0x120] sm:$0xff] %v2014
  %2031 = vst [vmem:[#allocation3 + $0x128] sm:$0xff] %v2015
  %2032 = vst [vmem:[#allocation3 + $0x130] sm:$0xff] %v2016
  %2033 = vst [vmem:[#allocation3 + $0x138] sm:$0xff] %v2017
  %v2034 = vld [vmem:[#allocation2] sm:$0xff]
  %v2035 = vld [vmem:[#allocation2 + $0x8] sm:$0xff]
  %v2036 = vld [vmem:[#allocation2 + $0x10] sm:$0xff]
  %v2037 = vld [vmem:[#allocation2 + $0x18] sm:$0xff]
  %v2038 = vld [vmem:[#allocation2 + $0x20] sm:$0xff]
  %v2039 = vld [vmem:[#allocation2 + $0x28] sm:$0xff]
  %v2040 = vld [vmem:[#allocation2 + $0x30] sm:$0xff]
  %v2041 = vld [vmem:[#allocation2 + $0x38] sm:$0xff]
  %v2042 = vld [vmem:[#allocation2 + $0x40] sm:$0xff]
  %v2043 = vld [vmem:[%s1 + $0x140] sm:$0xff]
  %v2044 = vld [vmem:[%s1 + $0x148] sm:$0xff]
  %v2045 = vld [vmem:[%s1 + $0x150] sm:$0xff]
  %v2046 = vld [vmem:[%s1 + $0x158] sm:$0xff]
  %v2047 = vld [vmem:[%s1 + $0x160] sm:$0xff]
  %v2048 = vld [vmem:[%s1 + $0x168] sm:$0xff]
  %v2049 = vld [vmem:[%s1 + $0x170] sm:$0xff]
  %v2050 = vld [vmem:[%s1 + $0x178] sm:$0xff]
  %2059 = vrot.lane.b32.xlu0 %v2043, 18
  %v2060 = vpop.permute.xlu0 %2059
  %2061 = vrot.lane.b32.xlu0 %v2044, 18
  %v2062 = vpop.permute.xlu0 %2061
  %2063 = vrot.lane.b32.xlu0 %v2045, 18
  %v2064 = vpop.permute.xlu0 %2063
  %2065 = vrot.lane.b32.xlu0 %v2046, 18
  %v2066 = vpop.permute.xlu0 %2065
  %2067 = vrot.lane.b32.xlu0 %v2047, 18
  %v2068 = vpop.permute.xlu0 %2067
  %2069 = vrot.lane.b32.xlu0 %v2048, 18
  %v2070 = vpop.permute.xlu0 %2069
  %2071 = vrot.lane.b32.xlu0 %v2049, 18
  %v2072 = vpop.permute.xlu0 %2071
  %2073 = vrot.lane.b32.xlu0 %v2050, 18
  %v2074 = vpop.permute.xlu0 %2073
  %v2075 = vsel %vm648, %v2060, %v2062
  %v2076 = vsel %vm648, %v2062, %v2064
  %v2077 = vsel %vm648, %v2064, %v2066
  %v2078 = vsel %vm648, %v2066, %v2068
  %v2079 = vsel %vm648, %v2068, %v2070
  %v2080 = vsel %vm648, %v2070, %v2072
  %v2081 = vsel %vm648, %v2072, %v2074
  %v2091 = vmul.f32 %v2034, %v2060
  %v2092 = vmul.f32 %v2035, %v2075
  %v2093 = vmul.f32 %v2036, %v2076
  %v2094 = vmul.f32 %v2037, %v2077
  %v2095 = vmul.f32 %v2038, %v2078
  %v2096 = vmul.f32 %v2039, %v2079
  %v2097 = vmul.f32 %v2040, %v2080
  %v2098 = vmul.f32 %v2041, %v2081
  %v2099 = vmul.f32 %v2042, %v2074
  %2109 = vrot.lane.b32.xlu0 %v2091, 110
  %v2110 = vpop.permute.xlu0 %2109
  %2111 = vrot.lane.b32.xlu0 %v2092, 110
  %v2112 = vpop.permute.xlu0 %2111
  %2113 = vrot.lane.b32.xlu0 %v2093, 110
  %v2114 = vpop.permute.xlu0 %2113
  %2115 = vrot.lane.b32.xlu0 %v2094, 110
  %v2116 = vpop.permute.xlu0 %2115
  %2117 = vrot.lane.b32.xlu0 %v2095, 110
  %v2118 = vpop.permute.xlu0 %2117
  %2119 = vrot.lane.b32.xlu0 %v2096, 110
  %v2120 = vpop.permute.xlu0 %2119
  %2121 = vrot.lane.b32.xlu0 %v2097, 110
  %v2122 = vpop.permute.xlu0 %2121
  %2123 = vrot.lane.b32.xlu0 %v2098, 110
  %v2124 = vpop.permute.xlu0 %2123
  %2125 = vrot.lane.b32.xlu0 %v2099, 110
  %v2126 = vpop.permute.xlu0 %2125
  %v2127 = vsel %vm701, %v2110, %v2112
  %v2128 = vsel %vm701, %v2112, %v2114
  %v2129 = vsel %vm701, %v2114, %v2116
  %v2130 = vsel %vm701, %v2116, %v2118
  %v2131 = vsel %vm701, %v2118, %v2120
  %v2132 = vsel %vm701, %v2120, %v2122
  %v2133 = vsel %vm701, %v2122, %v2124
  %v2134 = vsel %vm701, %v2124, %v2126
  %2143 = vst [vmem:[#allocation3 + $0x140] sm:$0xff] %v2127
  %2144 = vst [vmem:[#allocation3 + $0x148] sm:$0xff] %v2128
  %2145 = vst [vmem:[#allocation3 + $0x150] sm:$0xff] %v2129
  %2146 = vst [vmem:[#allocation3 + $0x158] sm:$0xff] %v2130
  %2147 = vst [vmem:[#allocation3 + $0x160] sm:$0xff] %v2131
  %2148 = vst [vmem:[#allocation3 + $0x168] sm:$0xff] %v2132
  %2149 = vst [vmem:[#allocation3 + $0x170] sm:$0xff] %v2133
  %2150 = vst [vmem:[#allocation3 + $0x178] sm:$0xff] %v2134
  %v2151 = vld [vmem:[#allocation2] sm:$0xff]
  %v2152 = vld [vmem:[#allocation2 + $0x8] sm:$0xff]
  %v2153 = vld [vmem:[#allocation2 + $0x10] sm:$0xff]
  %v2154 = vld [vmem:[#allocation2 + $0x18] sm:$0xff]
  %v2155 = vld [vmem:[#allocation2 + $0x20] sm:$0xff]
  %v2156 = vld [vmem:[#allocation2 + $0x28] sm:$0xff]
  %v2157 = vld [vmem:[#allocation2 + $0x30] sm:$0xff]
  %v2158 = vld [vmem:[#allocation2 + $0x38] sm:$0xff]
  %v2159 = vld [vmem:[#allocation2 + $0x40] sm:$0xff]
  %v2160 = vld [vmem:[%s1 + $0x180] sm:$0xff]
  %v2161 = vld [vmem:[%s1 + $0x188] sm:$0xff]
  %v2162 = vld [vmem:[%s1 + $0x190] sm:$0xff]
  %v2163 = vld [vmem:[%s1 + $0x198] sm:$0xff]
  %v2164 = vld [vmem:[%s1 + $0x1a0] sm:$0xff]
  %v2165 = vld [vmem:[%s1 + $0x1a8] sm:$0xff]
  %v2166 = vld [vmem:[%s1 + $0x1b0] sm:$0xff]
  %v2167 = vld [vmem:[%s1 + $0x1b8] sm:$0xff]
  %2176 = vrot.lane.b32.xlu0 %v2160, 32
  %v2177 = vpop.permute.xlu0 %2176
  %2178 = vrot.lane.b32.xlu0 %v2161, 32
  %v2179 = vpop.permute.xlu0 %2178
  %2180 = vrot.lane.b32.xlu0 %v2162, 32
  %v2181 = vpop.permute.xlu0 %2180
  %2182 = vrot.lane.b32.xlu0 %v2163, 32
  %v2183 = vpop.permute.xlu0 %2182
  %2184 = vrot.lane.b32.xlu0 %v2164, 32
  %v2185 = vpop.permute.xlu0 %2184
  %2186 = vrot.lane.b32.xlu0 %v2165, 32
  %v2187 = vpop.permute.xlu0 %2186
  %2188 = vrot.lane.b32.xlu0 %v2166, 32
  %v2189 = vpop.permute.xlu0 %2188
  %2190 = vrot.lane.b32.xlu0 %v2167, 32
  %v2191 = vpop.permute.xlu0 %2190
  %v2192 = vsel %vm767, %v2177, %v2179
  %v2193 = vsel %vm767, %v2179, %v2181
  %v2194 = vsel %vm767, %v2181, %v2183
  %v2195 = vsel %vm767, %v2183, %v2185
  %v2196 = vsel %vm767, %v2185, %v2187
  %v2197 = vsel %vm767, %v2187, %v2189
  %v2198 = vsel %vm767, %v2189, %v2191
  %v2208 = vmul.f32 %v2151, %v2177
  %v2209 = vmul.f32 %v2152, %v2192
  %v2210 = vmul.f32 %v2153, %v2193
  %v2211 = vmul.f32 %v2154, %v2194
  %v2212 = vmul.f32 %v2155, %v2195
  %v2213 = vmul.f32 %v2156, %v2196
  %v2214 = vmul.f32 %v2157, %v2197
  %v2215 = vmul.f32 %v2158, %v2198
  %v2216 = vmul.f32 %v2159, %v2191
  %2226 = vrot.lane.b32.xlu0 %v2208, 96
  %v2227 = vpop.permute.xlu0 %2226
  %2228 = vrot.lane.b32.xlu0 %v2209, 96
  %v2229 = vpop.permute.xlu0 %2228
  %2230 = vrot.lane.b32.xlu0 %v2210, 96
  %v2231 = vpop.permute.xlu0 %2230
  %2232 = vrot.lane.b32.xlu0 %v2211, 96
  %v2233 = vpop.permute.xlu0 %2232
  %2234 = vrot.lane.b32.xlu0 %v2212, 96
  %v2235 = vpop.permute.xlu0 %2234
  %2236 = vrot.lane.b32.xlu0 %v2213, 96
  %v2237 = vpop.permute.xlu0 %2236
  %2238 = vrot.lane.b32.xlu0 %v2214, 96
  %v2239 = vpop.permute.xlu0 %2238
  %2240 = vrot.lane.b32.xlu0 %v2215, 96
  %v2241 = vpop.permute.xlu0 %2240
  %2242 = vrot.lane.b32.xlu0 %v2216, 96
  %v2243 = vpop.permute.xlu0 %2242
  %v2244 = vsel %vm820, %v2227, %v2229
  %v2245 = vsel %vm820, %v2229, %v2231
  %v2246 = vsel %vm820, %v2231, %v2233
  %v2247 = vsel %vm820, %v2233, %v2235
  %v2248 = vsel %vm820, %v2235, %v2237
  %v2249 = vsel %vm820, %v2237, %v2239
  %v2250 = vsel %vm820, %v2239, %v2241
  %v2251 = vsel %vm820, %v2241, %v2243
  %2260 = vst [vmem:[#allocation3 + $0x180] sm:$0xff] %v2244
  %2261 = vst [vmem:[#allocation3 + $0x188] sm:$0xff] %v2245
  %2262 = vst [vmem:[#allocation3 + $0x190] sm:$0xff] %v2246
  %2263 = vst [vmem:[#allocation3 + $0x198] sm:$0xff] %v2247
  %2264 = vst [vmem:[#allocation3 + $0x1a0] sm:$0xff] %v2248
  %2265 = vst [vmem:[#allocation3 + $0x1a8] sm:$0xff] %v2249
  %2266 = vst [vmem:[#allocation3 + $0x1b0] sm:$0xff] %v2250
  %2267 = vst [vmem:[#allocation3 + $0x1b8] sm:$0xff] %v2251
  %v2268 = vld [vmem:[#allocation2] sm:$0xff]
  %v2269 = vld [vmem:[#allocation2 + $0x8] sm:$0xff]
  %v2270 = vld [vmem:[#allocation2 + $0x10] sm:$0xff]
  %v2271 = vld [vmem:[#allocation2 + $0x18] sm:$0xff]
  %v2272 = vld [vmem:[#allocation2 + $0x20] sm:$0xff]
  %v2273 = vld [vmem:[#allocation2 + $0x28] sm:$0xff]
  %v2274 = vld [vmem:[#allocation2 + $0x30] sm:$0xff]
  %v2275 = vld [vmem:[#allocation2 + $0x38] sm:$0xff]
  %v2276 = vld [vmem:[#allocation2 + $0x40] sm:$0xff]
  %v2277 = vld [vmem:[%s1 + $0x1c0] sm:$0xff]
  %v2278 = vld [vmem:[%s1 + $0x1c8] sm:$0xff]
  %v2279 = vld [vmem:[%s1 + $0x1d0] sm:$0xff]
  %v2280 = vld [vmem:[%s1 + $0x1d8] sm:$0xff]
  %v2281 = vld [vmem:[%s1 + $0x1e0] sm:$0xff]
  %v2282 = vld [vmem:[%s1 + $0x1e8] sm:$0xff]
  %v2283 = vld [vmem:[%s1 + $0x1f0] sm:$0xff]
  %v2284 = vld [vmem:[%s1 + $0x1f8] sm:$0xff]
  %2293 = vrot.lane.b32.xlu0 %v2277, 33
  %v2294 = vpop.permute.xlu0 %2293
  %2295 = vrot.lane.b32.xlu0 %v2278, 33
  %v2296 = vpop.permute.xlu0 %2295
  %2297 = vrot.lane.b32.xlu0 %v2279, 33
  %v2298 = vpop.permute.xlu0 %2297
  %2299 = vrot.lane.b32.xlu0 %v2280, 33
  %v2300 = vpop.permute.xlu0 %2299
  %2301 = vrot.lane.b32.xlu0 %v2281, 33
  %v2302 = vpop.permute.xlu0 %2301
  %2303 = vrot.lane.b32.xlu0 %v2282, 33
  %v2304 = vpop.permute.xlu0 %2303
  %2305 = vrot.lane.b32.xlu0 %v2283, 33
  %v2306 = vpop.permute.xlu0 %2305
  %2307 = vrot.lane.b32.xlu0 %v2284, 33
  %v2308 = vpop.permute.xlu0 %2307
  %v2309 = vsel %vm886, %v2294, %v2296
  %v2310 = vsel %vm886, %v2296, %v2298
  %v2311 = vsel %vm886, %v2298, %v2300
  %v2312 = vsel %vm886, %v2300, %v2302
  %v2313 = vsel %vm886, %v2302, %v2304
  %v2314 = vsel %vm886, %v2304, %v2306
  %v2315 = vsel %vm886, %v2306, %v2308
  %v2325 = vmul.f32 %v2268, %v2294
  %v2326 = vmul.f32 %v2269, %v2309
  %v2327 = vmul.f32 %v2270, %v2310
  %v2328 = vmul.f32 %v2271, %v2311
  %v2329 = vmul.f32 %v2272, %v2312
  %v2330 = vmul.f32 %v2273, %v2313
  %v2331 = vmul.f32 %v2274, %v2314
  %v2332 = vmul.f32 %v2275, %v2315
  %v2333 = vmul.f32 %v2276, %v2308
  %2343 = vrot.lane.b32.xlu0 %v2325, 95
  %v2344 = vpop.permute.xlu0 %2343
  %2345 = vrot.lane.b32.xlu0 %v2326, 95
  %v2346 = vpop.permute.xlu0 %2345
  %2347 = vrot.lane.b32.xlu0 %v2327, 95
  %v2348 = vpop.permute.xlu0 %2347
  %2349 = vrot.lane.b32.xlu0 %v2328, 95
  %v2350 = vpop.permute.xlu0 %2349
  %2351 = vrot.lane.b32.xlu0 %v2329, 95
  %v2352 = vpop.permute.xlu0 %2351
  %2353 = vrot.lane.b32.xlu0 %v2330, 95
  %v2354 = vpop.permute.xlu0 %2353
  %2355 = vrot.lane.b32.xlu0 %v2331, 95
  %v2356 = vpop.permute.xlu0 %2355
  %2357 = vrot.lane.b32.xlu0 %v2332, 95
  %v2358 = vpop.permute.xlu0 %2357
  %2359 = vrot.lane.b32.xlu0 %v2333, 95
  %v2360 = vpop.permute.xlu0 %2359
  %v2361 = vsel %vm939, %v2344, %v2346
  %v2362 = vsel %vm939, %v2346, %v2348
  %v2363 = vsel %vm939, %v2348, %v2350
  %v2364 = vsel %vm939, %v2350, %v2352
  %v2365 = vsel %vm939, %v2352, %v2354
  %v2366 = vsel %vm939, %v2354, %v2356
  %v2367 = vsel %vm939, %v2356, %v2358
  %v2368 = vsel %vm939, %v2358, %v2360
  %2377 = vst [vmem:[#allocation3 + $0x1c0] sm:$0xff] %v2361
  %2378 = vst [vmem:[#allocation3 + $0x1c8] sm:$0xff] %v2362
  %2379 = vst [vmem:[#allocation3 + $0x1d0] sm:$0xff] %v2363
  %2380 = vst [vmem:[#allocation3 + $0x1d8] sm:$0xff] %v2364
  %2381 = vst [vmem:[#allocation3 + $0x1e0] sm:$0xff] %v2365
  %2382 = vst [vmem:[#allocation3 + $0x1e8] sm:$0xff] %v2366
  %2383 = vst [vmem:[#allocation3 + $0x1f0] sm:$0xff] %v2367
  %2384 = vst [vmem:[#allocation3 + $0x1f8] sm:$0xff] %v2368
  %v2385 = vld [vmem:[#allocation2] sm:$0xff]
  %v2386 = vld [vmem:[#allocation2 + $0x8] sm:$0xff]
  %v2387 = vld [vmem:[#allocation2 + $0x10] sm:$0xff]
  %v2388 = vld [vmem:[#allocation2 + $0x18] sm:$0xff]
  %v2389 = vld [vmem:[#allocation2 + $0x20] sm:$0xff]
  %v2390 = vld [vmem:[#allocation2 + $0x28] sm:$0xff]
  %v2391 = vld [vmem:[#allocation2 + $0x30] sm:$0xff]
  %v2392 = vld [vmem:[#allocation2 + $0x38] sm:$0xff]
  %v2393 = vld [vmem:[#allocation2 + $0x40] sm:$0xff]
  %v2394 = vld [vmem:[%s1 + $0x200] sm:$0xff]
  %v2395 = vld [vmem:[%s1 + $0x208] sm:$0xff]
  %v2396 = vld [vmem:[%s1 + $0x210] sm:$0xff]
  %v2397 = vld [vmem:[%s1 + $0x218] sm:$0xff]
  %v2398 = vld [vmem:[%s1 + $0x220] sm:$0xff]
  %v2399 = vld [vmem:[%s1 + $0x228] sm:$0xff]
  %v2400 = vld [vmem:[%s1 + $0x230] sm:$0xff]
  %v2401 = vld [vmem:[%s1 + $0x238] sm:$0xff]
  %2410 = vrot.lane.b32.xlu0 %v2394, 34
  %v2411 = vpop.permute.xlu0 %2410
  %2412 = vrot.lane.b32.xlu0 %v2395, 34
  %v2413 = vpop.permute.xlu0 %2412
  %2414 = vrot.lane.b32.xlu0 %v2396, 34
  %v2415 = vpop.permute.xlu0 %2414
  %2416 = vrot.lane.b32.xlu0 %v2397, 34
  %v2417 = vpop.permute.xlu0 %2416
  %2418 = vrot.lane.b32.xlu0 %v2398, 34
  %v2419 = vpop.permute.xlu0 %2418
  %2420 = vrot.lane.b32.xlu0 %v2399, 34
  %v2421 = vpop.permute.xlu0 %2420
  %2422 = vrot.lane.b32.xlu0 %v2400, 34
  %v2423 = vpop.permute.xlu0 %2422
  %2424 = vrot.lane.b32.xlu0 %v2401, 34
  %v2425 = vpop.permute.xlu0 %2424
  %v2426 = vsel %vm1005, %v2411, %v2413
  %v2427 = vsel %vm1005, %v2413, %v2415
  %v2428 = vsel %vm1005, %v2415, %v2417
  %v2429 = vsel %vm1005, %v2417, %v2419
  %v2430 = vsel %vm1005, %v2419, %v2421
  %v2431 = vsel %vm1005, %v2421, %v2423
  %v2432 = vsel %vm1005, %v2423, %v2425
  %v2442 = vmul.f32 %v2385, %v2411
  %v2443 = vmul.f32 %v2386, %v2426
  %v2444 = vmul.f32 %v2387, %v2427
  %v2445 = vmul.f32 %v2388, %v2428
  %v2446 = vmul.f32 %v2389, %v2429
  %v2447 = vmul.f32 %v2390, %v2430
  %v2448 = vmul.f32 %v2391, %v2431
  %v2449 = vmul.f32 %v2392, %v2432
  %v2450 = vmul.f32 %v2393, %v2425
  %2460 = vrot.lane.b32.xlu0 %v2442, 94
  %v2461 = vpop.permute.xlu0 %2460
  %2462 = vrot.lane.b32.xlu0 %v2443, 94
  %v2463 = vpop.permute.xlu0 %2462
  %2464 = vrot.lane.b32.xlu0 %v2444, 94
  %v2465 = vpop.permute.xlu0 %2464
  %2466 = vrot.lane.b32.xlu0 %v2445, 94
  %v2467 = vpop.permute.xlu0 %2466
  %2468 = vrot.lane.b32.xlu0 %v2446, 94
  %v2469 = vpop.permute.xlu0 %2468
  %2470 = vrot.lane.b32.xlu0 %v2447, 94
  %v2471 = vpop.permute.xlu0 %2470
  %2472 = vrot.lane.b32.xlu0 %v2448, 94
  %v2473 = vpop.permute.xlu0 %2472
  %2474 = vrot.lane.b32.xlu0 %v2449, 94
  %v2475 = vpop.permute.xlu0 %2474
  %2476 = vrot.lane.b32.xlu0 %v2450, 94
  %v2477 = vpop.permute.xlu0 %2476
  %v2478 = vsel %vm1058, %v2461, %v2463
  %v2479 = vsel %vm1058, %v2463, %v2465
  %v2480 = vsel %vm1058, %v2465, %v2467
  %v2481 = vsel %vm1058, %v2467, %v2469
  %v2482 = vsel %vm1058, %v2469, %v2471
  %v2483 = vsel %vm1058, %v2471, %v2473
  %v2484 = vsel %vm1058, %v2473, %v2475
  %v2485 = vsel %vm1058, %v2475, %v2477
  %2494 = vst [vmem:[#allocation3 + $0x200] sm:$0xff] %v2478
  %2495 = vst [vmem:[#allocation3 + $0x208] sm:$0xff] %v2479
  %2496 = vst [vmem:[#allocation3 + $0x210] sm:$0xff] %v2480
  %2497 = vst [vmem:[#allocation3 + $0x218] sm:$0xff] %v2481
  %2498 = vst [vmem:[#allocation3 + $0x220] sm:$0xff] %v2482
  %2499 = vst [vmem:[#allocation3 + $0x228] sm:$0xff] %v2483
  %2500 = vst [vmem:[#allocation3 + $0x230] sm:$0xff] %v2484
  %2501 = vst [vmem:[#allocation3 + $0x238] sm:$0xff] %v2485
  %v2502 = vld [vmem:[%s4] sm:$0xff]
  %v2503 = vld [vmem:[#allocation3] sm:$0xff]
  %v2504 = vld [vmem:[#allocation3 + $0x8] sm:$0xff]
  %v2505 = vld [vmem:[#allocation3 + $0x10] sm:$0xff]
  %v2506 = vld [vmem:[#allocation3 + $0x18] sm:$0xff]
  %v2507 = vld [vmem:[#allocation3 + $0x20] sm:$0xff]
  %v2508 = vld [vmem:[#allocation3 + $0x28] sm:$0xff]
  %v2509 = vld [vmem:[#allocation3 + $0x30] sm:$0xff]
  %v2510 = vld [vmem:[#allocation3 + $0x38] sm:$0xff]
  %v2511 = vld [vmem:[#allocation3 + $0x40] sm:$0xff]
  %v2512 = vld [vmem:[#allocation3 + $0x48] sm:$0xff]
  %v2513 = vld [vmem:[#allocation3 + $0x50] sm:$0xff]
  %v2514 = vld [vmem:[#allocation3 + $0x58] sm:$0xff]
  %v2515 = vld [vmem:[#allocation3 + $0x60] sm:$0xff]
  %v2516 = vld [vmem:[#allocation3 + $0x68] sm:$0xff]
  %v2517 = vld [vmem:[#allocation3 + $0x70] sm:$0xff]
  %v2518 = vld [vmem:[#allocation3 + $0x78] sm:$0xff]
  %v2519 = vld [vmem:[#allocation3 + $0x80] sm:$0xff]
  %v2520 = vld [vmem:[#allocation3 + $0x88] sm:$0xff]
  %v2521 = vld [vmem:[#allocation3 + $0x90] sm:$0xff]
  %v2522 = vld [vmem:[#allocation3 + $0x98] sm:$0xff]
  %v2523 = vld [vmem:[#allocation3 + $0xa0] sm:$0xff]
  %v2524 = vld [vmem:[#allocation3 + $0xa8] sm:$0xff]
  %v2525 = vld [vmem:[#allocation3 + $0xb0] sm:$0xff]
  %v2526 = vld [vmem:[#allocation3 + $0xb8] sm:$0xff]
  %v2527 = vld [vmem:[#allocation3 + $0xc0] sm:$0xff]
  %v2528 = vld [vmem:[#allocation3 + $0xc8] sm:$0xff]
  %v2529 = vld [vmem:[#allocation3 + $0xd0] sm:$0xff]
  %v2530 = vld [vmem:[#allocation3 + $0xd8] sm:$0xff]
  %v2531 = vld [vmem:[#allocation3 + $0xe0] sm:$0xff]
  %v2532 = vld [vmem:[#allocation3 + $0xe8] sm:$0xff]
  %v2533 = vld [vmem:[#allocation3 + $0xf0] sm:$0xff]
  %v2534 = vld [vmem:[#allocation3 + $0xf8] sm:$0xff]
  %v2535 = vld [vmem:[#allocation3 + $0x100] sm:$0xff]
  %v2536 = vld [vmem:[#allocation3 + $0x108] sm:$0xff]
  %v2537 = vld [vmem:[#allocation3 + $0x110] sm:$0xff]
  %v2538 = vld [vmem:[#allocation3 + $0x118] sm:$0xff]
  %v2539 = vld [vmem:[#allocation3 + $0x120] sm:$0xff]
  %v2540 = vld [vmem:[#allocation3 + $0x128] sm:$0xff]
  %v2541 = vld [vmem:[#allocation3 + $0x130] sm:$0xff]
  %v2542 = vld [vmem:[#allocation3 + $0x138] sm:$0xff]
  %v2543 = vld [vmem:[#allocation3 + $0x140] sm:$0xff]
  %v2544 = vld [vmem:[#allocation3 + $0x148] sm:$0xff]
  %v2545 = vld [vmem:[#allocation3 + $0x150] sm:$0xff]
  %v2546 = vld [vmem:[#allocation3 + $0x158] sm:$0xff]
  %v2547 = vld [vmem:[#allocation3 + $0x160] sm:$0xff]
  %v2548 = vld [vmem:[#allocation3 + $0x168] sm:$0xff]
  %v2549 = vld [vmem:[#allocation3 + $0x170] sm:$0xff]
  %v2550 = vld [vmem:[#allocation3 + $0x178] sm:$0xff]
  %v2551 = vld [vmem:[#allocation3 + $0x180] sm:$0xff]
  %v2552 = vld [vmem:[#allocation3 + $0x188] sm:$0xff]
  %v2553 = vld [vmem:[#allocation3 + $0x190] sm:$0xff]
  %v2554 = vld [vmem:[#allocation3 + $0x198] sm:$0xff]
  %v2555 = vld [vmem:[#allocation3 + $0x1a0] sm:$0xff]
  %v2556 = vld [vmem:[#allocation3 + $0x1a8] sm:$0xff]
  %v2557 = vld [vmem:[#allocation3 + $0x1b0] sm:$0xff]
  %v2558 = vld [vmem:[#allocation3 + $0x1b8] sm:$0xff]
  %v2559 = vld [vmem:[#allocation3 + $0x1c0] sm:$0xff]
  %v2560 = vld [vmem:[#allocation3 + $0x1c8] sm:$0xff]
  %v2561 = vld [vmem:[#allocation3 + $0x1d0] sm:$0xff]
  %v2562 = vld [vmem:[#allocation3 + $0x1d8] sm:$0xff]
  %v2563 = vld [vmem:[#allocation3 + $0x1e0] sm:$0xff]
  %v2564 = vld [vmem:[#allocation3 + $0x1e8] sm:$0xff]
  %v2565 = vld [vmem:[#allocation3 + $0x1f0] sm:$0xff]
  %v2566 = vld [vmem:[#allocation3 + $0x1f8] sm:$0xff]
  %v2567 = vld [vmem:[#allocation3 + $0x200] sm:$0xff]
  %v2568 = vld [vmem:[#allocation3 + $0x208] sm:$0xff]
  %v2569 = vld [vmem:[#allocation3 + $0x210] sm:$0xff]
  %v2570 = vld [vmem:[#allocation3 + $0x218] sm:$0xff]
  %v2571 = vld [vmem:[#allocation3 + $0x220] sm:$0xff]
  %v2572 = vld [vmem:[#allocation3 + $0x228] sm:$0xff]
  %v2573 = vld [vmem:[#allocation3 + $0x230] sm:$0xff]
  %v2574 = vld [vmem:[#allocation3 + $0x238] sm:$0xff]
  %v2575 = vld [vmem:[%s5] sm:$0xff]
  %2577 = vset.pattern.permute.xlu0 0
  %2578 = vperm.xlu0 %2577, %v2575
  %v2579 = vpop.permute.xlu0 %2578
  %v2582 = vsel %vm1162, %v2502, 0
  %2584 = vmatprep.subr.mxu0 0.0
  %2585 = vmatpush1.msra.mxu0 0.0
  %2586 = vmatprep.subr.mxu0 0.0
  %2587 = vmatpush1.msra.mxu0 0.0
  %2588 = vmatprep.subr.mxu0 0.0
  %2589 = vmatpush1.msra.mxu0 0.0
  %2590 = vmatprep.subr.mxu0 0.0
  %2591 = vmatpush1.msra.mxu0 0.0
  %2592 = vmatprep.subr.mxu0 0.0
  %2593 = vmatpush1.msra.mxu0 0.0
  %2594 = vmatprep.subr.mxu0 0.0
  %2595 = vmatpush1.msra.mxu0 0.0
  %2596 = vmatprep.subr.mxu0 0.0
  %2597 = vmatpush1.msra.mxu0 0.0
  %2598 = vmatprep.subr.mxu0 %v2568
  %2599 = vmatpush1.msra.mxu0 %v2567
  %2600 = vmatprep.subr.mxu0 %v2560
  %2601 = vmatpush1.msra.mxu0 %v2559
  %2602 = vmatprep.subr.mxu0 %v2552
  %2603 = vmatpush1.msra.mxu0 %v2551
  %2604 = vmatprep.subr.mxu0 %v2544
  %2605 = vmatpush1.msra.mxu0 %v2543
  %2606 = vmatprep.subr.mxu0 %v2536
  %2607 = vmatpush1.msra.mxu0 %v2535
  %2608 = vmatprep.subr.mxu0 %v2528
  %2609 = vmatpush1.msra.mxu0 %v2527
  %2610 = vmatprep.subr.mxu0 %v2520
  %2611 = vmatpush1.msra.mxu0 %v2519
  %2612 = vmatprep.subr.mxu0 %v2512
  %2613 = vmatpush1.msra.mxu0 %v2511
  %2614 = vmatprep.subr.mxu0 %v2504
  %2615 = vmatpush1.msra.mxu0 %v2503
  %2616 = vmatprep.subr.mxu0 0.0
  %2617 = vmatpush2.msra.mxu0 0.0
  %2618 = vmatprep.subr.mxu0 0.0
  %2619 = vmatpush2.msra.mxu0 0.0
  %2620 = vmatprep.subr.mxu0 0.0
  %2621 = vmatpush2.msra.mxu0 0.0
  %2622 = vmatprep.subr.mxu0 0.0
  %2623 = vmatpush2.msra.mxu0 0.0
  %2624 = vmatprep.subr.mxu0 0.0
  %2625 = vmatpush2.msra.mxu0 0.0
  %2626 = vmatprep.subr.mxu0 0.0
  %2627 = vmatpush2.msra.mxu0 0.0
  %2628 = vmatprep.subr.mxu0 0.0
  %2629 = vmatpush2.msra.mxu0 0.0
  %2630 = vmatprep.subr.mxu0 0.0
  %2631 = vmatpush2.msra.mxu0 0.0
  %2632 = vmatprep.subr.mxu0 0.0
  %2633 = vmatpush2.msra.mxu0 0.0
  %2634 = vmatprep.subr.mxu0 0.0
  %2635 = vmatpush2.msra.mxu0 0.0
  %2636 = vmatprep.subr.mxu0 0.0
  %2637 = vmatpush2.msra.mxu0 0.0
  %2638 = vmatprep.subr.mxu0 0.0
  %2639 = vmatpush2.msra.mxu0 0.0
  %2640 = vmatprep.subr.mxu0 0.0
  %2641 = vmatpush2.msra.mxu0 0.0
  %2642 = vmatprep.subr.mxu0 0.0
  %2643 = vmatpush2.msra.mxu0 0.0
  %2644 = vmatprep.subr.mxu0 0.0
  %2645 = vmatpush2.msra.mxu0 0.0
  %2646 = vmatprep.subr.mxu0 0.0
  %2647 = vmatpush2.msra.mxu0 0.0
  %2648 = vmatprep.mubr.f32.mxu0 0.0
  %2649 = vmatmul.mubr.f32.gmra.mxu0 %v2582
  %v2650 = vpop.f32.mrf.mxu0
  %v2651 = vadd.f32 %v2579, %v2650
  %v2652 = vpop.f32.mrf.mxu0
  %v2653 = vadd.f32 %v2579, %v2652
  %2654 = vdwg.mxu0
  %2655 = vmatprep.subr.mxu0 0.0
  %2656 = vmatpush1.msra.mxu0 0.0
  %2657 = vmatprep.subr.mxu0 0.0
  %2658 = vmatpush1.msra.mxu0 0.0
  %2659 = vmatprep.subr.mxu0 0.0
  %2660 = vmatpush1.msra.mxu0 0.0
  %2661 = vmatprep.subr.mxu0 0.0
  %2662 = vmatpush1.msra.mxu0 0.0
  %2663 = vmatprep.subr.mxu0 0.0
  %2664 = vmatpush1.msra.mxu0 0.0
  %2665 = vmatprep.subr.mxu0 0.0
  %2666 = vmatpush1.msra.mxu0 0.0
  %2667 = vmatprep.subr.mxu0 0.0
  %2668 = vmatpush1.msra.mxu0 0.0
  %2669 = vmatprep.subr.mxu0 %v2570
  %2670 = vmatpush1.msra.mxu0 %v2569
  %2671 = vmatprep.subr.mxu0 %v2562
  %2672 = vmatpush1.msra.mxu0 %v2561
  %2673 = vmatprep.subr.mxu0 %v2554
  %2674 = vmatpush1.msra.mxu0 %v2553
  %2675 = vmatprep.subr.mxu0 %v2546
  %2676 = vmatpush1.msra.mxu0 %v2545
  %2677 = vmatprep.subr.mxu0 %v2538
  %2678 = vmatpush1.msra.mxu0 %v2537
  %2679 = vmatprep.subr.mxu0 %v2530
  %2680 = vmatpush1.msra.mxu0 %v2529
  %2681 = vmatprep.subr.mxu0 %v2522
  %2682 = vmatpush1.msra.mxu0 %v2521
  %2683 = vmatprep.subr.mxu0 %v2514
  %2684 = vmatpush1.msra.mxu0 %v2513
  %2685 = vmatprep.subr.mxu0 %v2506
  %2686 = vmatpush1.msra.mxu0 %v2505
  %2687 = vmatprep.subr.mxu0 0.0
  %2688 = vmatpush2.msra.mxu0 0.0
  %2689 = vmatprep.subr.mxu0 0.0
  %2690 = vmatpush2.msra.mxu0 0.0
  %2691 = vmatprep.subr.mxu0 0.0
  %2692 = vmatpush2.msra.mxu0 0.0
  %2693 = vmatprep.subr.mxu0 0.0
  %2694 = vmatpush2.msra.mxu0 0.0
  %2695 = vmatprep.subr.mxu0 0.0
  %2696 = vmatpush2.msra.mxu0 0.0
  %2697 = vmatprep.subr.mxu0 0.0
  %2698 = vmatpush2.msra.mxu0 0.0
  %2699 = vmatprep.subr.mxu0 0.0
  %2700 = vmatpush2.msra.mxu0 0.0
  %2701 = vmatprep.subr.mxu0 0.0
  %2702 = vmatpush2.msra.mxu0 0.0
  %2703 = vmatprep.subr.mxu0 0.0
  %2704 = vmatpush2.msra.mxu0 0.0
  %2705 = vmatprep.subr.mxu0 0.0
  %2706 = vmatpush2.msra.mxu0 0.0
  %2707 = vmatprep.subr.mxu0 0.0
  %2708 = vmatpush2.msra.mxu0 0.0
  %2709 = vmatprep.subr.mxu0 0.0
  %2710 = vmatpush2.msra.mxu0 0.0
  %2711 = vmatprep.subr.mxu0 0.0
  %2712 = vmatpush2.msra.mxu0 0.0
  %2713 = vmatprep.subr.mxu0 0.0
  %2714 = vmatpush2.msra.mxu0 0.0
  %2715 = vmatprep.subr.mxu0 0.0
  %2716 = vmatpush2.msra.mxu0 0.0
  %2717 = vmatprep.subr.mxu0 0.0
  %2718 = vmatpush2.msra.mxu0 0.0
  %2719 = vmatprep.mubr.f32.mxu0 0.0
  %2720 = vmatmul.mubr.f32.gmra.mxu0 %v2582
  %v2721 = vpop.f32.mrf.mxu0
  %v2722 = vadd.f32 %v2579, %v2721
  %v2723 = vpop.f32.mrf.mxu0
  %v2724 = vadd.f32 %v2579, %v2723
  %2725 = vdwg.mxu0
  %2726 = vmatprep.subr.mxu0 0.0
  %2727 = vmatpush1.msra.mxu0 0.0
  %2728 = vmatprep.subr.mxu0 0.0
  %2729 = vmatpush1.msra.mxu0 0.0
  %2730 = vmatprep.subr.mxu0 0.0
  %2731 = vmatpush1.msra.mxu0 0.0
  %2732 = vmatprep.subr.mxu0 0.0
  %2733 = vmatpush1.msra.mxu0 0.0
  %2734 = vmatprep.subr.mxu0 0.0
  %2735 = vmatpush1.msra.mxu0 0.0
  %2736 = vmatprep.subr.mxu0 0.0
  %2737 = vmatpush1.msra.mxu0 0.0
  %2738 = vmatprep.subr.mxu0 0.0
  %2739 = vmatpush1.msra.mxu0 0.0
  %2740 = vmatprep.subr.mxu0 %v2572
  %2741 = vmatpush1.msra.mxu0 %v2571
  %2742 = vmatprep.subr.mxu0 %v2564
  %2743 = vmatpush1.msra.mxu0 %v2563
  %2744 = vmatprep.subr.mxu0 %v2556
  %2745 = vmatpush1.msra.mxu0 %v2555
  %2746 = vmatprep.subr.mxu0 %v2548
  %2747 = vmatpush1.msra.mxu0 %v2547
  %2748 = vmatprep.subr.mxu0 %v2540
  %2749 = vmatpush1.msra.mxu0 %v2539
  %2750 = vmatprep.subr.mxu0 %v2532
  %2751 = vmatpush1.msra.mxu0 %v2531
  %2752 = vmatprep.subr.mxu0 %v2524
  %2753 = vmatpush1.msra.mxu0 %v2523
  %2754 = vmatprep.subr.mxu0 %v2516
  %2755 = vmatpush1.msra.mxu0 %v2515
  %2756 = vmatprep.subr.mxu0 %v2508
  %2757 = vmatpush1.msra.mxu0 %v2507
  %2758 = vmatprep.subr.mxu0 0.0
  %2759 = vmatpush2.msra.mxu0 0.0
  %2760 = vmatprep.subr.mxu0 0.0
  %2761 = vmatpush2.msra.mxu0 0.0
  %2762 = vmatprep.subr.mxu0 0.0
  %2763 = vmatpush2.msra.mxu0 0.0
  %2764 = vmatprep.subr.mxu0 0.0
  %2765 = vmatpush2.msra.mxu0 0.0
  %2766 = vmatprep.subr.mxu0 0.0
  %2767 = vmatpush2.msra.mxu0 0.0
  %2768 = vmatprep.subr.mxu0 0.0
  %2769 = vmatpush2.msra.mxu0 0.0
  %2770 = vmatprep.subr.mxu0 0.0
  %2771 = vmatpush2.msra.mxu0 0.0
  %2772 = vmatprep.subr.mxu0 0.0
  %2773 = vmatpush2.msra.mxu0 0.0
  %2774 = vmatprep.subr.mxu0 0.0
  %2775 = vmatpush2.msra.mxu0 0.0
  %2776 = vmatprep.subr.mxu0 0.0
  %2777 = vmatpush2.msra.mxu0 0.0
  %2778 = vmatprep.subr.mxu0 0.0
  %2779 = vmatpush2.msra.mxu0 0.0
  %2780 = vmatprep.subr.mxu0 0.0
  %2781 = vmatpush2.msra.mxu0 0.0
  %2782 = vmatprep.subr.mxu0 0.0
  %2783 = vmatpush2.msra.mxu0 0.0
  %2784 = vmatprep.subr.mxu0 0.0
  %2785 = vmatpush2.msra.mxu0 0.0
  %2786 = vmatprep.subr.mxu0 0.0
  %2787 = vmatpush2.msra.mxu0 0.0
  %2788 = vmatprep.subr.mxu0 0.0
  %2789 = vmatpush2.msra.mxu0 0.0
  %2790 = vmatprep.mubr.f32.mxu0 0.0
  %2791 = vmatmul.mubr.f32.gmra.mxu0 %v2582
  %v2792 = vpop.f32.mrf.mxu0
  %v2793 = vadd.f32 %v2579, %v2792
  %v2794 = vpop.f32.mrf.mxu0
  %v2795 = vadd.f32 %v2579, %v2794
  %2796 = vdwg.mxu0
  %2797 = vmatprep.subr.mxu0 0.0
  %2798 = vmatpush1.msra.mxu0 0.0
  %2799 = vmatprep.subr.mxu0 0.0
  %2800 = vmatpush1.msra.mxu0 0.0
  %2801 = vmatprep.subr.mxu0 0.0
  %2802 = vmatpush1.msra.mxu0 0.0
  %2803 = vmatprep.subr.mxu0 0.0
  %2804 = vmatpush1.msra.mxu0 0.0
  %2805 = vmatprep.subr.mxu0 0.0
  %2806 = vmatpush1.msra.mxu0 0.0
  %2807 = vmatprep.subr.mxu0 0.0
  %2808 = vmatpush1.msra.mxu0 0.0
  %2809 = vmatprep.subr.mxu0 0.0
  %2810 = vmatpush1.msra.mxu0 0.0
  %2811 = vmatprep.subr.mxu0 %v2574
  %2812 = vmatpush1.msra.mxu0 %v2573
  %2813 = vmatprep.subr.mxu0 %v2566
  %2814 = vmatpush1.msra.mxu0 %v2565
  %2815 = vmatprep.subr.mxu0 %v2558
  %2816 = vmatpush1.msra.mxu0 %v2557
  %2817 = vmatprep.subr.mxu0 %v2550
  %2818 = vmatpush1.msra.mxu0 %v2549
  %2819 = vmatprep.subr.mxu0 %v2542
  %2820 = vmatpush1.msra.mxu0 %v2541
  %2821 = vmatprep.subr.mxu0 %v2534
  %2822 = vmatpush1.msra.mxu0 %v2533
  %2823 = vmatprep.subr.mxu0 %v2526
  %2824 = vmatpush1.msra.mxu0 %v2525
  %2825 = vmatprep.subr.mxu0 %v2518
  %2826 = vmatpush1.msra.mxu0 %v2517
  %2827 = vmatprep.subr.mxu0 %v2510
  %2828 = vmatpush1.msra.mxu0 %v2509
  %2829 = vmatprep.subr.mxu0 0.0
  %2830 = vmatpush2.msra.mxu0 0.0
  %2831 = vmatprep.subr.mxu0 0.0
  %2832 = vmatpush2.msra.mxu0 0.0
  %2833 = vmatprep.subr.mxu0 0.0
  %2834 = vmatpush2.msra.mxu0 0.0
  %2835 = vmatprep.subr.mxu0 0.0
  %2836 = vmatpush2.msra.mxu0 0.0
  %2837 = vmatprep.subr.mxu0 0.0
  %2838 = vmatpush2.msra.mxu0 0.0
  %2839 = vmatprep.subr.mxu0 0.0
  %2840 = vmatpush2.msra.mxu0 0.0
  %2841 = vmatprep.subr.mxu0 0.0
  %2842 = vmatpush2.msra.mxu0 0.0
  %2843 = vmatprep.subr.mxu0 0.0
  %2844 = vmatpush2.msra.mxu0 0.0
  %2845 = vmatprep.subr.mxu0 0.0
  %2846 = vmatpush2.msra.mxu0 0.0
  %2847 = vmatprep.subr.mxu0 0.0
  %2848 = vmatpush2.msra.mxu0 0.0
  %2849 = vmatprep.subr.mxu0 0.0
  %2850 = vmatpush2.msra.mxu0 0.0
  %2851 = vmatprep.subr.mxu0 0.0
  %2852 = vmatpush2.msra.mxu0 0.0
  %2853 = vmatprep.subr.mxu0 0.0
  %2854 = vmatpush2.msra.mxu0 0.0
  %2855 = vmatprep.subr.mxu0 0.0
  %2856 = vmatpush2.msra.mxu0 0.0
  %2857 = vmatprep.subr.mxu0 0.0
  %2858 = vmatpush2.msra.mxu0 0.0
  %2859 = vmatprep.subr.mxu0 0.0
  %2860 = vmatpush2.msra.mxu0 0.0
  %2861 = vmatprep.mubr.f32.mxu0 0.0
  %2862 = vmatmul.mubr.f32.gmra.mxu0 %v2582
  %v2863 = vpop.f32.mrf.mxu0
  %v2864 = vadd.f32 %v2579, %v2863
  %v2865 = vpop.f32.mrf.mxu0
  %v2866 = vadd.f32 %v2579, %v2865
  %2867 = vdwg.mxu0
  %vm2868 = vcmp.ge.f32.partialorder %v2651, 0.0
  %vm2869 = vcmp.ge.f32.partialorder %v2653, 0.0
  %vm2870 = vcmp.ge.f32.partialorder %v2722, 0.0
  %vm2871 = vcmp.ge.f32.partialorder %v2724, 0.0
  %vm2872 = vcmp.ge.f32.partialorder %v2793, 0.0
  %vm2873 = vcmp.ge.f32.partialorder %v2795, 0.0
  %vm2874 = vcmp.ge.f32.partialorder %v2864, 0.0
  %vm2875 = vcmp.ge.f32.partialorder %v2866, 0.0
  %v2876 = vmul.f32 %v2651, 0.1
  %v2877 = vmul.f32 %v2653, 0.1
  %v2878 = vmul.f32 %v2722, 0.1
  %v2879 = vmul.f32 %v2724, 0.1
  %v2880 = vmul.f32 %v2793, 0.1
  %v2881 = vmul.f32 %v2795, 0.1
  %v2882 = vmul.f32 %v2864, 0.1
  %v2883 = vmul.f32 %v2866, 0.1
  %v2884 = vsel %vm2868, %v2651, %v2876
  %v2885 = vsel %vm2869, %v2653, %v2877
  %v2886 = vsel %vm2870, %v2722, %v2878
  %v2887 = vsel %vm2871, %v2724, %v2879
  %v2888 = vsel %vm2872, %v2793, %v2880
  %v2889 = vsel %vm2873, %v2795, %v2881
  %v2890 = vsel %vm2874, %v2864, %v2882
  %v2891 = vsel %vm2875, %v2866, %v2883
  %2892 = vst [vmem:[%s9] sm:$0xff] %v2884
  %2893 = vst [vmem:[%s9 + $0x8] sm:$0xff] %v2885
  %s2894 = scalar_lea.vmem %s9, 16
  %2895 = vst [vmem:[%s2894] sm:$0xff] %v2886
  %2896 = vst [vmem:[%s2894 + $0x8] sm:$0xff] %v2887
  %s2897 = scalar_lea.vmem %s9, 32
  %2898 = vst [vmem:[%s2897] sm:$0xff] %v2888
  %2899 = vst [vmem:[%s2897 + $0x8] sm:$0xff] %v2889
  %s2900 = scalar_lea.vmem %s9, 48
  %2901 = vst [vmem:[%s2900] sm:$0xff] %v2890
  %2902 = vst [vmem:[%s2900 + $0x8] sm:$0xff] %v2891
  %2911 = vrot.lane.b32.xlu0 %v2884, 17
  %v2912 = vpop.permute.xlu0 %2911
  %2913 = vrot.lane.b32.xlu0 %v2885, 17
  %v2914 = vpop.permute.xlu0 %2913
  %2915 = vrot.lane.b32.xlu0 %v2886, 17
  %v2916 = vpop.permute.xlu0 %2915
  %2917 = vrot.lane.b32.xlu0 %v2887, 17
  %v2918 = vpop.permute.xlu0 %2917
  %2919 = vrot.lane.b32.xlu0 %v2888, 17
  %v2920 = vpop.permute.xlu0 %2919
  %2921 = vrot.lane.b32.xlu0 %v2889, 17
  %v2922 = vpop.permute.xlu0 %2921
  %2923 = vrot.lane.b32.xlu0 %v2890, 17
  %v2924 = vpop.permute.xlu0 %2923
  %2925 = vrot.lane.b32.xlu0 %v2891, 17
  %v2926 = vpop.permute.xlu0 %2925
  %v2927 = vsel %vm32, %v2912, %v2914
  %v2928 = vsel %vm32, %v2914, %v2916
  %v2929 = vsel %vm32, %v2916, %v2918
  %v2930 = vsel %vm32, %v2918, %v2920
  %v2931 = vsel %vm32, %v2920, %v2922
  %v2932 = vsel %vm32, %v2922, %v2924
  %v2933 = vsel %vm32, %v2924, %v2926
  %2943 = vst.msk [vmem:[#allocation2] sm:$0xff] %vm48, %v2912
  %2944 = vst [vmem:[#allocation2 + $0x8] sm:$0xff] %v2927
  %2945 = vst [vmem:[#allocation2 + $0x10] sm:$0xff] %v2928
  %2946 = vst [vmem:[#allocation2 + $0x18] sm:$0xff] %v2929
  %2947 = vst [vmem:[#allocation2 + $0x20] sm:$0xff] %v2930
  %2948 = vst [vmem:[#allocation2 + $0x28] sm:$0xff] %v2931
  %2949 = vst [vmem:[#allocation2 + $0x30] sm:$0xff] %v2932
  %2950 = vst [vmem:[#allocation2 + $0x38] sm:$0xff] %v2933
  %2951 = vst.msk [vmem:[#allocation2 + $0x40] sm:$0xff] %vm32, %v2926
  %v2952 = vld [vmem:[#allocation2] sm:$0xff]
  %v2953 = vld [vmem:[#allocation2 + $0x8] sm:$0xff]
  %v2954 = vld [vmem:[#allocation2 + $0x10] sm:$0xff]
  %v2955 = vld [vmem:[#allocation2 + $0x18] sm:$0xff]
  %v2956 = vld [vmem:[#allocation2 + $0x20] sm:$0xff]
  %v2957 = vld [vmem:[#allocation2 + $0x28] sm:$0xff]
  %v2958 = vld [vmem:[#allocation2 + $0x30] sm:$0xff]
  %v2959 = vld [vmem:[#allocation2 + $0x38] sm:$0xff]
  %v2960 = vld [vmem:[%s1] sm:$0xff]
  %v2961 = vld [vmem:[%s1 + $0x8] sm:$0xff]
  %v2962 = vld [vmem:[%s1 + $0x10] sm:$0xff]
  %v2963 = vld [vmem:[%s1 + $0x18] sm:$0xff]
  %v2964 = vld [vmem:[%s1 + $0x20] sm:$0xff]
  %v2965 = vld [vmem:[%s1 + $0x28] sm:$0xff]
  %v2966 = vld [vmem:[%s1 + $0x30] sm:$0xff]
  %v2967 = vld [vmem:[%s1 + $0x38] sm:$0xff]
  %v2968 = vmul.f32 %v2952, %v2960
  %v2969 = vmul.f32 %v2953, %v2961
  %v2970 = vmul.f32 %v2954, %v2962
  %v2971 = vmul.f32 %v2955, %v2963
  %v2972 = vmul.f32 %v2956, %v2964
  %v2973 = vmul.f32 %v2957, %v2965
  %v2974 = vmul.f32 %v2958, %v2966
  %v2975 = vmul.f32 %v2959, %v2967
  %2976 = vst [vmem:[#allocation3] sm:$0xff] %v2968
  %2977 = vst [vmem:[#allocation3 + $0x8] sm:$0xff] %v2969
  %2978 = vst [vmem:[#allocation3 + $0x10] sm:$0xff] %v2970
  %2979 = vst [vmem:[#allocation3 + $0x18] sm:$0xff] %v2971
  %2980 = vst [vmem:[#allocation3 + $0x20] sm:$0xff] %v2972
  %2981 = vst [vmem:[#allocation3 + $0x28] sm:$0xff] %v2973
  %2982 = vst [vmem:[#allocation3 + $0x30] sm:$0xff] %v2974
  %2983 = vst [vmem:[#allocation3 + $0x38] sm:$0xff] %v2975
  %v2984 = vld [vmem:[#allocation2] sm:$0xff]
  %v2985 = vld [vmem:[#allocation2 + $0x8] sm:$0xff]
  %v2986 = vld [vmem:[#allocation2 + $0x10] sm:$0xff]
  %v2987 = vld [vmem:[#allocation2 + $0x18] sm:$0xff]
  %v2988 = vld [vmem:[#allocation2 + $0x20] sm:$0xff]
  %v2989 = vld [vmem:[#allocation2 + $0x28] sm:$0xff]
  %v2990 = vld [vmem:[#allocation2 + $0x30] sm:$0xff]
  %v2991 = vld [vmem:[#allocation2 + $0x38] sm:$0xff]
  %v2992 = vld [vmem:[#allocation2 + $0x40] sm:$0xff]
  %v2993 = vld [vmem:[%s1 + $0x40] sm:$0xff]
  %v2994 = vld [vmem:[%s1 + $0x48] sm:$0xff]
  %v2995 = vld [vmem:[%s1 + $0x50] sm:$0xff]
  %v2996 = vld [vmem:[%s1 + $0x58] sm:$0xff]
  %v2997 = vld [vmem:[%s1 + $0x60] sm:$0xff]
  %v2998 = vld [vmem:[%s1 + $0x68] sm:$0xff]
  %v2999 = vld [vmem:[%s1 + $0x70] sm:$0xff]
  %v3000 = vld [vmem:[%s1 + $0x78] sm:$0xff]
  %3009 = vrot.lane.b32.xlu0 %v2993, 1
  %v3010 = vpop.permute.xlu0 %3009
  %3011 = vrot.lane.b32.xlu0 %v2994, 1
  %v3012 = vpop.permute.xlu0 %3011
  %3013 = vrot.lane.b32.xlu0 %v2995, 1
  %v3014 = vpop.permute.xlu0 %3013
  %3015 = vrot.lane.b32.xlu0 %v2996, 1
  %v3016 = vpop.permute.xlu0 %3015
  %3017 = vrot.lane.b32.xlu0 %v2997, 1
  %v3018 = vpop.permute.xlu0 %3017
  %3019 = vrot.lane.b32.xlu0 %v2998, 1
  %v3020 = vpop.permute.xlu0 %3019
  %3021 = vrot.lane.b32.xlu0 %v2999, 1
  %v3022 = vpop.permute.xlu0 %3021
  %3023 = vrot.lane.b32.xlu0 %v3000, 1
  %v3024 = vpop.permute.xlu0 %3023
  %v3025 = vsel %vm173, %v3010, %v3012
  %v3026 = vsel %vm173, %v3012, %v3014
  %v3027 = vsel %vm173, %v3014, %v3016
  %v3028 = vsel %vm173, %v3016, %v3018
  %v3029 = vsel %vm173, %v3018, %v3020
  %v3030 = vsel %vm173, %v3020, %v3022
  %v3031 = vsel %vm173, %v3022, %v3024
  %v3041 = vmul.f32 %v2984, %v3010
  %v3042 = vmul.f32 %v2985, %v3025
  %v3043 = vmul.f32 %v2986, %v3026
  %v3044 = vmul.f32 %v2987, %v3027
  %v3045 = vmul.f32 %v2988, %v3028
  %v3046 = vmul.f32 %v2989, %v3029
  %v3047 = vmul.f32 %v2990, %v3030
  %v3048 = vmul.f32 %v2991, %v3031
  %v3049 = vmul.f32 %v2992, %v3024
  %3059 = vrot.lane.b32.xlu0 %v3041, 127
  %v3060 = vpop.permute.xlu0 %3059
  %3061 = vrot.lane.b32.xlu0 %v3042, 127
  %v3062 = vpop.permute.xlu0 %3061
  %3063 = vrot.lane.b32.xlu0 %v3043, 127
  %v3064 = vpop.permute.xlu0 %3063
  %3065 = vrot.lane.b32.xlu0 %v3044, 127
  %v3066 = vpop.permute.xlu0 %3065
  %3067 = vrot.lane.b32.xlu0 %v3045, 127
  %v3068 = vpop.permute.xlu0 %3067
  %3069 = vrot.lane.b32.xlu0 %v3046, 127
  %v3070 = vpop.permute.xlu0 %3069
  %3071 = vrot.lane.b32.xlu0 %v3047, 127
  %v3072 = vpop.permute.xlu0 %3071
  %3073 = vrot.lane.b32.xlu0 %v3048, 127
  %v3074 = vpop.permute.xlu0 %3073
  %3075 = vrot.lane.b32.xlu0 %v3049, 127
  %v3076 = vpop.permute.xlu0 %3075
  %v3077 = vsel %vm226, %v3060, %v3062
  %v3078 = vsel %vm226, %v3062, %v3064
  %v3079 = vsel %vm226, %v3064, %v3066
  %v3080 = vsel %vm226, %v3066, %v3068
  %v3081 = vsel %vm226, %v3068, %v3070
  %v3082 = vsel %vm226, %v3070, %v3072
  %v3083 = vsel %vm226, %v3072, %v3074
  %v3084 = vsel %vm226, %v3074, %v3076
  %3093 = vst [vmem:[#allocation3 + $0x40] sm:$0xff] %v3077
  %3094 = vst [vmem:[#allocation3 + $0x48] sm:$0xff] %v3078
  %3095 = vst [vmem:[#allocation3 + $0x50] sm:$0xff] %v3079
  %3096 = vst [vmem:[#allocation3 + $0x58] sm:$0xff] %v3080
  %3097 = vst [vmem:[#allocation3 + $0x60] sm:$0xff] %v3081
  %3098 = vst [vmem:[#allocation3 + $0x68] sm:$0xff] %v3082
  %3099 = vst [vmem:[#allocation3 + $0x70] sm:$0xff] %v3083
  %3100 = vst [vmem:[#allocation3 + $0x78] sm:$0xff] %v3084
  %v3101 = vld [vmem:[#allocation2] sm:$0xff]
  %v3102 = vld [vmem:[#allocation2 + $0x8] sm:$0xff]
  %v3103 = vld [vmem:[#allocation2 + $0x10] sm:$0xff]
  %v3104 = vld [vmem:[#allocation2 + $0x18] sm:$0xff]
  %v3105 = vld [vmem:[#allocation2 + $0x20] sm:$0xff]
  %v3106 = vld [vmem:[#allocation2 + $0x28] sm:$0xff]
  %v3107 = vld [vmem:[#allocation2 + $0x30] sm:$0xff]
  %v3108 = vld [vmem:[#allocation2 + $0x38] sm:$0xff]
  %v3109 = vld [vmem:[#allocation2 + $0x40] sm:$0xff]
  %v3110 = vld [vmem:[%s1 + $0x80] sm:$0xff]
  %v3111 = vld [vmem:[%s1 + $0x88] sm:$0xff]
  %v3112 = vld [vmem:[%s1 + $0x90] sm:$0xff]
  %v3113 = vld [vmem:[%s1 + $0x98] sm:$0xff]
  %v3114 = vld [vmem:[%s1 + $0xa0] sm:$0xff]
  %v3115 = vld [vmem:[%s1 + $0xa8] sm:$0xff]
  %v3116 = vld [vmem:[%s1 + $0xb0] sm:$0xff]
  %v3117 = vld [vmem:[%s1 + $0xb8] sm:$0xff]
  %3126 = vrot.lane.b32.xlu0 %v3110, 2
  %v3127 = vpop.permute.xlu0 %3126
  %3128 = vrot.lane.b32.xlu0 %v3111, 2
  %v3129 = vpop.permute.xlu0 %3128
  %3130 = vrot.lane.b32.xlu0 %v3112, 2
  %v3131 = vpop.permute.xlu0 %3130
  %3132 = vrot.lane.b32.xlu0 %v3113, 2
  %v3133 = vpop.permute.xlu0 %3132
  %3134 = vrot.lane.b32.xlu0 %v3114, 2
  %v3135 = vpop.permute.xlu0 %3134
  %3136 = vrot.lane.b32.xlu0 %v3115, 2
  %v3137 = vpop.permute.xlu0 %3136
  %3138 = vrot.lane.b32.xlu0 %v3116, 2
  %v3139 = vpop.permute.xlu0 %3138
  %3140 = vrot.lane.b32.xlu0 %v3117, 2
  %v3141 = vpop.permute.xlu0 %3140
  %v3142 = vsel %vm292, %v3127, %v3129
  %v3143 = vsel %vm292, %v3129, %v3131
  %v3144 = vsel %vm292, %v3131, %v3133
  %v3145 = vsel %vm292, %v3133, %v3135
  %v3146 = vsel %vm292, %v3135, %v3137
  %v3147 = vsel %vm292, %v3137, %v3139
  %v3148 = vsel %vm292, %v3139, %v3141
  %v3158 = vmul.f32 %v3101, %v3127
  %v3159 = vmul.f32 %v3102, %v3142
  %v3160 = vmul.f32 %v3103, %v3143
  %v3161 = vmul.f32 %v3104, %v3144
  %v3162 = vmul.f32 %v3105, %v3145
  %v3163 = vmul.f32 %v3106, %v3146
  %v3164 = vmul.f32 %v3107, %v3147
  %v3165 = vmul.f32 %v3108, %v3148
  %v3166 = vmul.f32 %v3109, %v3141
  %3176 = vrot.lane.b32.xlu0 %v3158, 126
  %v3177 = vpop.permute.xlu0 %3176
  %3178 = vrot.lane.b32.xlu0 %v3159, 126
  %v3179 = vpop.permute.xlu0 %3178
  %3180 = vrot.lane.b32.xlu0 %v3160, 126
  %v3181 = vpop.permute.xlu0 %3180
  %3182 = vrot.lane.b32.xlu0 %v3161, 126
  %v3183 = vpop.permute.xlu0 %3182
  %3184 = vrot.lane.b32.xlu0 %v3162, 126
  %v3185 = vpop.permute.xlu0 %3184
  %3186 = vrot.lane.b32.xlu0 %v3163, 126
  %v3187 = vpop.permute.xlu0 %3186
  %3188 = vrot.lane.b32.xlu0 %v3164, 126
  %v3189 = vpop.permute.xlu0 %3188
  %3190 = vrot.lane.b32.xlu0 %v3165, 126
  %v3191 = vpop.permute.xlu0 %3190
  %3192 = vrot.lane.b32.xlu0 %v3166, 126
  %v3193 = vpop.permute.xlu0 %3192
  %v3194 = vsel %vm345, %v3177, %v3179
  %v3195 = vsel %vm345, %v3179, %v3181
  %v3196 = vsel %vm345, %v3181, %v3183
  %v3197 = vsel %vm345, %v3183, %v3185
  %v3198 = vsel %vm345, %v3185, %v3187
  %v3199 = vsel %vm345, %v3187, %v3189
  %v3200 = vsel %vm345, %v3189, %v3191
  %v3201 = vsel %vm345, %v3191, %v3193
  %3210 = vst [vmem:[#allocation3 + $0x80] sm:$0xff] %v3194
  %3211 = vst [vmem:[#allocation3 + $0x88] sm:$0xff] %v3195
  %3212 = vst [vmem:[#allocation3 + $0x90] sm:$0xff] %v3196
  %3213 = vst [vmem:[#allocation3 + $0x98] sm:$0xff] %v3197
  %3214 = vst [vmem:[#allocation3 + $0xa0] sm:$0xff] %v3198
  %3215 = vst [vmem:[#allocation3 + $0xa8] sm:$0xff] %v3199
  %3216 = vst [vmem:[#allocation3 + $0xb0] sm:$0xff] %v3200
  %3217 = vst [vmem:[#allocation3 + $0xb8] sm:$0xff] %v3201
  %v3218 = vld [vmem:[#allocation2] sm:$0xff]
  %v3219 = vld [vmem:[#allocation2 + $0x8] sm:$0xff]
  %v3220 = vld [vmem:[#allocation2 + $0x10] sm:$0xff]
  %v3221 = vld [vmem:[#allocation2 + $0x18] sm:$0xff]
  %v3222 = vld [vmem:[#allocation2 + $0x20] sm:$0xff]
  %v3223 = vld [vmem:[#allocation2 + $0x28] sm:$0xff]
  %v3224 = vld [vmem:[#allocation2 + $0x30] sm:$0xff]
  %v3225 = vld [vmem:[#allocation2 + $0x38] sm:$0xff]
  %v3226 = vld [vmem:[#allocation2 + $0x40] sm:$0xff]
  %v3227 = vld [vmem:[%s1 + $0xc0] sm:$0xff]
  %v3228 = vld [vmem:[%s1 + $0xc8] sm:$0xff]
  %v3229 = vld [vmem:[%s1 + $0xd0] sm:$0xff]
  %v3230 = vld [vmem:[%s1 + $0xd8] sm:$0xff]
  %v3231 = vld [vmem:[%s1 + $0xe0] sm:$0xff]
  %v3232 = vld [vmem:[%s1 + $0xe8] sm:$0xff]
  %v3233 = vld [vmem:[%s1 + $0xf0] sm:$0xff]
  %v3234 = vld [vmem:[%s1 + $0xf8] sm:$0xff]
  %3243 = vrot.lane.b32.xlu0 %v3227, 16
  %v3244 = vpop.permute.xlu0 %3243
  %3245 = vrot.lane.b32.xlu0 %v3228, 16
  %v3246 = vpop.permute.xlu0 %3245
  %3247 = vrot.lane.b32.xlu0 %v3229, 16
  %v3248 = vpop.permute.xlu0 %3247
  %3249 = vrot.lane.b32.xlu0 %v3230, 16
  %v3250 = vpop.permute.xlu0 %3249
  %3251 = vrot.lane.b32.xlu0 %v3231, 16
  %v3252 = vpop.permute.xlu0 %3251
  %3253 = vrot.lane.b32.xlu0 %v3232, 16
  %v3254 = vpop.permute.xlu0 %3253
  %3255 = vrot.lane.b32.xlu0 %v3233, 16
  %v3256 = vpop.permute.xlu0 %3255
  %3257 = vrot.lane.b32.xlu0 %v3234, 16
  %v3258 = vpop.permute.xlu0 %3257
  %v3259 = vsel %vm411, %v3244, %v3246
  %v3260 = vsel %vm411, %v3246, %v3248
  %v3261 = vsel %vm411, %v3248, %v3250
  %v3262 = vsel %vm411, %v3250, %v3252
  %v3263 = vsel %vm411, %v3252, %v3254
  %v3264 = vsel %vm411, %v3254, %v3256
  %v3265 = vsel %vm411, %v3256, %v3258
  %v3275 = vmul.f32 %v3218, %v3244
  %v3276 = vmul.f32 %v3219, %v3259
  %v3277 = vmul.f32 %v3220, %v3260
  %v3278 = vmul.f32 %v3221, %v3261
  %v3279 = vmul.f32 %v3222, %v3262
  %v3280 = vmul.f32 %v3223, %v3263
  %v3281 = vmul.f32 %v3224, %v3264
  %v3282 = vmul.f32 %v3225, %v3265
  %v3283 = vmul.f32 %v3226, %v3258
  %3293 = vrot.lane.b32.xlu0 %v3275, 112
  %v3294 = vpop.permute.xlu0 %3293
  %3295 = vrot.lane.b32.xlu0 %v3276, 112
  %v3296 = vpop.permute.xlu0 %3295
  %3297 = vrot.lane.b32.xlu0 %v3277, 112
  %v3298 = vpop.permute.xlu0 %3297
  %3299 = vrot.lane.b32.xlu0 %v3278, 112
  %v3300 = vpop.permute.xlu0 %3299
  %3301 = vrot.lane.b32.xlu0 %v3279, 112
  %v3302 = vpop.permute.xlu0 %3301
  %3303 = vrot.lane.b32.xlu0 %v3280, 112
  %v3304 = vpop.permute.xlu0 %3303
  %3305 = vrot.lane.b32.xlu0 %v3281, 112
  %v3306 = vpop.permute.xlu0 %3305
  %3307 = vrot.lane.b32.xlu0 %v3282, 112
  %v3308 = vpop.permute.xlu0 %3307
  %3309 = vrot.lane.b32.xlu0 %v3283, 112
  %v3310 = vpop.permute.xlu0 %3309
  %v3311 = vsel %vm464, %v3294, %v3296
  %v3312 = vsel %vm464, %v3296, %v3298
  %v3313 = vsel %vm464, %v3298, %v3300
  %v3314 = vsel %vm464, %v3300, %v3302
  %v3315 = vsel %vm464, %v3302, %v3304
  %v3316 = vsel %vm464, %v3304, %v3306
  %v3317 = vsel %vm464, %v3306, %v3308
  %v3318 = vsel %vm464, %v3308, %v3310
  %3327 = vst [vmem:[#allocation3 + $0xc0] sm:$0xff] %v3311
  %3328 = vst [vmem:[#allocation3 + $0xc8] sm:$0xff] %v3312
  %3329 = vst [vmem:[#allocation3 + $0xd0] sm:$0xff] %v3313
  %3330 = vst [vmem:[#allocation3 + $0xd8] sm:$0xff] %v3314
  %3331 = vst [vmem:[#allocation3 + $0xe0] sm:$0xff] %v3315
  %3332 = vst [vmem:[#allocation3 + $0xe8] sm:$0xff] %v3316
  %3333 = vst [vmem:[#allocation3 + $0xf0] sm:$0xff] %v3317
  %3334 = vst [vmem:[#allocation3 + $0xf8] sm:$0xff] %v3318
  %v3335 = vld [vmem:[#allocation2] sm:$0xff]
  %v3336 = vld [vmem:[#allocation2 + $0x8] sm:$0xff]
  %v3337 = vld [vmem:[#allocation2 + $0x10] sm:$0xff]
  %v3338 = vld [vmem:[#allocation2 + $0x18] sm:$0xff]
  %v3339 = vld [vmem:[#allocation2 + $0x20] sm:$0xff]
  %v3340 = vld [vmem:[#allocation2 + $0x28] sm:$0xff]
  %v3341 = vld [vmem:[#allocation2 + $0x30] sm:$0xff]
  %v3342 = vld [vmem:[#allocation2 + $0x38] sm:$0xff]
  %v3343 = vld [vmem:[#allocation2 + $0x40] sm:$0xff]
  %v3344 = vld [vmem:[%s1 + $0x100] sm:$0xff]
  %v3345 = vld [vmem:[%s1 + $0x108] sm:$0xff]
  %v3346 = vld [vmem:[%s1 + $0x110] sm:$0xff]
  %v3347 = vld [vmem:[%s1 + $0x118] sm:$0xff]
  %v3348 = vld [vmem:[%s1 + $0x120] sm:$0xff]
  %v3349 = vld [vmem:[%s1 + $0x128] sm:$0xff]
  %v3350 = vld [vmem:[%s1 + $0x130] sm:$0xff]
  %v3351 = vld [vmem:[%s1 + $0x138] sm:$0xff]
  %3360 = vrot.lane.b32.xlu0 %v3344, 17
  %v3361 = vpop.permute.xlu0 %3360
  %3362 = vrot.lane.b32.xlu0 %v3345, 17
  %v3363 = vpop.permute.xlu0 %3362
  %3364 = vrot.lane.b32.xlu0 %v3346, 17
  %v3365 = vpop.permute.xlu0 %3364
  %3366 = vrot.lane.b32.xlu0 %v3347, 17
  %v3367 = vpop.permute.xlu0 %3366
  %3368 = vrot.lane.b32.xlu0 %v3348, 17
  %v3369 = vpop.permute.xlu0 %3368
  %3370 = vrot.lane.b32.xlu0 %v3349, 17
  %v3371 = vpop.permute.xlu0 %3370
  %3372 = vrot.lane.b32.xlu0 %v3350, 17
  %v3373 = vpop.permute.xlu0 %3372
  %3374 = vrot.lane.b32.xlu0 %v3351, 17
  %v3375 = vpop.permute.xlu0 %3374
  %v3376 = vsel %vm32, %v3361, %v3363
  %v3377 = vsel %vm32, %v3363, %v3365
  %v3378 = vsel %vm32, %v3365, %v3367
  %v3379 = vsel %vm32, %v3367, %v3369
  %v3380 = vsel %vm32, %v3369, %v3371
  %v3381 = vsel %vm32, %v3371, %v3373
  %v3382 = vsel %vm32, %v3373, %v3375
  %v3392 = vmul.f32 %v3335, %v3361
  %v3393 = vmul.f32 %v3336, %v3376
  %v3394 = vmul.f32 %v3337, %v3377
  %v3395 = vmul.f32 %v3338, %v3378
  %v3396 = vmul.f32 %v3339, %v3379
  %v3397 = vmul.f32 %v3340, %v3380
  %v3398 = vmul.f32 %v3341, %v3381
  %v3399 = vmul.f32 %v3342, %v3382
  %v3400 = vmul.f32 %v3343, %v3375
  %3410 = vrot.lane.b32.xlu0 %v3392, 111
  %v3411 = vpop.permute.xlu0 %3410
  %3412 = vrot.lane.b32.xlu0 %v3393, 111
  %v3413 = vpop.permute.xlu0 %3412
  %3414 = vrot.lane.b32.xlu0 %v3394, 111
  %v3415 = vpop.permute.xlu0 %3414
  %3416 = vrot.lane.b32.xlu0 %v3395, 111
  %v3417 = vpop.permute.xlu0 %3416
  %3418 = vrot.lane.b32.xlu0 %v3396, 111
  %v3419 = vpop.permute.xlu0 %3418
  %3420 = vrot.lane.b32.xlu0 %v3397, 111
  %v3421 = vpop.permute.xlu0 %3420
  %3422 = vrot.lane.b32.xlu0 %v3398, 111
  %v3423 = vpop.permute.xlu0 %3422
  %3424 = vrot.lane.b32.xlu0 %v3399, 111
  %v3425 = vpop.permute.xlu0 %3424
  %3426 = vrot.lane.b32.xlu0 %v3400, 111
  %v3427 = vpop.permute.xlu0 %3426
  %v3428 = vsel %vm582, %v3411, %v3413
  %v3429 = vsel %vm582, %v3413, %v3415
  %v3430 = vsel %vm582, %v3415, %v3417
  %v3431 = vsel %vm582, %v3417, %v3419
  %v3432 = vsel %vm582, %v3419, %v3421
  %v3433 = vsel %vm582, %v3421, %v3423
  %v3434 = vsel %vm582, %v3423, %v3425
  %v3435 = vsel %vm582, %v3425, %v3427
  %3444 = vst [vmem:[#allocation3 + $0x100] sm:$0xff] %v3428
  %3445 = vst [vmem:[#allocation3 + $0x108] sm:$0xff] %v3429
  %3446 = vst [vmem:[#allocation3 + $0x110] sm:$0xff] %v3430
  %3447 = vst [vmem:[#allocation3 + $0x118] sm:$0xff] %v3431
  %3448 = vst [vmem:[#allocation3 + $0x120] sm:$0xff] %v3432
  %3449 = vst [vmem:[#allocation3 + $0x128] sm:$0xff] %v3433
  %3450 = vst [vmem:[#allocation3 + $0x130] sm:$0xff] %v3434
  %3451 = vst [vmem:[#allocation3 + $0x138] sm:$0xff] %v3435
  %v3452 = vld [vmem:[#allocation2] sm:$0xff]
  %v3453 = vld [vmem:[#allocation2 + $0x8] sm:$0xff]
  %v3454 = vld [vmem:[#allocation2 + $0x10] sm:$0xff]
  %v3455 = vld [vmem:[#allocation2 + $0x18] sm:$0xff]
  %v3456 = vld [vmem:[#allocation2 + $0x20] sm:$0xff]
  %v3457 = vld [vmem:[#allocation2 + $0x28] sm:$0xff]
  %v3458 = vld [vmem:[#allocation2 + $0x30] sm:$0xff]
  %v3459 = vld [vmem:[#allocation2 + $0x38] sm:$0xff]
  %v3460 = vld [vmem:[#allocation2 + $0x40] sm:$0xff]
  %v3461 = vld [vmem:[%s1 + $0x140] sm:$0xff]
  %v3462 = vld [vmem:[%s1 + $0x148] sm:$0xff]
  %v3463 = vld [vmem:[%s1 + $0x150] sm:$0xff]
  %v3464 = vld [vmem:[%s1 + $0x158] sm:$0xff]
  %v3465 = vld [vmem:[%s1 + $0x160] sm:$0xff]
  %v3466 = vld [vmem:[%s1 + $0x168] sm:$0xff]
  %v3467 = vld [vmem:[%s1 + $0x170] sm:$0xff]
  %v3468 = vld [vmem:[%s1 + $0x178] sm:$0xff]
  %3477 = vrot.lane.b32.xlu0 %v3461, 18
  %v3478 = vpop.permute.xlu0 %3477
  %3479 = vrot.lane.b32.xlu0 %v3462, 18
  %v3480 = vpop.permute.xlu0 %3479
  %3481 = vrot.lane.b32.xlu0 %v3463, 18
  %v3482 = vpop.permute.xlu0 %3481
  %3483 = vrot.lane.b32.xlu0 %v3464, 18
  %v3484 = vpop.permute.xlu0 %3483
  %3485 = vrot.lane.b32.xlu0 %v3465, 18
  %v3486 = vpop.permute.xlu0 %3485
  %3487 = vrot.lane.b32.xlu0 %v3466, 18
  %v3488 = vpop.permute.xlu0 %3487
  %3489 = vrot.lane.b32.xlu0 %v3467, 18
  %v3490 = vpop.permute.xlu0 %3489
  %3491 = vrot.lane.b32.xlu0 %v3468, 18
  %v3492 = vpop.permute.xlu0 %3491
  %v3493 = vsel %vm648, %v3478, %v3480
  %v3494 = vsel %vm648, %v3480, %v3482
  %v3495 = vsel %vm648, %v3482, %v3484
  %v3496 = vsel %vm648, %v3484, %v3486
  %v3497 = vsel %vm648, %v3486, %v3488
  %v3498 = vsel %vm648, %v3488, %v3490
  %v3499 = vsel %vm648, %v3490, %v3492
  %v3509 = vmul.f32 %v3452, %v3478
  %v3510 = vmul.f32 %v3453, %v3493
  %v3511 = vmul.f32 %v3454, %v3494
  %v3512 = vmul.f32 %v3455, %v3495
  %v3513 = vmul.f32 %v3456, %v3496
  %v3514 = vmul.f32 %v3457, %v3497
  %v3515 = vmul.f32 %v3458, %v3498
  %v3516 = vmul.f32 %v3459, %v3499
  %v3517 = vmul.f32 %v3460, %v3492
  %3527 = vrot.lane.b32.xlu0 %v3509, 110
  %v3528 = vpop.permute.xlu0 %3527
  %3529 = vrot.lane.b32.xlu0 %v3510, 110
  %v3530 = vpop.permute.xlu0 %3529
  %3531 = vrot.lane.b32.xlu0 %v3511, 110
  %v3532 = vpop.permute.xlu0 %3531
  %3533 = vrot.lane.b32.xlu0 %v3512, 110
  %v3534 = vpop.permute.xlu0 %3533
  %3535 = vrot.lane.b32.xlu0 %v3513, 110
  %v3536 = vpop.permute.xlu0 %3535
  %3537 = vrot.lane.b32.xlu0 %v3514, 110
  %v3538 = vpop.permute.xlu0 %3537
  %3539 = vrot.lane.b32.xlu0 %v3515, 110
  %v3540 = vpop.permute.xlu0 %3539
  %3541 = vrot.lane.b32.xlu0 %v3516, 110
  %v3542 = vpop.permute.xlu0 %3541
  %3543 = vrot.lane.b32.xlu0 %v3517, 110
  %v3544 = vpop.permute.xlu0 %3543
  %v3545 = vsel %vm701, %v3528, %v3530
  %v3546 = vsel %vm701, %v3530, %v3532
  %v3547 = vsel %vm701, %v3532, %v3534
  %v3548 = vsel %vm701, %v3534, %v3536
  %v3549 = vsel %vm701, %v3536, %v3538
  %v3550 = vsel %vm701, %v3538, %v3540
  %v3551 = vsel %vm701, %v3540, %v3542
  %v3552 = vsel %vm701, %v3542, %v3544
  %3561 = vst [vmem:[#allocation3 + $0x140] sm:$0xff] %v3545
  %3562 = vst [vmem:[#allocation3 + $0x148] sm:$0xff] %v3546
  %3563 = vst [vmem:[#allocation3 + $0x150] sm:$0xff] %v3547
  %3564 = vst [vmem:[#allocation3 + $0x158] sm:$0xff] %v3548
  %3565 = vst [vmem:[#allocation3 + $0x160] sm:$0xff] %v3549
  %3566 = vst [vmem:[#allocation3 + $0x168] sm:$0xff] %v3550
  %3567 = vst [vmem:[#allocation3 + $0x170] sm:$0xff] %v3551
  %3568 = vst [vmem:[#allocation3 + $0x178] sm:$0xff] %v3552
  %v3569 = vld [vmem:[#allocation2] sm:$0xff]
  %v3570 = vld [vmem:[#allocation2 + $0x8] sm:$0xff]
  %v3571 = vld [vmem:[#allocation2 + $0x10] sm:$0xff]
  %v3572 = vld [vmem:[#allocation2 + $0x18] sm:$0xff]
  %v3573 = vld [vmem:[#allocation2 + $0x20] sm:$0xff]
  %v3574 = vld [vmem:[#allocation2 + $0x28] sm:$0xff]
  %v3575 = vld [vmem:[#allocation2 + $0x30] sm:$0xff]
  %v3576 = vld [vmem:[#allocation2 + $0x38] sm:$0xff]
  %v3577 = vld [vmem:[#allocation2 + $0x40] sm:$0xff]
  %v3578 = vld [vmem:[%s1 + $0x180] sm:$0xff]
  %v3579 = vld [vmem:[%s1 + $0x188] sm:$0xff]
  %v3580 = vld [vmem:[%s1 + $0x190] sm:$0xff]
  %v3581 = vld [vmem:[%s1 + $0x198] sm:$0xff]
  %v3582 = vld [vmem:[%s1 + $0x1a0] sm:$0xff]
  %v3583 = vld [vmem:[%s1 + $0x1a8] sm:$0xff]
  %v3584 = vld [vmem:[%s1 + $0x1b0] sm:$0xff]
  %v3585 = vld [vmem:[%s1 + $0x1b8] sm:$0xff]
  %3594 = vrot.lane.b32.xlu0 %v3578, 32
  %v3595 = vpop.permute.xlu0 %3594
  %3596 = vrot.lane.b32.xlu0 %v3579, 32
  %v3597 = vpop.permute.xlu0 %3596
  %3598 = vrot.lane.b32.xlu0 %v3580, 32
  %v3599 = vpop.permute.xlu0 %3598
  %3600 = vrot.lane.b32.xlu0 %v3581, 32
  %v3601 = vpop.permute.xlu0 %3600
  %3602 = vrot.lane.b32.xlu0 %v3582, 32
  %v3603 = vpop.permute.xlu0 %3602
  %3604 = vrot.lane.b32.xlu0 %v3583, 32
  %v3605 = vpop.permute.xlu0 %3604
  %3606 = vrot.lane.b32.xlu0 %v3584, 32
  %v3607 = vpop.permute.xlu0 %3606
  %3608 = vrot.lane.b32.xlu0 %v3585, 32
  %v3609 = vpop.permute.xlu0 %3608
  %v3610 = vsel %vm767, %v3595, %v3597
  %v3611 = vsel %vm767, %v3597, %v3599
  %v3612 = vsel %vm767, %v3599, %v3601
  %v3613 = vsel %vm767, %v3601, %v3603
  %v3614 = vsel %vm767, %v3603, %v3605
  %v3615 = vsel %vm767, %v3605, %v3607
  %v3616 = vsel %vm767, %v3607, %v3609
  %v3626 = vmul.f32 %v3569, %v3595
  %v3627 = vmul.f32 %v3570, %v3610
  %v3628 = vmul.f32 %v3571, %v3611
  %v3629 = vmul.f32 %v3572, %v3612
  %v3630 = vmul.f32 %v3573, %v3613
  %v3631 = vmul.f32 %v3574, %v3614
  %v3632 = vmul.f32 %v3575, %v3615
  %v3633 = vmul.f32 %v3576, %v3616
  %v3634 = vmul.f32 %v3577, %v3609
  %3644 = vrot.lane.b32.xlu0 %v3626, 96
  %v3645 = vpop.permute.xlu0 %3644
  %3646 = vrot.lane.b32.xlu0 %v3627, 96
  %v3647 = vpop.permute.xlu0 %3646
  %3648 = vrot.lane.b32.xlu0 %v3628, 96
  %v3649 = vpop.permute.xlu0 %3648
  %3650 = vrot.lane.b32.xlu0 %v3629, 96
  %v3651 = vpop.permute.xlu0 %3650
  %3652 = vrot.lane.b32.xlu0 %v3630, 96
  %v3653 = vpop.permute.xlu0 %3652
  %3654 = vrot.lane.b32.xlu0 %v3631, 96
  %v3655 = vpop.permute.xlu0 %3654
  %3656 = vrot.lane.b32.xlu0 %v3632, 96
  %v3657 = vpop.permute.xlu0 %3656
  %3658 = vrot.lane.b32.xlu0 %v3633, 96
  %v3659 = vpop.permute.xlu0 %3658
  %3660 = vrot.lane.b32.xlu0 %v3634, 96
  %v3661 = vpop.permute.xlu0 %3660
  %v3662 = vsel %vm820, %v3645, %v3647
  %v3663 = vsel %vm820, %v3647, %v3649
  %v3664 = vsel %vm820, %v3649, %v3651
  %v3665 = vsel %vm820, %v3651, %v3653
  %v3666 = vsel %vm820, %v3653, %v3655
  %v3667 = vsel %vm820, %v3655, %v3657
  %v3668 = vsel %vm820, %v3657, %v3659
  %v3669 = vsel %vm820, %v3659, %v3661
  %3678 = vst [vmem:[#allocation3 + $0x180] sm:$0xff] %v3662
  %3679 = vst [vmem:[#allocation3 + $0x188] sm:$0xff] %v3663
  %3680 = vst [vmem:[#allocation3 + $0x190] sm:$0xff] %v3664
  %3681 = vst [vmem:[#allocation3 + $0x198] sm:$0xff] %v3665
  %3682 = vst [vmem:[#allocation3 + $0x1a0] sm:$0xff] %v3666
  %3683 = vst [vmem:[#allocation3 + $0x1a8] sm:$0xff] %v3667
  %3684 = vst [vmem:[#allocation3 + $0x1b0] sm:$0xff] %v3668
  %3685 = vst [vmem:[#allocation3 + $0x1b8] sm:$0xff] %v3669
  %v3686 = vld [vmem:[#allocation2] sm:$0xff]
  %v3687 = vld [vmem:[#allocation2 + $0x8] sm:$0xff]
  %v3688 = vld [vmem:[#allocation2 + $0x10] sm:$0xff]
  %v3689 = vld [vmem:[#allocation2 + $0x18] sm:$0xff]
  %v3690 = vld [vmem:[#allocation2 + $0x20] sm:$0xff]
  %v3691 = vld [vmem:[#allocation2 + $0x28] sm:$0xff]
  %v3692 = vld [vmem:[#allocation2 + $0x30] sm:$0xff]
  %v3693 = vld [vmem:[#allocation2 + $0x38] sm:$0xff]
  %v3694 = vld [vmem:[#allocation2 + $0x40] sm:$0xff]
  %v3695 = vld [vmem:[%s1 + $0x1c0] sm:$0xff]
  %v3696 = vld [vmem:[%s1 + $0x1c8] sm:$0xff]
  %v3697 = vld [vmem:[%s1 + $0x1d0] sm:$0xff]
  %v3698 = vld [vmem:[%s1 + $0x1d8] sm:$0xff]
  %v3699 = vld [vmem:[%s1 + $0x1e0] sm:$0xff]
  %v3700 = vld [vmem:[%s1 + $0x1e8] sm:$0xff]
  %v3701 = vld [vmem:[%s1 + $0x1f0] sm:$0xff]
  %v3702 = vld [vmem:[%s1 + $0x1f8] sm:$0xff]
  %3711 = vrot.lane.b32.xlu0 %v3695, 33
  %v3712 = vpop.permute.xlu0 %3711
  %3713 = vrot.lane.b32.xlu0 %v3696, 33
  %v3714 = vpop.permute.xlu0 %3713
  %3715 = vrot.lane.b32.xlu0 %v3697, 33
  %v3716 = vpop.permute.xlu0 %3715
  %3717 = vrot.lane.b32.xlu0 %v3698, 33
  %v3718 = vpop.permute.xlu0 %3717
  %3719 = vrot.lane.b32.xlu0 %v3699, 33
  %v3720 = vpop.permute.xlu0 %3719
  %3721 = vrot.lane.b32.xlu0 %v3700, 33
  %v3722 = vpop.permute.xlu0 %3721
  %3723 = vrot.lane.b32.xlu0 %v3701, 33
  %v3724 = vpop.permute.xlu0 %3723
  %3725 = vrot.lane.b32.xlu0 %v3702, 33
  %v3726 = vpop.permute.xlu0 %3725
  %v3727 = vsel %vm886, %v3712, %v3714
  %v3728 = vsel %vm886, %v3714, %v3716
  %v3729 = vsel %vm886, %v3716, %v3718
  %v3730 = vsel %vm886, %v3718, %v3720
  %v3731 = vsel %vm886, %v3720, %v3722
  %v3732 = vsel %vm886, %v3722, %v3724
  %v3733 = vsel %vm886, %v3724, %v3726
  %v3743 = vmul.f32 %v3686, %v3712
  %v3744 = vmul.f32 %v3687, %v3727
  %v3745 = vmul.f32 %v3688, %v3728
  %v3746 = vmul.f32 %v3689, %v3729
  %v3747 = vmul.f32 %v3690, %v3730
  %v3748 = vmul.f32 %v3691, %v3731
  %v3749 = vmul.f32 %v3692, %v3732
  %v3750 = vmul.f32 %v3693, %v3733
  %v3751 = vmul.f32 %v3694, %v3726
  %3761 = vrot.lane.b32.xlu0 %v3743, 95
  %v3762 = vpop.permute.xlu0 %3761
  %3763 = vrot.lane.b32.xlu0 %v3744, 95
  %v3764 = vpop.permute.xlu0 %3763
  %3765 = vrot.lane.b32.xlu0 %v3745, 95
  %v3766 = vpop.permute.xlu0 %3765
  %3767 = vrot.lane.b32.xlu0 %v3746, 95
  %v3768 = vpop.permute.xlu0 %3767
  %3769 = vrot.lane.b32.xlu0 %v3747, 95
  %v3770 = vpop.permute.xlu0 %3769
  %3771 = vrot.lane.b32.xlu0 %v3748, 95
  %v3772 = vpop.permute.xlu0 %3771
  %3773 = vrot.lane.b32.xlu0 %v3749, 95
  %v3774 = vpop.permute.xlu0 %3773
  %3775 = vrot.lane.b32.xlu0 %v3750, 95
  %v3776 = vpop.permute.xlu0 %3775
  %3777 = vrot.lane.b32.xlu0 %v3751, 95
  %v3778 = vpop.permute.xlu0 %3777
  %v3779 = vsel %vm939, %v3762, %v3764
  %v3780 = vsel %vm939, %v3764, %v3766
  %v3781 = vsel %vm939, %v3766, %v3768
  %v3782 = vsel %vm939, %v3768, %v3770
  %v3783 = vsel %vm939, %v3770, %v3772
  %v3784 = vsel %vm939, %v3772, %v3774
  %v3785 = vsel %vm939, %v3774, %v3776
  %v3786 = vsel %vm939, %v3776, %v3778
  %3795 = vst [vmem:[#allocation3 + $0x1c0] sm:$0xff] %v3779
  %3796 = vst [vmem:[#allocation3 + $0x1c8] sm:$0xff] %v3780
  %3797 = vst [vmem:[#allocation3 + $0x1d0] sm:$0xff] %v3781
  %3798 = vst [vmem:[#allocation3 + $0x1d8] sm:$0xff] %v3782
  %3799 = vst [vmem:[#allocation3 + $0x1e0] sm:$0xff] %v3783
  %3800 = vst [vmem:[#allocation3 + $0x1e8] sm:$0xff] %v3784
  %3801 = vst [vmem:[#allocation3 + $0x1f0] sm:$0xff] %v3785
  %3802 = vst [vmem:[#allocation3 + $0x1f8] sm:$0xff] %v3786
  %v3803 = vld [vmem:[#allocation2] sm:$0xff]
  %v3804 = vld [vmem:[#allocation2 + $0x8] sm:$0xff]
  %v3805 = vld [vmem:[#allocation2 + $0x10] sm:$0xff]
  %v3806 = vld [vmem:[#allocation2 + $0x18] sm:$0xff]
  %v3807 = vld [vmem:[#allocation2 + $0x20] sm:$0xff]
  %v3808 = vld [vmem:[#allocation2 + $0x28] sm:$0xff]
  %v3809 = vld [vmem:[#allocation2 + $0x30] sm:$0xff]
  %v3810 = vld [vmem:[#allocation2 + $0x38] sm:$0xff]
  %v3811 = vld [vmem:[#allocation2 + $0x40] sm:$0xff]
  %v3812 = vld [vmem:[%s1 + $0x200] sm:$0xff]
  %v3813 = vld [vmem:[%s1 + $0x208] sm:$0xff]
  %v3814 = vld [vmem:[%s1 + $0x210] sm:$0xff]
  %v3815 = vld [vmem:[%s1 + $0x218] sm:$0xff]
  %v3816 = vld [vmem:[%s1 + $0x220] sm:$0xff]
  %v3817 = vld [vmem:[%s1 + $0x228] sm:$0xff]
  %v3818 = vld [vmem:[%s1 + $0x230] sm:$0xff]
  %v3819 = vld [vmem:[%s1 + $0x238] sm:$0xff]
  %3828 = vrot.lane.b32.xlu0 %v3812, 34
  %v3829 = vpop.permute.xlu0 %3828
  %3830 = vrot.lane.b32.xlu0 %v3813, 34
  %v3831 = vpop.permute.xlu0 %3830
  %3832 = vrot.lane.b32.xlu0 %v3814, 34
  %v3833 = vpop.permute.xlu0 %3832
  %3834 = vrot.lane.b32.xlu0 %v3815, 34
  %v3835 = vpop.permute.xlu0 %3834
  %3836 = vrot.lane.b32.xlu0 %v3816, 34
  %v3837 = vpop.permute.xlu0 %3836
  %3838 = vrot.lane.b32.xlu0 %v3817, 34
  %v3839 = vpop.permute.xlu0 %3838
  %3840 = vrot.lane.b32.xlu0 %v3818, 34
  %v3841 = vpop.permute.xlu0 %3840
  %3842 = vrot.lane.b32.xlu0 %v3819, 34
  %v3843 = vpop.permute.xlu0 %3842
  %v3844 = vsel %vm1005, %v3829, %v3831
  %v3845 = vsel %vm1005, %v3831, %v3833
  %v3846 = vsel %vm1005, %v3833, %v3835
  %v3847 = vsel %vm1005, %v3835, %v3837
  %v3848 = vsel %vm1005, %v3837, %v3839
  %v3849 = vsel %vm1005, %v3839, %v3841
  %v3850 = vsel %vm1005, %v3841, %v3843
  %v3860 = vmul.f32 %v3803, %v3829
  %v3861 = vmul.f32 %v3804, %v3844
  %v3862 = vmul.f32 %v3805, %v3845
  %v3863 = vmul.f32 %v3806, %v3846
  %v3864 = vmul.f32 %v3807, %v3847
  %v3865 = vmul.f32 %v3808, %v3848
  %v3866 = vmul.f32 %v3809, %v3849
  %v3867 = vmul.f32 %v3810, %v3850
  %v3868 = vmul.f32 %v3811, %v3843
  %3878 = vrot.lane.b32.xlu0 %v3860, 94
  %v3879 = vpop.permute.xlu0 %3878
  %3880 = vrot.lane.b32.xlu0 %v3861, 94
  %v3881 = vpop.permute.xlu0 %3880
  %3882 = vrot.lane.b32.xlu0 %v3862, 94
  %v3883 = vpop.permute.xlu0 %3882
  %3884 = vrot.lane.b32.xlu0 %v3863, 94
  %v3885 = vpop.permute.xlu0 %3884
  %3886 = vrot.lane.b32.xlu0 %v3864, 94
  %v3887 = vpop.permute.xlu0 %3886
  %3888 = vrot.lane.b32.xlu0 %v3865, 94
  %v3889 = vpop.permute.xlu0 %3888
  %3890 = vrot.lane.b32.xlu0 %v3866, 94
  %v3891 = vpop.permute.xlu0 %3890
  %3892 = vrot.lane.b32.xlu0 %v3867, 94
  %v3893 = vpop.permute.xlu0 %3892
  %3894 = vrot.lane.b32.xlu0 %v3868, 94
  %v3895 = vpop.permute.xlu0 %3894
  %v3896 = vsel %vm1058, %v3879, %v3881
  %v3897 = vsel %vm1058, %v3881, %v3883
  %v3898 = vsel %vm1058, %v3883, %v3885
  %v3899 = vsel %vm1058, %v3885, %v3887
  %v3900 = vsel %vm1058, %v3887, %v3889
  %v3901 = vsel %vm1058, %v3889, %v3891
  %v3902 = vsel %vm1058, %v3891, %v3893
  %v3903 = vsel %vm1058, %v3893, %v3895
  %3912 = vst [vmem:[#allocation3 + $0x200] sm:$0xff] %v3896
  %3913 = vst [vmem:[#allocation3 + $0x208] sm:$0xff] %v3897
  %3914 = vst [vmem:[#allocation3 + $0x210] sm:$0xff] %v3898
  %3915 = vst [vmem:[#allocation3 + $0x218] sm:$0xff] %v3899
  %3916 = vst [vmem:[#allocation3 + $0x220] sm:$0xff] %v3900
  %3917 = vst [vmem:[#allocation3 + $0x228] sm:$0xff] %v3901
  %3918 = vst [vmem:[#allocation3 + $0x230] sm:$0xff] %v3902
  %3919 = vst [vmem:[#allocation3 + $0x238] sm:$0xff] %v3903
  %v3920 = vld [vmem:[%s6] sm:$0xff]
  %v3921 = vld [vmem:[#allocation3] sm:$0xff]
  %v3922 = vld [vmem:[#allocation3 + $0x8] sm:$0xff]
  %v3923 = vld [vmem:[#allocation3 + $0x10] sm:$0xff]
  %v3924 = vld [vmem:[#allocation3 + $0x18] sm:$0xff]
  %v3925 = vld [vmem:[#allocation3 + $0x20] sm:$0xff]
  %v3926 = vld [vmem:[#allocation3 + $0x28] sm:$0xff]
  %v3927 = vld [vmem:[#allocation3 + $0x30] sm:$0xff]
  %v3928 = vld [vmem:[#allocation3 + $0x38] sm:$0xff]
  %v3929 = vld [vmem:[#allocation3 + $0x40] sm:$0xff]
  %v3930 = vld [vmem:[#allocation3 + $0x48] sm:$0xff]
  %v3931 = vld [vmem:[#allocation3 + $0x50] sm:$0xff]
  %v3932 = vld [vmem:[#allocation3 + $0x58] sm:$0xff]
  %v3933 = vld [vmem:[#allocation3 + $0x60] sm:$0xff]
  %v3934 = vld [vmem:[#allocation3 + $0x68] sm:$0xff]
  %v3935 = vld [vmem:[#allocation3 + $0x70] sm:$0xff]
  %v3936 = vld [vmem:[#allocation3 + $0x78] sm:$0xff]
  %v3937 = vld [vmem:[#allocation3 + $0x80] sm:$0xff]
  %v3938 = vld [vmem:[#allocation3 + $0x88] sm:$0xff]
  %v3939 = vld [vmem:[#allocation3 + $0x90] sm:$0xff]
  %v3940 = vld [vmem:[#allocation3 + $0x98] sm:$0xff]
  %v3941 = vld [vmem:[#allocation3 + $0xa0] sm:$0xff]
  %v3942 = vld [vmem:[#allocation3 + $0xa8] sm:$0xff]
  %v3943 = vld [vmem:[#allocation3 + $0xb0] sm:$0xff]
  %v3944 = vld [vmem:[#allocation3 + $0xb8] sm:$0xff]
  %v3945 = vld [vmem:[#allocation3 + $0xc0] sm:$0xff]
  %v3946 = vld [vmem:[#allocation3 + $0xc8] sm:$0xff]
  %v3947 = vld [vmem:[#allocation3 + $0xd0] sm:$0xff]
  %v3948 = vld [vmem:[#allocation3 + $0xd8] sm:$0xff]
  %v3949 = vld [vmem:[#allocation3 + $0xe0] sm:$0xff]
  %v3950 = vld [vmem:[#allocation3 + $0xe8] sm:$0xff]
  %v3951 = vld [vmem:[#allocation3 + $0xf0] sm:$0xff]
  %v3952 = vld [vmem:[#allocation3 + $0xf8] sm:$0xff]
  %v3953 = vld [vmem:[#allocation3 + $0x100] sm:$0xff]
  %v3954 = vld [vmem:[#allocation3 + $0x108] sm:$0xff]
  %v3955 = vld [vmem:[#allocation3 + $0x110] sm:$0xff]
  %v3956 = vld [vmem:[#allocation3 + $0x118] sm:$0xff]
  %v3957 = vld [vmem:[#allocation3 + $0x120] sm:$0xff]
  %v3958 = vld [vmem:[#allocation3 + $0x128] sm:$0xff]
  %v3959 = vld [vmem:[#allocation3 + $0x130] sm:$0xff]
  %v3960 = vld [vmem:[#allocation3 + $0x138] sm:$0xff]
  %v3961 = vld [vmem:[#allocation3 + $0x140] sm:$0xff]
  %v3962 = vld [vmem:[#allocation3 + $0x148] sm:$0xff]
  %v3963 = vld [vmem:[#allocation3 + $0x150] sm:$0xff]
  %v3964 = vld [vmem:[#allocation3 + $0x158] sm:$0xff]
  %v3965 = vld [vmem:[#allocation3 + $0x160] sm:$0xff]
  %v3966 = vld [vmem:[#allocation3 + $0x168] sm:$0xff]
  %v3967 = vld [vmem:[#allocation3 + $0x170] sm:$0xff]
  %v3968 = vld [vmem:[#allocation3 + $0x178] sm:$0xff]
  %v3969 = vld [vmem:[#allocation3 + $0x180] sm:$0xff]
  %v3970 = vld [vmem:[#allocation3 + $0x188] sm:$0xff]
  %v3971 = vld [vmem:[#allocation3 + $0x190] sm:$0xff]
  %v3972 = vld [vmem:[#allocation3 + $0x198] sm:$0xff]
  %v3973 = vld [vmem:[#allocation3 + $0x1a0] sm:$0xff]
  %v3974 = vld [vmem:[#allocation3 + $0x1a8] sm:$0xff]
  %v3975 = vld [vmem:[#allocation3 + $0x1b0] sm:$0xff]
  %v3976 = vld [vmem:[#allocation3 + $0x1b8] sm:$0xff]
  %v3977 = vld [vmem:[#allocation3 + $0x1c0] sm:$0xff]
  %v3978 = vld [vmem:[#allocation3 + $0x1c8] sm:$0xff]
  %v3979 = vld [vmem:[#allocation3 + $0x1d0] sm:$0xff]
  %v3980 = vld [vmem:[#allocation3 + $0x1d8] sm:$0xff]
  %v3981 = vld [vmem:[#allocation3 + $0x1e0] sm:$0xff]
  %v3982 = vld [vmem:[#allocation3 + $0x1e8] sm:$0xff]
  %v3983 = vld [vmem:[#allocation3 + $0x1f0] sm:$0xff]
  %v3984 = vld [vmem:[#allocation3 + $0x1f8] sm:$0xff]
  %v3985 = vld [vmem:[#allocation3 + $0x200] sm:$0xff]
  %v3986 = vld [vmem:[#allocation3 + $0x208] sm:$0xff]
  %v3987 = vld [vmem:[#allocation3 + $0x210] sm:$0xff]
  %v3988 = vld [vmem:[#allocation3 + $0x218] sm:$0xff]
  %v3989 = vld [vmem:[#allocation3 + $0x220] sm:$0xff]
  %v3990 = vld [vmem:[#allocation3 + $0x228] sm:$0xff]
  %v3991 = vld [vmem:[#allocation3 + $0x230] sm:$0xff]
  %v3992 = vld [vmem:[#allocation3 + $0x238] sm:$0xff]
  %v3993 = vld [vmem:[%s7] sm:$0xff]
  %3995 = vset.pattern.permute.xlu0 0
  %3996 = vperm.xlu0 %3995, %v3993
  %v3997 = vpop.permute.xlu0 %3996
  %v4000 = vsel %vm1162, %v3920, 0
  %4002 = vmatprep.subr.mxu0 0.0
  %4003 = vmatpush1.msra.mxu0 0.0
  %4004 = vmatprep.subr.mxu0 0.0
  %4005 = vmatpush1.msra.mxu0 0.0
  %4006 = vmatprep.subr.mxu0 0.0
  %4007 = vmatpush1.msra.mxu0 0.0
  %4008 = vmatprep.subr.mxu0 0.0
  %4009 = vmatpush1.msra.mxu0 0.0
  %4010 = vmatprep.subr.mxu0 0.0
  %4011 = vmatpush1.msra.mxu0 0.0
  %4012 = vmatprep.subr.mxu0 0.0
  %4013 = vmatpush1.msra.mxu0 0.0
  %4014 = vmatprep.subr.mxu0 0.0
  %4015 = vmatpush1.msra.mxu0 0.0
  %4016 = vmatprep.subr.mxu0 %v3986
  %4017 = vmatpush1.msra.mxu0 %v3985
  %4018 = vmatprep.subr.mxu0 %v3978
  %4019 = vmatpush1.msra.mxu0 %v3977
  %4020 = vmatprep.subr.mxu0 %v3970
  %4021 = vmatpush1.msra.mxu0 %v3969
  %4022 = vmatprep.subr.mxu0 %v3962
  %4023 = vmatpush1.msra.mxu0 %v3961
  %4024 = vmatprep.subr.mxu0 %v3954
  %4025 = vmatpush1.msra.mxu0 %v3953
  %4026 = vmatprep.subr.mxu0 %v3946
  %4027 = vmatpush1.msra.mxu0 %v3945
  %4028 = vmatprep.subr.mxu0 %v3938
  %4029 = vmatpush1.msra.mxu0 %v3937
  %4030 = vmatprep.subr.mxu0 %v3930
  %4031 = vmatpush1.msra.mxu0 %v3929
  %4032 = vmatprep.subr.mxu0 %v3922
  %4033 = vmatpush1.msra.mxu0 %v3921
  %4034 = vmatprep.subr.mxu0 0.0
  %4035 = vmatpush2.msra.mxu0 0.0
  %4036 = vmatprep.subr.mxu0 0.0
  %4037 = vmatpush2.msra.mxu0 0.0
  %4038 = vmatprep.subr.mxu0 0.0
  %4039 = vmatpush2.msra.mxu0 0.0
  %4040 = vmatprep.subr.mxu0 0.0
  %4041 = vmatpush2.msra.mxu0 0.0
  %4042 = vmatprep.subr.mxu0 0.0
  %4043 = vmatpush2.msra.mxu0 0.0
  %4044 = vmatprep.subr.mxu0 0.0
  %4045 = vmatpush2.msra.mxu0 0.0
  %4046 = vmatprep.subr.mxu0 0.0
  %4047 = vmatpush2.msra.mxu0 0.0
  %4048 = vmatprep.subr.mxu0 0.0
  %4049 = vmatpush2.msra.mxu0 0.0
  %4050 = vmatprep.subr.mxu0 0.0
  %4051 = vmatpush2.msra.mxu0 0.0
  %4052 = vmatprep.subr.mxu0 0.0
  %4053 = vmatpush2.msra.mxu0 0.0
  %4054 = vmatprep.subr.mxu0 0.0
  %4055 = vmatpush2.msra.mxu0 0.0
  %4056 = vmatprep.subr.mxu0 0.0
  %4057 = vmatpush2.msra.mxu0 0.0
  %4058 = vmatprep.subr.mxu0 0.0
  %4059 = vmatpush2.msra.mxu0 0.0
  %4060 = vmatprep.subr.mxu0 0.0
  %4061 = vmatpush2.msra.mxu0 0.0
  %4062 = vmatprep.subr.mxu0 0.0
  %4063 = vmatpush2.msra.mxu0 0.0
  %4064 = vmatprep.subr.mxu0 0.0
  %4065 = vmatpush2.msra.mxu0 0.0
  %4066 = vmatprep.mubr.f32.mxu0 0.0
  %4067 = vmatmul.mubr.f32.gmra.mxu0 %v4000
  %v4068 = vpop.f32.mrf.mxu0
  %v4069 = vadd.f32 %v3997, %v4068
  %v4070 = vpop.f32.mrf.mxu0
  %v4071 = vadd.f32 %v3997, %v4070
  %4072 = vdwg.mxu0
  %4073 = vmatprep.subr.mxu0 0.0
  %4074 = vmatpush1.msra.mxu0 0.0
  %4075 = vmatprep.subr.mxu0 0.0
  %4076 = vmatpush1.msra.mxu0 0.0
  %4077 = vmatprep.subr.mxu0 0.0
  %4078 = vmatpush1.msra.mxu0 0.0
  %4079 = vmatprep.subr.mxu0 0.0
  %4080 = vmatpush1.msra.mxu0 0.0
  %4081 = vmatprep.subr.mxu0 0.0
  %4082 = vmatpush1.msra.mxu0 0.0
  %4083 = vmatprep.subr.mxu0 0.0
  %4084 = vmatpush1.msra.mxu0 0.0
  %4085 = vmatprep.subr.mxu0 0.0
  %4086 = vmatpush1.msra.mxu0 0.0
  %4087 = vmatprep.subr.mxu0 %v3988
  %4088 = vmatpush1.msra.mxu0 %v3987
  %4089 = vmatprep.subr.mxu0 %v3980
  %4090 = vmatpush1.msra.mxu0 %v3979
  %4091 = vmatprep.subr.mxu0 %v3972
  %4092 = vmatpush1.msra.mxu0 %v3971
  %4093 = vmatprep.subr.mxu0 %v3964
  %4094 = vmatpush1.msra.mxu0 %v3963
  %4095 = vmatprep.subr.mxu0 %v3956
  %4096 = vmatpush1.msra.mxu0 %v3955
  %4097 = vmatprep.subr.mxu0 %v3948
  %4098 = vmatpush1.msra.mxu0 %v3947
  %4099 = vmatprep.subr.mxu0 %v3940
  %4100 = vmatpush1.msra.mxu0 %v3939
  %4101 = vmatprep.subr.mxu0 %v3932
  %4102 = vmatpush1.msra.mxu0 %v3931
  %4103 = vmatprep.subr.mxu0 %v3924
  %4104 = vmatpush1.msra.mxu0 %v3923
  %4105 = vmatprep.subr.mxu0 0.0
  %4106 = vmatpush2.msra.mxu0 0.0
  %4107 = vmatprep.subr.mxu0 0.0
  %4108 = vmatpush2.msra.mxu0 0.0
  %4109 = vmatprep.subr.mxu0 0.0
  %4110 = vmatpush2.msra.mxu0 0.0
  %4111 = vmatprep.subr.mxu0 0.0
  %4112 = vmatpush2.msra.mxu0 0.0
  %4113 = vmatprep.subr.mxu0 0.0
  %4114 = vmatpush2.msra.mxu0 0.0
  %4115 = vmatprep.subr.mxu0 0.0
  %4116 = vmatpush2.msra.mxu0 0.0
  %4117 = vmatprep.subr.mxu0 0.0
  %4118 = vmatpush2.msra.mxu0 0.0
  %4119 = vmatprep.subr.mxu0 0.0
  %4120 = vmatpush2.msra.mxu0 0.0
  %4121 = vmatprep.subr.mxu0 0.0
  %4122 = vmatpush2.msra.mxu0 0.0
  %4123 = vmatprep.subr.mxu0 0.0
  %4124 = vmatpush2.msra.mxu0 0.0
  %4125 = vmatprep.subr.mxu0 0.0
  %4126 = vmatpush2.msra.mxu0 0.0
  %4127 = vmatprep.subr.mxu0 0.0
  %4128 = vmatpush2.msra.mxu0 0.0
  %4129 = vmatprep.subr.mxu0 0.0
  %4130 = vmatpush2.msra.mxu0 0.0
  %4131 = vmatprep.subr.mxu0 0.0
  %4132 = vmatpush2.msra.mxu0 0.0
  %4133 = vmatprep.subr.mxu0 0.0
  %4134 = vmatpush2.msra.mxu0 0.0
  %4135 = vmatprep.subr.mxu0 0.0
  %4136 = vmatpush2.msra.mxu0 0.0
  %4137 = vmatprep.mubr.f32.mxu0 0.0
  %4138 = vmatmul.mubr.f32.gmra.mxu0 %v4000
  %v4139 = vpop.f32.mrf.mxu0
  %v4140 = vadd.f32 %v3997, %v4139
  %v4141 = vpop.f32.mrf.mxu0
  %v4142 = vadd.f32 %v3997, %v4141
  %4143 = vdwg.mxu0
  %4144 = vmatprep.subr.mxu0 0.0
  %4145 = vmatpush1.msra.mxu0 0.0
  %4146 = vmatprep.subr.mxu0 0.0
  %4147 = vmatpush1.msra.mxu0 0.0
  %4148 = vmatprep.subr.mxu0 0.0
  %4149 = vmatpush1.msra.mxu0 0.0
  %4150 = vmatprep.subr.mxu0 0.0
  %4151 = vmatpush1.msra.mxu0 0.0
  %4152 = vmatprep.subr.mxu0 0.0
  %4153 = vmatpush1.msra.mxu0 0.0
  %4154 = vmatprep.subr.mxu0 0.0
  %4155 = vmatpush1.msra.mxu0 0.0
  %4156 = vmatprep.subr.mxu0 0.0
  %4157 = vmatpush1.msra.mxu0 0.0
  %4158 = vmatprep.subr.mxu0 %v3990
  %4159 = vmatpush1.msra.mxu0 %v3989
  %4160 = vmatprep.subr.mxu0 %v3982
  %4161 = vmatpush1.msra.mxu0 %v3981
  %4162 = vmatprep.subr.mxu0 %v3974
  %4163 = vmatpush1.msra.mxu0 %v3973
  %4164 = vmatprep.subr.mxu0 %v3966
  %4165 = vmatpush1.msra.mxu0 %v3965
  %4166 = vmatprep.subr.mxu0 %v3958
  %4167 = vmatpush1.msra.mxu0 %v3957
  %4168 = vmatprep.subr.mxu0 %v3950
  %4169 = vmatpush1.msra.mxu0 %v3949
  %4170 = vmatprep.subr.mxu0 %v3942
  %4171 = vmatpush1.msra.mxu0 %v3941
  %4172 = vmatprep.subr.mxu0 %v3934
  %4173 = vmatpush1.msra.mxu0 %v3933
  %4174 = vmatprep.subr.mxu0 %v3926
  %4175 = vmatpush1.msra.mxu0 %v3925
  %4176 = vmatprep.subr.mxu0 0.0
  %4177 = vmatpush2.msra.mxu0 0.0
  %4178 = vmatprep.subr.mxu0 0.0
  %4179 = vmatpush2.msra.mxu0 0.0
  %4180 = vmatprep.subr.mxu0 0.0
  %4181 = vmatpush2.msra.mxu0 0.0
  %4182 = vmatprep.subr.mxu0 0.0
  %4183 = vmatpush2.msra.mxu0 0.0
  %4184 = vmatprep.subr.mxu0 0.0
  %4185 = vmatpush2.msra.mxu0 0.0
  %4186 = vmatprep.subr.mxu0 0.0
  %4187 = vmatpush2.msra.mxu0 0.0
  %4188 = vmatprep.subr.mxu0 0.0
  %4189 = vmatpush2.msra.mxu0 0.0
  %4190 = vmatprep.subr.mxu0 0.0
  %4191 = vmatpush2.msra.mxu0 0.0
  %4192 = vmatprep.subr.mxu0 0.0
  %4193 = vmatpush2.msra.mxu0 0.0
  %4194 = vmatprep.subr.mxu0 0.0
  %4195 = vmatpush2.msra.mxu0 0.0
  %4196 = vmatprep.subr.mxu0 0.0
  %4197 = vmatpush2.msra.mxu0 0.0
  %4198 = vmatprep.subr.mxu0 0.0
  %4199 = vmatpush2.msra.mxu0 0.0
  %4200 = vmatprep.subr.mxu0 0.0
  %4201 = vmatpush2.msra.mxu0 0.0
  %4202 = vmatprep.subr.mxu0 0.0
  %4203 = vmatpush2.msra.mxu0 0.0
  %4204 = vmatprep.subr.mxu0 0.0
  %4205 = vmatpush2.msra.mxu0 0.0
  %4206 = vmatprep.subr.mxu0 0.0
  %4207 = vmatpush2.msra.mxu0 0.0
  %4208 = vmatprep.mubr.f32.mxu0 0.0
  %4209 = vmatmul.mubr.f32.gmra.mxu0 %v4000
  %v4210 = vpop.f32.mrf.mxu0
  %v4211 = vadd.f32 %v3997, %v4210
  %v4212 = vpop.f32.mrf.mxu0
  %v4213 = vadd.f32 %v3997, %v4212
  %4214 = vdwg.mxu0
  %4215 = vmatprep.subr.mxu0 0.0
  %4216 = vmatpush1.msra.mxu0 0.0
  %4217 = vmatprep.subr.mxu0 0.0
  %4218 = vmatpush1.msra.mxu0 0.0
  %4219 = vmatprep.subr.mxu0 0.0
  %4220 = vmatpush1.msra.mxu0 0.0
  %4221 = vmatprep.subr.mxu0 0.0
  %4222 = vmatpush1.msra.mxu0 0.0
  %4223 = vmatprep.subr.mxu0 0.0
  %4224 = vmatpush1.msra.mxu0 0.0
  %4225 = vmatprep.subr.mxu0 0.0
  %4226 = vmatpush1.msra.mxu0 0.0
  %4227 = vmatprep.subr.mxu0 0.0
  %4228 = vmatpush1.msra.mxu0 0.0
  %4229 = vmatprep.subr.mxu0 %v3992
  %4230 = vmatpush1.msra.mxu0 %v3991
  %4231 = vmatprep.subr.mxu0 %v3984
  %4232 = vmatpush1.msra.mxu0 %v3983
  %4233 = vmatprep.subr.mxu0 %v3976
  %4234 = vmatpush1.msra.mxu0 %v3975
  %4235 = vmatprep.subr.mxu0 %v3968
  %4236 = vmatpush1.msra.mxu0 %v3967
  %4237 = vmatprep.subr.mxu0 %v3960
  %4238 = vmatpush1.msra.mxu0 %v3959
  %4239 = vmatprep.subr.mxu0 %v3952
  %4240 = vmatpush1.msra.mxu0 %v3951
  %4241 = vmatprep.subr.mxu0 %v3944
  %4242 = vmatpush1.msra.mxu0 %v3943
  %4243 = vmatprep.subr.mxu0 %v3936
  %4244 = vmatpush1.msra.mxu0 %v3935
  %4245 = vmatprep.subr.mxu0 %v3928
  %4246 = vmatpush1.msra.mxu0 %v3927
  %4247 = vmatprep.subr.mxu0 0.0
  %4248 = vmatpush2.msra.mxu0 0.0
  %4249 = vmatprep.subr.mxu0 0.0
  %4250 = vmatpush2.msra.mxu0 0.0
  %4251 = vmatprep.subr.mxu0 0.0
  %4252 = vmatpush2.msra.mxu0 0.0
  %4253 = vmatprep.subr.mxu0 0.0
  %4254 = vmatpush2.msra.mxu0 0.0
  %4255 = vmatprep.subr.mxu0 0.0
  %4256 = vmatpush2.msra.mxu0 0.0
  %4257 = vmatprep.subr.mxu0 0.0
  %4258 = vmatpush2.msra.mxu0 0.0
  %4259 = vmatprep.subr.mxu0 0.0
  %4260 = vmatpush2.msra.mxu0 0.0
  %4261 = vmatprep.subr.mxu0 0.0
  %4262 = vmatpush2.msra.mxu0 0.0
  %4263 = vmatprep.subr.mxu0 0.0
  %4264 = vmatpush2.msra.mxu0 0.0
  %4265 = vmatprep.subr.mxu0 0.0
  %4266 = vmatpush2.msra.mxu0 0.0
  %4267 = vmatprep.subr.mxu0 0.0
  %4268 = vmatpush2.msra.mxu0 0.0
  %4269 = vmatprep.subr.mxu0 0.0
  %4270 = vmatpush2.msra.mxu0 0.0
  %4271 = vmatprep.subr.mxu0 0.0
  %4272 = vmatpush2.msra.mxu0 0.0
  %4273 = vmatprep.subr.mxu0 0.0
  %4274 = vmatpush2.msra.mxu0 0.0
  %4275 = vmatprep.subr.mxu0 0.0
  %4276 = vmatpush2.msra.mxu0 0.0
  %4277 = vmatprep.subr.mxu0 0.0
  %4278 = vmatpush2.msra.mxu0 0.0
  %4279 = vmatprep.mubr.f32.mxu0 0.0
  %4280 = vmatmul.mubr.f32.gmra.mxu0 %v4000
  %v4281 = vpop.f32.mrf.mxu0
  %v4282 = vadd.f32 %v3997, %v4281
  %v4283 = vpop.f32.mrf.mxu0
  %v4284 = vadd.f32 %v3997, %v4283
  %4285 = vdwg.mxu0
  %4286 = vst [vmem:[%s10] sm:$0xff] %v4069
  %4287 = vst [vmem:[%s10 + $0x8] sm:$0xff] %v4071
  %s4288 = scalar_lea.vmem %s10, 16
  %4289 = vst [vmem:[%s4288] sm:$0xff] %v4140
  %4290 = vst [vmem:[%s4288 + $0x8] sm:$0xff] %v4142
  %s4291 = scalar_lea.vmem %s10, 32
  %4292 = vst [vmem:[%s4291] sm:$0xff] %v4211
  %4293 = vst [vmem:[%s4291 + $0x8] sm:$0xff] %v4213
  %s4294 = scalar_lea.vmem %s10, 48
  %4295 = vst [vmem:[%s4294] sm:$0xff] %v4282
  %4296 = vst [vmem:[%s4294 + $0x8] sm:$0xff] %v4284
  // Predicated region
  $region34: #{gan_loss_forward.1} parent=0 // pred_check
    _
  $region35: #{gan_loss_forward.1} parent=0 // pred_check_branch
    %4298 = sbr.rel (0) target = $region37
  $region36: #{gan_loss_forward.1} parent=0 // pred_region
    _
  $region37: #{gan_loss_forward.1} parent=0 // pred_fallthru
    _
  // Predicated region
  $region38: #{gan_loss_forward.1} parent=0 // pred_check
    _
  $region39: #{gan_loss_forward.1} parent=0 // pred_check_branch
    %4300 = sbr.rel (0) target = $region41
  $region40: #{gan_loss_forward.1} parent=0 // pred_region
    _
  $region41: #{gan_loss_forward.1} parent=0 // pred_fallthru
    _
  // Predicated region
  $region42: #{gan_loss_forward.1} parent=0 // pred_check
    _
  $region43: #{gan_loss_forward.1} parent=0 // pred_check_branch
    %4302 = sbr.rel (0) target = $region45
  $region44: #{gan_loss_forward.1} parent=0 // pred_region
    _
  $region45: #{gan_loss_forward.1} parent=0 // pred_fallthru
    _
  // Predicated region
  $region46: #{gan_loss_forward.1} parent=0 // pred_check
    _
  $region47: #{gan_loss_forward.1} parent=0 // pred_check_branch
    %4304 = sbr.rel (0) target = $region49
  $region48: #{gan_loss_forward.1} parent=0 // pred_region
    _
  $region49: #{gan_loss_forward.1} parent=0 // pred_fallthru
    _
  // Predicated region
  $region50: #{gan_loss_forward.1} parent=0 // pred_check
    _
  $region51: #{gan_loss_forward.1} parent=0 // pred_check_branch
    %4306 = sbr.rel (0) target = $region53
  $region52: #{gan_loss_forward.1} parent=0 // pred_region
    _
  $region53: #{gan_loss_forward.1} parent=0 // pred_fallthru
    _
  // Predicated region
  $region54: #{gan_loss_forward.1} parent=0 // pred_check
    _
  $region55: #{gan_loss_forward.1} parent=0 // pred_check_branch
    %4308 = sbr.rel (0) target = $region57
  $region56: #{gan_loss_forward.1} parent=0 // pred_region
    _
  $region57: #{gan_loss_forward.1} parent=0 // pred_fallthru
    _

</llo_original>
